<compile_context>
chip_gen: v5e
topology: v5e:2x2
jax: 0.10.0
libtpu: 0.0.40
codegen_flags: <defaults>
</compile_context>

<pallas_src>
import jax
import jax.numpy as jnp
from jax.experimental import pallas as pl
from jax.experimental.pallas import tpu as pltpu

# ----------------------------- model config ---------------------------------
BATCH = 2
NUM_CHANNELS = 4       # in_chans after set_first_layer
IMG_SIZE = 16
PATCH = 4              # downsample_factor
EMBED_DIM = 32
NUM_HEADS = 4
HEAD_DIM = EMBED_DIM // NUM_HEADS
MLP_HIDDEN = 2 * EMBED_DIM
NUM_CLASSES = 4
GRID_HW = IMG_SIZE // PATCH          # feature_size = 4
NUM_PATCHES = GRID_HW * GRID_HW      # 16
SEQ = NUM_PATCHES + 1                # +1 CLS token (remove_cls_token = True)
PATCH_FEATS = NUM_CHANNELS * PATCH * PATCH   # 64
HW = IMG_SIZE * IMG_SIZE                     # 256

_VMEM = pl.BlockSpec(memory_space=pltpu.MemorySpace.VMEM)


# --------------------------- in-kernel helpers --------------------------------
def _layernorm(x, g, b, eps):
    mean = jnp.mean(x, axis=-1, keepdims=True)
    var = jnp.mean((x - mean) ** 2, axis=-1, keepdims=True)
    return (x - mean) * jax.lax.rsqrt(var + eps) * g + b


def _gelu_tanh(x):
    # tanh approximation of GELU (timm/PyTorch default is erf; ~1e-3 diff).
    c = jnp.float32(0.7978845608028654)  # sqrt(2/pi)
    return 0.5 * x * (1.0 + jnp.tanh(c * (x + 0.044715 * x * x * x)))


# ------------------------------ fused kernel ----------------------------------
def _fused_forward_kernel(
    patches_ref, patch_w_ref, tok_add_ref,
    ln1_g_ref, ln1_b_ref, qkv_w_ref, qkv_b_ref,
    proj_w_ref, proj_b_ref, ln2_g_ref, ln2_b_ref,
    fc1_w_ref, fc1_b_ref, fc2_w_ref, fc2_b_ref,
    hln_g_ref, hln_b_ref, head_w_ref, head_b_ref,
    up_ref, out_ref,
):
    # Load every weight exactly once into vregs.
    patch_w = patch_w_ref[...]
    tok_add = tok_add_ref[...]
    ln1_g, ln1_b = ln1_g_ref[...], ln1_b_ref[...]
    qkv_w, qkv_b = qkv_w_ref[...], qkv_b_ref[...]
    proj_w, proj_b = proj_w_ref[...], proj_b_ref[...]
    ln2_g, ln2_b = ln2_g_ref[...], ln2_b_ref[...]
    fc1_w, fc1_b = fc1_w_ref[...], fc1_b_ref[...]
    fc2_w, fc2_b = fc2_w_ref[...], fc2_b_ref[...]
    hln_g, hln_b = hln_g_ref[...], hln_b_ref[...]
    head_w, head_b = head_w_ref[...], head_b_ref[...]
    up = up_ref[...]                                       # (NUM_PATCHES, HW)
    scale = jnp.float32(1.0 / (HEAD_DIM ** 0.5))

    for b in range(BATCH):                                  # unrolled, B = 2
        # --- patch embedding (row 0 of patches is zero; CLS/pos/bias in tok_add)
        patches_b = patches_ref[b]                          # (SEQ, 64)
        tok = jnp.dot(patches_b, patch_w,
                      preferred_element_type=jnp.float32) + tok_add   # (SEQ, D)

        # --- MHA: all heads unrolled, outputs folded through proj weight slices
        h1 = _layernorm(tok, ln1_g, ln1_b, 1e-6)
        qkv = jnp.dot(h1, qkv_w,
                      preferred_element_type=jnp.float32) + qkv_b     # (SEQ, 3D)
        attn_proj = jnp.zeros((SEQ, EMBED_DIM), jnp.float32)
        for h in range(NUM_HEADS):
            q = qkv[:, h * HEAD_DIM:(h + 1) * HEAD_DIM]
            k = qkv[:, EMBED_DIM + h * HEAD_DIM:EMBED_DIM + (h + 1) * HEAD_DIM]
            v = qkv[:, 2 * EMBED_DIM + h * HEAD_DIM:
                    2 * EMBED_DIM + (h + 1) * HEAD_DIM]
            s = jax.lax.dot_general(q, k, (((1,), (1,)), ((), ())),
                                    preferred_element_type=jnp.float32) * scale
            s = s - jnp.max(s, axis=-1, keepdims=True)
            p = jnp.exp(s)
            p = p * pl.reciprocal(jnp.sum(p, axis=-1, keepdims=True), approx=True)
            o = jnp.dot(p, v, preferred_element_type=jnp.float32)     # (SEQ, hd)
            w_h = proj_w[h * HEAD_DIM:(h + 1) * HEAD_DIM, :]          # (hd, D)
            attn_proj = attn_proj + jnp.dot(o, w_h,
                                            preferred_element_type=jnp.float32)
        tok = tok + attn_proj + proj_b                                # residual

        # --- MLP
        h2 = _layernorm(tok, ln2_g, ln2_b, 1e-6)
        m = _gelu_tanh(jnp.dot(h2, fc1_w,
                               preferred_element_type=jnp.float32) + fc1_b)
        m = jnp.dot(m, fc2_w, preferred_element_type=jnp.float32) + fc2_b
        tok = tok + m                                                 # residual

        # --- segmentation head: drop CLS, LN, linear, nearest upsample
        feat = tok[1:, :]                                             # (Np, D)
        feat = _layernorm(feat, hln_g, hln_b, 1e-5)
        logit = jnp.dot(feat, head_w,
                        preferred_element_type=jnp.float32) + head_b  # (Np, C)
        # Nearest upsample via the 0/1 matrix `up`, written as a lane-dense
        # (classes, H*W) slab per batch item.
        for c in range(NUM_CLASSES):
            col = logit[:, c:c + 1]                                   # (Np, 1)
            row = jnp.sum(col * up, axis=0, keepdims=True)            # (1, HW)
            r = b * NUM_CLASSES + c
            out_ref[r:r + 1, :] = row.astype(out_ref.dtype)


# ------------------------------ parameters ------------------------------------
def init_params(key):
    ks = jax.random.split(key, 12)
    std = 0.02
    p = {
        # patch embedding (Conv2d(NUM_CHANNELS, D, k=PATCH, s=PATCH) as matmul)
        "patch_w": std * jax.random.normal(
            ks[0], (PATCH_FEATS, EMBED_DIM), jnp.float32),
        "patch_b": jnp.zeros((EMBED_DIM,), jnp.float32),
        "cls_token": std * jax.random.normal(ks[1], (1, EMBED_DIM), jnp.float32),
        "pos_embed": std * jax.random.normal(ks[2], (SEQ, EMBED_DIM), jnp.float32),
        # transformer block
        "ln1_g": jnp.ones((EMBED_DIM,), jnp.float32),
        "ln1_b": jnp.zeros((EMBED_DIM,), jnp.float32),
        "qkv_w": std * jax.random.normal(ks[3], (EMBED_DIM, 3 * EMBED_DIM), jnp.float32),
        "qkv_b": jnp.zeros((3 * EMBED_DIM,), jnp.float32),
        "proj_w": std * jax.random.normal(ks[4], (EMBED_DIM, EMBED_DIM), jnp.float32),
        "proj_b": jnp.zeros((EMBED_DIM,), jnp.float32),
        "ln2_g": jnp.ones((EMBED_DIM,), jnp.float32),
        "ln2_b": jnp.zeros((EMBED_DIM,), jnp.float32),
        "fc1_w": std * jax.random.normal(ks[5], (EMBED_DIM, MLP_HIDDEN), jnp.float32),
        "fc1_b": jnp.zeros((MLP_HIDDEN,), jnp.float32),
        "fc2_w": std * jax.random.normal(ks[6], (MLP_HIDDEN, EMBED_DIM), jnp.float32),
        "fc2_b": jnp.zeros((EMBED_DIM,), jnp.float32),
        # segmentation head
        "head_ln_g": jnp.ones((EMBED_DIM,), jnp.float32),
        "head_ln_b": jnp.zeros((EMBED_DIM,), jnp.float32),
        "head_w": std * jax.random.normal(ks[7], (EMBED_DIM, NUM_CLASSES), jnp.float32),
        "head_b": jnp.zeros((NUM_CLASSES,), jnp.float32),
    }
    return p


# ------------------------------ forward pass ----------------------------------
def open_canopy_forward(params, x):
    """x: (B, C, H, W) float32 NCHW. Returns {'out': (B, num_classes, H, W)}."""
    B, C, H, W = x.shape

    # im2col for the patch-embedding conv (pure layout glue on the raw input).
    patches = x.reshape(B, C, GRID_HW, PATCH, GRID_HW, PATCH)
    patches = patches.transpose(0, 2, 4, 1, 3, 5)            # (B, Hp, Wp, C, p, p)
    patches = patches.reshape(B, NUM_PATCHES, PATCH_FEATS)
    # Prepend a zero row per batch for the CLS slot so the single in-kernel
    # matmul covers the full sequence; CLS value is injected via tok_add.
    patches = jnp.concatenate(
        [jnp.zeros((B, 1, PATCH_FEATS), x.dtype), patches], axis=1)   # (B, SEQ, 64)

    # Fold cls token, patch bias and positional embedding into one additive term.
    tok_add = jnp.concatenate(
        [params["cls_token"] + params["pos_embed"][0:1],
         params["patch_b"][None, :] + params["pos_embed"][1:]], axis=0)  # (SEQ, D)

    # 0/1 nearest-neighbour upsample matrix: (NUM_PATCHES, H*W).
    hh = jnp.arange(IMG_SIZE)
    ww = jnp.arange(IMG_SIZE)
    target = (hh[:, None] // PATCH) * GRID_HW + (ww[None, :] // PATCH)   # (H, W)
    up = (jnp.arange(NUM_PATCHES)[:, None]
          == target.reshape(1, -1)).astype(jnp.float32)                 # (Np, HW)

    def r1(v):  # 1-D param -> (1, N) so it sits cleanly on the lane axis
        return v.reshape(1, -1)

    out = pl.pallas_call(
        _fused_forward_kernel,
        out_shape=jax.ShapeDtypeStruct((B * NUM_CLASSES, HW), jnp.float32),
        in_specs=[_VMEM] * 20,
        out_specs=_VMEM,
    )(
        patches, params["patch_w"], tok_add,
        r1(params["ln1_g"]), r1(params["ln1_b"]),
        params["qkv_w"], r1(params["qkv_b"]),
        params["proj_w"], r1(params["proj_b"]),
        r1(params["ln2_g"]), r1(params["ln2_b"]),
        params["fc1_w"], r1(params["fc1_b"]),
        params["fc2_w"], r1(params["fc2_b"]),
        r1(params["head_ln_g"]), r1(params["head_ln_b"]),
        params["head_w"], r1(params["head_b"]),
        up,
    )
    # (B*classes, H*W) -> NCHW is a free, contiguous reshape.
    return {"out": out.reshape(B, NUM_CLASSES, H, W)}


# ------------------------------ main -------------------------------------------
if __name__ == "__main__":
    key = jax.random.PRNGKey(0)
    pkey, xkey = jax.random.split(key)
    params = init_params(pkey)
    x = jax.random.normal(xkey, (BATCH, NUM_CHANNELS, IMG_SIZE, IMG_SIZE),
                          dtype=jnp.float32)

    result = jax.jit(open_canopy_forward)(params, x)
    out = jax.block_until_ready(result["out"])

    assert out.shape == (BATCH, NUM_CLASSES, IMG_SIZE, IMG_SIZE), out.shape
    assert jnp.all(jnp.isfinite(out))
    print("KERNEL_OK")
</pallas_src>

<mosaic_0001>
module attributes {stable_mosaic.version = 11 : i64} {
  func.func @_fused_forward_kernel(%arg0: memref<2x17x64xf32, #tpu.memory_space<vmem>>, %arg1: memref<64x32xf32, #tpu.memory_space<vmem>>, %arg2: memref<17x32xf32, #tpu.memory_space<vmem>>, %arg3: memref<1x32xf32, #tpu.memory_space<vmem>>, %arg4: memref<1x32xf32, #tpu.memory_space<vmem>>, %arg5: memref<32x96xf32, #tpu.memory_space<vmem>>, %arg6: memref<1x96xf32, #tpu.memory_space<vmem>>, %arg7: memref<32x32xf32, #tpu.memory_space<vmem>>, %arg8: memref<1x32xf32, #tpu.memory_space<vmem>>, %arg9: memref<1x32xf32, #tpu.memory_space<vmem>>, %arg10: memref<1x32xf32, #tpu.memory_space<vmem>>, %arg11: memref<32x64xf32, #tpu.memory_space<vmem>>, %arg12: memref<1x64xf32, #tpu.memory_space<vmem>>, %arg13: memref<64x32xf32, #tpu.memory_space<vmem>>, %arg14: memref<1x32xf32, #tpu.memory_space<vmem>>, %arg15: memref<1x32xf32, #tpu.memory_space<vmem>>, %arg16: memref<1x32xf32, #tpu.memory_space<vmem>>, %arg17: memref<32x4xf32, #tpu.memory_space<vmem>>, %arg18: memref<1x4xf32, #tpu.memory_space<vmem>>, %arg19: memref<16x256xf32, #tpu.memory_space<vmem>>, %arg20: memref<8x256xf32, #tpu.memory_space<vmem>>) attributes {dimension_semantics = [], scalar_prefetch = 0 : i64, scratch_operands = 0 : i64, tpu.core_type = #tpu.core_type<tc>} {
    %c0 = arith.constant 0 : index
    %c0_0 = arith.constant 0 : index
    %0 = vector.load %arg1[%c0, %c0_0] : memref<64x32xf32, #tpu.memory_space<vmem>>, vector<64x32xf32>
    %c0_1 = arith.constant 0 : index
    %c0_2 = arith.constant 0 : index
    %1 = vector.load %arg2[%c0_1, %c0_2] : memref<17x32xf32, #tpu.memory_space<vmem>>, vector<17x32xf32>
    %c0_3 = arith.constant 0 : index
    %c0_4 = arith.constant 0 : index
    %2 = vector.load %arg3[%c0_3, %c0_4] : memref<1x32xf32, #tpu.memory_space<vmem>>, vector<1x32xf32>
    %c0_5 = arith.constant 0 : index
    %c0_6 = arith.constant 0 : index
    %3 = vector.load %arg4[%c0_5, %c0_6] : memref<1x32xf32, #tpu.memory_space<vmem>>, vector<1x32xf32>
    %c0_7 = arith.constant 0 : index
    %c0_8 = arith.constant 0 : index
    %4 = vector.load %arg5[%c0_7, %c0_8] : memref<32x96xf32, #tpu.memory_space<vmem>>, vector<32x96xf32>
    %c0_9 = arith.constant 0 : index
    %c0_10 = arith.constant 0 : index
    %5 = vector.load %arg6[%c0_9, %c0_10] : memref<1x96xf32, #tpu.memory_space<vmem>>, vector<1x96xf32>
    %c0_11 = arith.constant 0 : index
    %c0_12 = arith.constant 0 : index
    %6 = vector.load %arg7[%c0_11, %c0_12] : memref<32x32xf32, #tpu.memory_space<vmem>>, vector<32x32xf32>
    %c0_13 = arith.constant 0 : index
    %c0_14 = arith.constant 0 : index
    %7 = vector.load %arg8[%c0_13, %c0_14] : memref<1x32xf32, #tpu.memory_space<vmem>>, vector<1x32xf32>
    %c0_15 = arith.constant 0 : index
    %c0_16 = arith.constant 0 : index
    %8 = vector.load %arg9[%c0_15, %c0_16] : memref<1x32xf32, #tpu.memory_space<vmem>>, vector<1x32xf32>
    %c0_17 = arith.constant 0 : index
    %c0_18 = arith.constant 0 : index
    %9 = vector.load %arg10[%c0_17, %c0_18] : memref<1x32xf32, #tpu.memory_space<vmem>>, vector<1x32xf32>
    %c0_19 = arith.constant 0 : index
    %c0_20 = arith.constant 0 : index
    %10 = vector.load %arg11[%c0_19, %c0_20] : memref<32x64xf32, #tpu.memory_space<vmem>>, vector<32x64xf32>
    %c0_21 = arith.constant 0 : index
    %c0_22 = arith.constant 0 : index
    %11 = vector.load %arg12[%c0_21, %c0_22] : memref<1x64xf32, #tpu.memory_space<vmem>>, vector<1x64xf32>
    %c0_23 = arith.constant 0 : index
    %c0_24 = arith.constant 0 : index
    %12 = vector.load %arg13[%c0_23, %c0_24] : memref<64x32xf32, #tpu.memory_space<vmem>>, vector<64x32xf32>
    %c0_25 = arith.constant 0 : index
    %c0_26 = arith.constant 0 : index
    %13 = vector.load %arg14[%c0_25, %c0_26] : memref<1x32xf32, #tpu.memory_space<vmem>>, vector<1x32xf32>
    %c0_27 = arith.constant 0 : index
    %c0_28 = arith.constant 0 : index
    %14 = vector.load %arg15[%c0_27, %c0_28] : memref<1x32xf32, #tpu.memory_space<vmem>>, vector<1x32xf32>
    %c0_29 = arith.constant 0 : index
    %c0_30 = arith.constant 0 : index
    %15 = vector.load %arg16[%c0_29, %c0_30] : memref<1x32xf32, #tpu.memory_space<vmem>>, vector<1x32xf32>
    %c0_31 = arith.constant 0 : index
    %c0_32 = arith.constant 0 : index
    %16 = vector.load %arg17[%c0_31, %c0_32] : memref<32x4xf32, #tpu.memory_space<vmem>>, vector<32x4xf32>
    %c0_33 = arith.constant 0 : index
    %c0_34 = arith.constant 0 : index
    %17 = vector.load %arg18[%c0_33, %c0_34] : memref<1x4xf32, #tpu.memory_space<vmem>>, vector<1x4xf32>
    %c0_35 = arith.constant 0 : index
    %c0_36 = arith.constant 0 : index
    %18 = vector.load %arg19[%c0_35, %c0_36] : memref<16x256xf32, #tpu.memory_space<vmem>>, vector<16x256xf32>
    %c0_37 = arith.constant 0 : index
    %c0_38 = arith.constant 0 : index
    %c0_39 = arith.constant 0 : index
    %19 = vector.load %arg0[%c0_37, %c0_38, %c0_39] : memref<2x17x64xf32, #tpu.memory_space<vmem>>, vector<1x17x64xf32>
    %20 = vector.shape_cast %19 : vector<1x17x64xf32> to vector<17x64xf32>
    %cst = arith.constant dense<0.000000e+00> : vector<17x32xf32>
    %21 = tpu.matmul %20, %0, %cst {dimension_numbers = #tpu.dot_dimension_numbers<[1], [0], [0], [1], [0, 0, 1, 1], [], []>} : vector<17x64xf32>, vector<64x32xf32>, vector<17x32xf32> -> vector<17x32xf32>
    %22 = arith.addf %21, %1 : vector<17x32xf32>
    %cst_40 = arith.constant dense<0.000000e+00> : vector<17xf32>
    %23 = vector.multi_reduction <add>, %22, %cst_40 [1] : vector<17x32xf32> to vector<17xf32>
    %24 = vector.shape_cast %23 : vector<17xf32> to vector<17x1xf32>
    %cst_41 = arith.constant 3.200000e+01 : f32
    %25 = vector.broadcast %cst_41 : f32 to vector<17x1xf32>
    %26 = arith.divf %24, %25 : vector<17x1xf32>
    %27 = vector.broadcast %26 : vector<17x1xf32> to vector<17x32xf32>
    %28 = arith.subf %22, %27 : vector<17x32xf32>
    %29 = arith.mulf %28, %28 : vector<17x32xf32>
    %cst_42 = arith.constant dense<0.000000e+00> : vector<17xf32>
    %30 = vector.multi_reduction <add>, %29, %cst_42 [1] : vector<17x32xf32> to vector<17xf32>
    %31 = vector.shape_cast %30 : vector<17xf32> to vector<17x1xf32>
    %cst_43 = arith.constant 3.200000e+01 : f32
    %32 = vector.broadcast %cst_43 : f32 to vector<17x1xf32>
    %33 = arith.divf %31, %32 : vector<17x1xf32>
    %34 = vector.broadcast %26 : vector<17x1xf32> to vector<17x32xf32>
    %35 = arith.subf %22, %34 : vector<17x32xf32>
    %cst_44 = arith.constant 9.99999997E-7 : f32
    %36 = vector.broadcast %cst_44 : f32 to vector<17x1xf32>
    %37 = arith.addf %33, %36 : vector<17x1xf32>
    %38 = math.rsqrt %37 : vector<17x1xf32>
    %39 = vector.broadcast %38 : vector<17x1xf32> to vector<17x32xf32>
    %40 = arith.mulf %35, %39 : vector<17x32xf32>
    %41 = vector.broadcast %2 : vector<1x32xf32> to vector<17x32xf32>
    %42 = arith.mulf %40, %41 : vector<17x32xf32>
    %43 = vector.broadcast %3 : vector<1x32xf32> to vector<17x32xf32>
    %44 = arith.addf %42, %43 : vector<17x32xf32>
    %cst_45 = arith.constant dense<0.000000e+00> : vector<17x96xf32>
    %45 = tpu.matmul %44, %4, %cst_45 {dimension_numbers = #tpu.dot_dimension_numbers<[1], [0], [0], [1], [0, 0, 1, 1], [], []>} : vector<17x32xf32>, vector<32x96xf32>, vector<17x96xf32> -> vector<17x96xf32>
    %46 = vector.broadcast %5 : vector<1x96xf32> to vector<17x96xf32>
    %47 = arith.addf %45, %46 : vector<17x96xf32>
    %cst_46 = arith.constant 0.000000e+00 : f32
    %48 = vector.broadcast %cst_46 : f32 to vector<17x32xf32>
    %49 = vector.extract_strided_slice %47 {offsets = [0, 0], sizes = [17, 8], strides = [1, 1]} : vector<17x96xf32> to vector<17x8xf32>
    %50 = vector.extract_strided_slice %47 {offsets = [0, 32], sizes = [17, 8], strides = [1, 1]} : vector<17x96xf32> to vector<17x8xf32>
    %51 = vector.extract_strided_slice %47 {offsets = [0, 64], sizes = [17, 8], strides = [1, 1]} : vector<17x96xf32> to vector<17x8xf32>
    %cst_47 = arith.constant dense<0.000000e+00> : vector<17x17xf32>
    %52 = tpu.matmul %49, %50, %cst_47 {dimension_numbers = #tpu.dot_dimension_numbers<[1], [1], [0], [0], [0, 0, 1, 0], [], []>} : vector<17x8xf32>, vector<17x8xf32>, vector<17x17xf32> -> vector<17x17xf32>
    %cst_48 = arith.constant 0.353553385 : f32
    %53 = vector.broadcast %cst_48 : f32 to vector<17x17xf32>
    %54 = arith.mulf %52, %53 : vector<17x17xf32>
    %cst_49 = arith.constant dense<0xFF800000> : vector<17xf32>
    %55 = vector.multi_reduction <maximumf>, %54, %cst_49 [1] : vector<17x17xf32> to vector<17xf32>
    %56 = vector.shape_cast %55 : vector<17xf32> to vector<17x1xf32>
    %57 = vector.broadcast %56 : vector<17x1xf32> to vector<17x17xf32>
    %58 = arith.subf %54, %57 : vector<17x17xf32>
    %59 = math.exp %58 : vector<17x17xf32>
    %cst_50 = arith.constant dense<0.000000e+00> : vector<17xf32>
    %60 = vector.multi_reduction <add>, %59, %cst_50 [1] : vector<17x17xf32> to vector<17xf32>
    %61 = vector.shape_cast %60 : vector<17xf32> to vector<17x1xf32>
    %62 = tpu.reciprocal %61 {approx = true} : vector<17x1xf32> -> vector<17x1xf32>
    %63 = vector.broadcast %62 : vector<17x1xf32> to vector<17x17xf32>
    %64 = arith.mulf %59, %63 : vector<17x17xf32>
    %cst_51 = arith.constant dense<0.000000e+00> : vector<17x8xf32>
    %65 = tpu.matmul %64, %51, %cst_51 {dimension_numbers = #tpu.dot_dimension_numbers<[1], [0], [0], [1], [0, 0, 1, 1], [], []>} : vector<17x17xf32>, vector<17x8xf32>, vector<17x8xf32> -> vector<17x8xf32>
    %66 = vector.extract_strided_slice %6 {offsets = [0, 0], sizes = [8, 32], strides = [1, 1]} : vector<32x32xf32> to vector<8x32xf32>
    %cst_52 = arith.constant dense<0.000000e+00> : vector<17x32xf32>
    %67 = tpu.matmul %65, %66, %cst_52 {dimension_numbers = #tpu.dot_dimension_numbers<[1], [0], [0], [1], [0, 0, 1, 1], [], []>} : vector<17x8xf32>, vector<8x32xf32>, vector<17x32xf32> -> vector<17x32xf32>
    %68 = arith.addf %48, %67 : vector<17x32xf32>
    %69 = vector.extract_strided_slice %47 {offsets = [0, 8], sizes = [17, 8], strides = [1, 1]} : vector<17x96xf32> to vector<17x8xf32>
    %70 = vector.extract_strided_slice %47 {offsets = [0, 40], sizes = [17, 8], strides = [1, 1]} : vector<17x96xf32> to vector<17x8xf32>
    %71 = vector.extract_strided_slice %47 {offsets = [0, 72], sizes = [17, 8], strides = [1, 1]} : vector<17x96xf32> to vector<17x8xf32>
    %cst_53 = arith.constant dense<0.000000e+00> : vector<17x17xf32>
    %72 = tpu.matmul %69, %70, %cst_53 {dimension_numbers = #tpu.dot_dimension_numbers<[1], [1], [0], [0], [0, 0, 1, 0], [], []>} : vector<17x8xf32>, vector<17x8xf32>, vector<17x17xf32> -> vector<17x17xf32>
    %cst_54 = arith.constant 0.353553385 : f32
    %73 = vector.broadcast %cst_54 : f32 to vector<17x17xf32>
    %74 = arith.mulf %72, %73 : vector<17x17xf32>
    %cst_55 = arith.constant dense<0xFF800000> : vector<17xf32>
    %75 = vector.multi_reduction <maximumf>, %74, %cst_55 [1] : vector<17x17xf32> to vector<17xf32>
    %76 = vector.shape_cast %75 : vector<17xf32> to vector<17x1xf32>
    %77 = vector.broadcast %76 : vector<17x1xf32> to vector<17x17xf32>
    %78 = arith.subf %74, %77 : vector<17x17xf32>
    %79 = math.exp %78 : vector<17x17xf32>
    %cst_56 = arith.constant dense<0.000000e+00> : vector<17xf32>
    %80 = vector.multi_reduction <add>, %79, %cst_56 [1] : vector<17x17xf32> to vector<17xf32>
    %81 = vector.shape_cast %80 : vector<17xf32> to vector<17x1xf32>
    %82 = tpu.reciprocal %81 {approx = true} : vector<17x1xf32> -> vector<17x1xf32>
    %83 = vector.broadcast %82 : vector<17x1xf32> to vector<17x17xf32>
    %84 = arith.mulf %79, %83 : vector<17x17xf32>
    %cst_57 = arith.constant dense<0.000000e+00> : vector<17x8xf32>
    %85 = tpu.matmul %84, %71, %cst_57 {dimension_numbers = #tpu.dot_dimension_numbers<[1], [0], [0], [1], [0, 0, 1, 1], [], []>} : vector<17x17xf32>, vector<17x8xf32>, vector<17x8xf32> -> vector<17x8xf32>
    %86 = vector.extract_strided_slice %6 {offsets = [8, 0], sizes = [8, 32], strides = [1, 1]} : vector<32x32xf32> to vector<8x32xf32>
    %cst_58 = arith.constant dense<0.000000e+00> : vector<17x32xf32>
    %87 = tpu.matmul %85, %86, %cst_58 {dimension_numbers = #tpu.dot_dimension_numbers<[1], [0], [0], [1], [0, 0, 1, 1], [], []>} : vector<17x8xf32>, vector<8x32xf32>, vector<17x32xf32> -> vector<17x32xf32>
    %88 = arith.addf %68, %87 : vector<17x32xf32>
    %89 = vector.extract_strided_slice %47 {offsets = [0, 16], sizes = [17, 8], strides = [1, 1]} : vector<17x96xf32> to vector<17x8xf32>
    %90 = vector.extract_strided_slice %47 {offsets = [0, 48], sizes = [17, 8], strides = [1, 1]} : vector<17x96xf32> to vector<17x8xf32>
    %91 = vector.extract_strided_slice %47 {offsets = [0, 80], sizes = [17, 8], strides = [1, 1]} : vector<17x96xf32> to vector<17x8xf32>
    %cst_59 = arith.constant dense<0.000000e+00> : vector<17x17xf32>
    %92 = tpu.matmul %89, %90, %cst_59 {dimension_numbers = #tpu.dot_dimension_numbers<[1], [1], [0], [0], [0, 0, 1, 0], [], []>} : vector<17x8xf32>, vector<17x8xf32>, vector<17x17xf32> -> vector<17x17xf32>
    %cst_60 = arith.constant 0.353553385 : f32
    %93 = vector.broadcast %cst_60 : f32 to vector<17x17xf32>
    %94 = arith.mulf %92, %93 : vector<17x17xf32>
    %cst_61 = arith.constant dense<0xFF800000> : vector<17xf32>
    %95 = vector.multi_reduction <maximumf>, %94, %cst_61 [1] : vector<17x17xf32> to vector<17xf32>
    %96 = vector.shape_cast %95 : vector<17xf32> to vector<17x1xf32>
    %97 = vector.broadcast %96 : vector<17x1xf32> to vector<17x17xf32>
    %98 = arith.subf %94, %97 : vector<17x17xf32>
    %99 = math.exp %98 : vector<17x17xf32>
    %cst_62 = arith.constant dense<0.000000e+00> : vector<17xf32>
    %100 = vector.multi_reduction <add>, %99, %cst_62 [1] : vector<17x17xf32> to vector<17xf32>
    %101 = vector.shape_cast %100 : vector<17xf32> to vector<17x1xf32>
    %102 = tpu.reciprocal %101 {approx = true} : vector<17x1xf32> -> vector<17x1xf32>
    %103 = vector.broadcast %102 : vector<17x1xf32> to vector<17x17xf32>
    %104 = arith.mulf %99, %103 : vector<17x17xf32>
    %cst_63 = arith.constant dense<0.000000e+00> : vector<17x8xf32>
    %105 = tpu.matmul %104, %91, %cst_63 {dimension_numbers = #tpu.dot_dimension_numbers<[1], [0], [0], [1], [0, 0, 1, 1], [], []>} : vector<17x17xf32>, vector<17x8xf32>, vector<17x8xf32> -> vector<17x8xf32>
    %106 = vector.extract_strided_slice %6 {offsets = [16, 0], sizes = [8, 32], strides = [1, 1]} : vector<32x32xf32> to vector<8x32xf32>
    %cst_64 = arith.constant dense<0.000000e+00> : vector<17x32xf32>
    %107 = tpu.matmul %105, %106, %cst_64 {dimension_numbers = #tpu.dot_dimension_numbers<[1], [0], [0], [1], [0, 0, 1, 1], [], []>} : vector<17x8xf32>, vector<8x32xf32>, vector<17x32xf32> -> vector<17x32xf32>
    %108 = arith.addf %88, %107 : vector<17x32xf32>
    %109 = vector.extract_strided_slice %47 {offsets = [0, 24], sizes = [17, 8], strides = [1, 1]} : vector<17x96xf32> to vector<17x8xf32>
    %110 = vector.extract_strided_slice %47 {offsets = [0, 56], sizes = [17, 8], strides = [1, 1]} : vector<17x96xf32> to vector<17x8xf32>
    %111 = vector.extract_strided_slice %47 {offsets = [0, 88], sizes = [17, 8], strides = [1, 1]} : vector<17x96xf32> to vector<17x8xf32>
    %cst_65 = arith.constant dense<0.000000e+00> : vector<17x17xf32>
    %112 = tpu.matmul %109, %110, %cst_65 {dimension_numbers = #tpu.dot_dimension_numbers<[1], [1], [0], [0], [0, 0, 1, 0], [], []>} : vector<17x8xf32>, vector<17x8xf32>, vector<17x17xf32> -> vector<17x17xf32>
    %cst_66 = arith.constant 0.353553385 : f32
    %113 = vector.broadcast %cst_66 : f32 to vector<17x17xf32>
    %114 = arith.mulf %112, %113 : vector<17x17xf32>
    %cst_67 = arith.constant dense<0xFF800000> : vector<17xf32>
    %115 = vector.multi_reduction <maximumf>, %114, %cst_67 [1] : vector<17x17xf32> to vector<17xf32>
    %116 = vector.shape_cast %115 : vector<17xf32> to vector<17x1xf32>
    %117 = vector.broadcast %116 : vector<17x1xf32> to vector<17x17xf32>
    %118 = arith.subf %114, %117 : vector<17x17xf32>
    %119 = math.exp %118 : vector<17x17xf32>
    %cst_68 = arith.constant dense<0.000000e+00> : vector<17xf32>
    %120 = vector.multi_reduction <add>, %119, %cst_68 [1] : vector<17x17xf32> to vector<17xf32>
    %121 = vector.shape_cast %120 : vector<17xf32> to vector<17x1xf32>
    %122 = tpu.reciprocal %121 {approx = true} : vector<17x1xf32> -> vector<17x1xf32>
    %123 = vector.broadcast %122 : vector<17x1xf32> to vector<17x17xf32>
    %124 = arith.mulf %119, %123 : vector<17x17xf32>
    %cst_69 = arith.constant dense<0.000000e+00> : vector<17x8xf32>
    %125 = tpu.matmul %124, %111, %cst_69 {dimension_numbers = #tpu.dot_dimension_numbers<[1], [0], [0], [1], [0, 0, 1, 1], [], []>} : vector<17x17xf32>, vector<17x8xf32>, vector<17x8xf32> -> vector<17x8xf32>
    %126 = vector.extract_strided_slice %6 {offsets = [24, 0], sizes = [8, 32], strides = [1, 1]} : vector<32x32xf32> to vector<8x32xf32>
    %cst_70 = arith.constant dense<0.000000e+00> : vector<17x32xf32>
    %127 = tpu.matmul %125, %126, %cst_70 {dimension_numbers = #tpu.dot_dimension_numbers<[1], [0], [0], [1], [0, 0, 1, 1], [], []>} : vector<17x8xf32>, vector<8x32xf32>, vector<17x32xf32> -> vector<17x32xf32>
    %128 = arith.addf %108, %127 : vector<17x32xf32>
    %129 = arith.addf %22, %128 : vector<17x32xf32>
    %130 = vector.broadcast %7 : vector<1x32xf32> to vector<17x32xf32>
    %131 = arith.addf %129, %130 : vector<17x32xf32>
    %cst_71 = arith.constant dense<0.000000e+00> : vector<17xf32>
    %132 = vector.multi_reduction <add>, %131, %cst_71 [1] : vector<17x32xf32> to vector<17xf32>
    %133 = vector.shape_cast %132 : vector<17xf32> to vector<17x1xf32>
    %cst_72 = arith.constant 3.200000e+01 : f32
    %134 = vector.broadcast %cst_72 : f32 to vector<17x1xf32>
    %135 = arith.divf %133, %134 : vector<17x1xf32>
    %136 = vector.broadcast %135 : vector<17x1xf32> to vector<17x32xf32>
    %137 = arith.subf %131, %136 : vector<17x32xf32>
    %138 = arith.mulf %137, %137 : vector<17x32xf32>
    %cst_73 = arith.constant dense<0.000000e+00> : vector<17xf32>
    %139 = vector.multi_reduction <add>, %138, %cst_73 [1] : vector<17x32xf32> to vector<17xf32>
    %140 = vector.shape_cast %139 : vector<17xf32> to vector<17x1xf32>
    %cst_74 = arith.constant 3.200000e+01 : f32
    %141 = vector.broadcast %cst_74 : f32 to vector<17x1xf32>
    %142 = arith.divf %140, %141 : vector<17x1xf32>
    %143 = vector.broadcast %135 : vector<17x1xf32> to vector<17x32xf32>
    %144 = arith.subf %131, %143 : vector<17x32xf32>
    %cst_75 = arith.constant 9.99999997E-7 : f32
    %145 = vector.broadcast %cst_75 : f32 to vector<17x1xf32>
    %146 = arith.addf %142, %145 : vector<17x1xf32>
    %147 = math.rsqrt %146 : vector<17x1xf32>
    %148 = vector.broadcast %147 : vector<17x1xf32> to vector<17x32xf32>
    %149 = arith.mulf %144, %148 : vector<17x32xf32>
    %150 = vector.broadcast %8 : vector<1x32xf32> to vector<17x32xf32>
    %151 = arith.mulf %149, %150 : vector<17x32xf32>
    %152 = vector.broadcast %9 : vector<1x32xf32> to vector<17x32xf32>
    %153 = arith.addf %151, %152 : vector<17x32xf32>
    %cst_76 = arith.constant dense<0.000000e+00> : vector<17x64xf32>
    %154 = tpu.matmul %153, %10, %cst_76 {dimension_numbers = #tpu.dot_dimension_numbers<[1], [0], [0], [1], [0, 0, 1, 1], [], []>} : vector<17x32xf32>, vector<32x64xf32>, vector<17x64xf32> -> vector<17x64xf32>
    %155 = vector.broadcast %11 : vector<1x64xf32> to vector<17x64xf32>
    %156 = arith.addf %154, %155 : vector<17x64xf32>
    %cst_77 = arith.constant 5.000000e-01 : f32
    %157 = vector.broadcast %cst_77 : f32 to vector<17x64xf32>
    %158 = arith.mulf %157, %156 : vector<17x64xf32>
    %cst_78 = arith.constant 4.471500e-02 : f32
    %159 = vector.broadcast %cst_78 : f32 to vector<17x64xf32>
    %160 = arith.mulf %159, %156 : vector<17x64xf32>
    %161 = arith.mulf %160, %156 : vector<17x64xf32>
    %162 = arith.mulf %161, %156 : vector<17x64xf32>
    %163 = arith.addf %156, %162 : vector<17x64xf32>
    %cst_79 = arith.constant 0.797884583 : f32
    %164 = vector.broadcast %cst_79 : f32 to vector<17x64xf32>
    %165 = arith.mulf %164, %163 : vector<17x64xf32>
    %166 = math.tanh %165 : vector<17x64xf32>
    %cst_80 = arith.constant 1.000000e+00 : f32
    %167 = vector.broadcast %cst_80 : f32 to vector<17x64xf32>
    %168 = arith.addf %167, %166 : vector<17x64xf32>
    %169 = arith.mulf %158, %168 : vector<17x64xf32>
    %cst_81 = arith.constant dense<0.000000e+00> : vector<17x32xf32>
    %170 = tpu.matmul %169, %12, %cst_81 {dimension_numbers = #tpu.dot_dimension_numbers<[1], [0], [0], [1], [0, 0, 1, 1], [], []>} : vector<17x64xf32>, vector<64x32xf32>, vector<17x32xf32> -> vector<17x32xf32>
    %171 = vector.broadcast %13 : vector<1x32xf32> to vector<17x32xf32>
    %172 = arith.addf %170, %171 : vector<17x32xf32>
    %173 = arith.addf %131, %172 : vector<17x32xf32>
    %174 = vector.extract_strided_slice %173 {offsets = [1, 0], sizes = [16, 32], strides = [1, 1]} : vector<17x32xf32> to vector<16x32xf32>
    %cst_82 = arith.constant dense<0.000000e+00> : vector<16xf32>
    %175 = vector.multi_reduction <add>, %174, %cst_82 [1] : vector<16x32xf32> to vector<16xf32>
    %176 = vector.shape_cast %175 : vector<16xf32> to vector<16x1xf32>
    %cst_83 = arith.constant 3.200000e+01 : f32
    %177 = vector.broadcast %cst_83 : f32 to vector<16x1xf32>
    %178 = arith.divf %176, %177 : vector<16x1xf32>
    %179 = vector.broadcast %178 : vector<16x1xf32> to vector<16x32xf32>
    %180 = arith.subf %174, %179 : vector<16x32xf32>
    %181 = arith.mulf %180, %180 : vector<16x32xf32>
    %cst_84 = arith.constant dense<0.000000e+00> : vector<16xf32>
    %182 = vector.multi_reduction <add>, %181, %cst_84 [1] : vector<16x32xf32> to vector<16xf32>
    %183 = vector.shape_cast %182 : vector<16xf32> to vector<16x1xf32>
    %cst_85 = arith.constant 3.200000e+01 : f32
    %184 = vector.broadcast %cst_85 : f32 to vector<16x1xf32>
    %185 = arith.divf %183, %184 : vector<16x1xf32>
    %186 = vector.broadcast %178 : vector<16x1xf32> to vector<16x32xf32>
    %187 = arith.subf %174, %186 : vector<16x32xf32>
    %cst_86 = arith.constant 9.99999974E-6 : f32
    %188 = vector.broadcast %cst_86 : f32 to vector<16x1xf32>
    %189 = arith.addf %185, %188 : vector<16x1xf32>
    %190 = math.rsqrt %189 : vector<16x1xf32>
    %191 = vector.broadcast %190 : vector<16x1xf32> to vector<16x32xf32>
    %192 = arith.mulf %187, %191 : vector<16x32xf32>
    %193 = vector.broadcast %14 : vector<1x32xf32> to vector<16x32xf32>
    %194 = arith.mulf %192, %193 : vector<16x32xf32>
    %195 = vector.broadcast %15 : vector<1x32xf32> to vector<16x32xf32>
    %196 = arith.addf %194, %195 : vector<16x32xf32>
    %cst_87 = arith.constant dense<0.000000e+00> : vector<16x4xf32>
    %197 = tpu.matmul %196, %16, %cst_87 {dimension_numbers = #tpu.dot_dimension_numbers<[1], [0], [0], [1], [0, 0, 1, 1], [], []>} : vector<16x32xf32>, vector<32x4xf32>, vector<16x4xf32> -> vector<16x4xf32>
    %198 = vector.broadcast %17 : vector<1x4xf32> to vector<16x4xf32>
    %199 = arith.addf %197, %198 : vector<16x4xf32>
    %200 = vector.extract_strided_slice %199 {offsets = [0, 0], sizes = [16, 1], strides = [1, 1]} : vector<16x4xf32> to vector<16x1xf32>
    %201 = vector.broadcast %200 : vector<16x1xf32> to vector<16x256xf32>
    %202 = arith.mulf %201, %18 : vector<16x256xf32>
    %cst_88 = arith.constant dense<0.000000e+00> : vector<256xf32>
    %203 = vector.multi_reduction <add>, %202, %cst_88 [0] : vector<16x256xf32> to vector<256xf32>
    %204 = vector.shape_cast %203 : vector<256xf32> to vector<1x256xf32>
    %c0_89 = arith.constant 0 : index
    %c0_90 = arith.constant 0 : index
    %205 = vector.load %arg20[%c0_89, %c0_90] : memref<8x256xf32, #tpu.memory_space<vmem>>, vector<1x256xf32>
    tpu.vector_store %arg20[%c0_89, %c0_90], %204 {strides = array<i32>} : memref<8x256xf32, #tpu.memory_space<vmem>>, vector<1x256xf32>,
    %206 = vector.extract_strided_slice %199 {offsets = [0, 1], sizes = [16, 1], strides = [1, 1]} : vector<16x4xf32> to vector<16x1xf32>
    %207 = vector.broadcast %206 : vector<16x1xf32> to vector<16x256xf32>
    %208 = arith.mulf %207, %18 : vector<16x256xf32>
    %cst_91 = arith.constant dense<0.000000e+00> : vector<256xf32>
    %209 = vector.multi_reduction <add>, %208, %cst_91 [0] : vector<16x256xf32> to vector<256xf32>
    %210 = vector.shape_cast %209 : vector<256xf32> to vector<1x256xf32>
    %c1 = arith.constant 1 : index
    %c0_92 = arith.constant 0 : index
    %211 = vector.load %arg20[%c1, %c0_92] : memref<8x256xf32, #tpu.memory_space<vmem>>, vector<1x256xf32>
    tpu.vector_store %arg20[%c1, %c0_92], %210 {strides = array<i32>} : memref<8x256xf32, #tpu.memory_space<vmem>>, vector<1x256xf32>,
    %212 = vector.extract_strided_slice %199 {offsets = [0, 2], sizes = [16, 1], strides = [1, 1]} : vector<16x4xf32> to vector<16x1xf32>
    %213 = vector.broadcast %212 : vector<16x1xf32> to vector<16x256xf32>
    %214 = arith.mulf %213, %18 : vector<16x256xf32>
    %cst_93 = arith.constant dense<0.000000e+00> : vector<256xf32>
    %215 = vector.multi_reduction <add>, %214, %cst_93 [0] : vector<16x256xf32> to vector<256xf32>
    %216 = vector.shape_cast %215 : vector<256xf32> to vector<1x256xf32>
    %c2 = arith.constant 2 : index
    %c0_94 = arith.constant 0 : index
    %217 = vector.load %arg20[%c2, %c0_94] : memref<8x256xf32, #tpu.memory_space<vmem>>, vector<1x256xf32>
    tpu.vector_store %arg20[%c2, %c0_94], %216 {strides = array<i32>} : memref<8x256xf32, #tpu.memory_space<vmem>>, vector<1x256xf32>,
    %218 = vector.extract_strided_slice %199 {offsets = [0, 3], sizes = [16, 1], strides = [1, 1]} : vector<16x4xf32> to vector<16x1xf32>
    %219 = vector.broadcast %218 : vector<16x1xf32> to vector<16x256xf32>
    %220 = arith.mulf %219, %18 : vector<16x256xf32>
    %cst_95 = arith.constant dense<0.000000e+00> : vector<256xf32>
    %221 = vector.multi_reduction <add>, %220, %cst_95 [0] : vector<16x256xf32> to vector<256xf32>
    %222 = vector.shape_cast %221 : vector<256xf32> to vector<1x256xf32>
    %c3 = arith.constant 3 : index
    %c0_96 = arith.constant 0 : index
    %223 = vector.load %arg20[%c3, %c0_96] : memref<8x256xf32, #tpu.memory_space<vmem>>, vector<1x256xf32>
    tpu.vector_store %arg20[%c3, %c0_96], %222 {strides = array<i32>} : memref<8x256xf32, #tpu.memory_space<vmem>>, vector<1x256xf32>,
    %c1_97 = arith.constant 1 : index
    %c0_98 = arith.constant 0 : index
    %c0_99 = arith.constant 0 : index
    %224 = vector.load %arg0[%c1_97, %c0_98, %c0_99] : memref<2x17x64xf32, #tpu.memory_space<vmem>>, vector<1x17x64xf32>
    %225 = vector.shape_cast %224 : vector<1x17x64xf32> to vector<17x64xf32>
    %cst_100 = arith.constant dense<0.000000e+00> : vector<17x32xf32>
    %226 = tpu.matmul %225, %0, %cst_100 {dimension_numbers = #tpu.dot_dimension_numbers<[1], [0], [0], [1], [0, 0, 1, 1], [], []>} : vector<17x64xf32>, vector<64x32xf32>, vector<17x32xf32> -> vector<17x32xf32>
    %227 = arith.addf %226, %1 : vector<17x32xf32>
    %cst_101 = arith.constant dense<0.000000e+00> : vector<17xf32>
    %228 = vector.multi_reduction <add>, %227, %cst_101 [1] : vector<17x32xf32> to vector<17xf32>
    %229 = vector.shape_cast %228 : vector<17xf32> to vector<17x1xf32>
    %cst_102 = arith.constant 3.200000e+01 : f32
    %230 = vector.broadcast %cst_102 : f32 to vector<17x1xf32>
    %231 = arith.divf %229, %230 : vector<17x1xf32>
    %232 = vector.broadcast %231 : vector<17x1xf32> to vector<17x32xf32>
    %233 = arith.subf %227, %232 : vector<17x32xf32>
    %234 = arith.mulf %233, %233 : vector<17x32xf32>
    %cst_103 = arith.constant dense<0.000000e+00> : vector<17xf32>
    %235 = vector.multi_reduction <add>, %234, %cst_103 [1] : vector<17x32xf32> to vector<17xf32>
    %236 = vector.shape_cast %235 : vector<17xf32> to vector<17x1xf32>
    %cst_104 = arith.constant 3.200000e+01 : f32
    %237 = vector.broadcast %cst_104 : f32 to vector<17x1xf32>
    %238 = arith.divf %236, %237 : vector<17x1xf32>
    %239 = vector.broadcast %231 : vector<17x1xf32> to vector<17x32xf32>
    %240 = arith.subf %227, %239 : vector<17x32xf32>
    %cst_105 = arith.constant 9.99999997E-7 : f32
    %241 = vector.broadcast %cst_105 : f32 to vector<17x1xf32>
    %242 = arith.addf %238, %241 : vector<17x1xf32>
    %243 = math.rsqrt %242 : vector<17x1xf32>
    %244 = vector.broadcast %243 : vector<17x1xf32> to vector<17x32xf32>
    %245 = arith.mulf %240, %244 : vector<17x32xf32>
    %246 = vector.broadcast %2 : vector<1x32xf32> to vector<17x32xf32>
    %247 = arith.mulf %245, %246 : vector<17x32xf32>
    %248 = vector.broadcast %3 : vector<1x32xf32> to vector<17x32xf32>
    %249 = arith.addf %247, %248 : vector<17x32xf32>
    %cst_106 = arith.constant dense<0.000000e+00> : vector<17x96xf32>
    %250 = tpu.matmul %249, %4, %cst_106 {dimension_numbers = #tpu.dot_dimension_numbers<[1], [0], [0], [1], [0, 0, 1, 1], [], []>} : vector<17x32xf32>, vector<32x96xf32>, vector<17x96xf32> -> vector<17x96xf32>
    %251 = vector.broadcast %5 : vector<1x96xf32> to vector<17x96xf32>
    %252 = arith.addf %250, %251 : vector<17x96xf32>
    %cst_107 = arith.constant 0.000000e+00 : f32
    %253 = vector.broadcast %cst_107 : f32 to vector<17x32xf32>
    %254 = vector.extract_strided_slice %252 {offsets = [0, 0], sizes = [17, 8], strides = [1, 1]} : vector<17x96xf32> to vector<17x8xf32>
    %255 = vector.extract_strided_slice %252 {offsets = [0, 32], sizes = [17, 8], strides = [1, 1]} : vector<17x96xf32> to vector<17x8xf32>
    %256 = vector.extract_strided_slice %252 {offsets = [0, 64], sizes = [17, 8], strides = [1, 1]} : vector<17x96xf32> to vector<17x8xf32>
    %cst_108 = arith.constant dense<0.000000e+00> : vector<17x17xf32>
    %257 = tpu.matmul %254, %255, %cst_108 {dimension_numbers = #tpu.dot_dimension_numbers<[1], [1], [0], [0], [0, 0, 1, 0], [], []>} : vector<17x8xf32>, vector<17x8xf32>, vector<17x17xf32> -> vector<17x17xf32>
    %cst_109 = arith.constant 0.353553385 : f32
    %258 = vector.broadcast %cst_109 : f32 to vector<17x17xf32>
    %259 = arith.mulf %257, %258 : vector<17x17xf32>
    %cst_110 = arith.constant dense<0xFF800000> : vector<17xf32>
    %260 = vector.multi_reduction <maximumf>, %259, %cst_110 [1] : vector<17x17xf32> to vector<17xf32>
    %261 = vector.shape_cast %260 : vector<17xf32> to vector<17x1xf32>
    %262 = vector.broadcast %261 : vector<17x1xf32> to vector<17x17xf32>
    %263 = arith.subf %259, %262 : vector<17x17xf32>
    %264 = math.exp %263 : vector<17x17xf32>
    %cst_111 = arith.constant dense<0.000000e+00> : vector<17xf32>
    %265 = vector.multi_reduction <add>, %264, %cst_111 [1] : vector<17x17xf32> to vector<17xf32>
    %266 = vector.shape_cast %265 : vector<17xf32> to vector<17x1xf32>
    %267 = tpu.reciprocal %266 {approx = true} : vector<17x1xf32> -> vector<17x1xf32>
    %268 = vector.broadcast %267 : vector<17x1xf32> to vector<17x17xf32>
    %269 = arith.mulf %264, %268 : vector<17x17xf32>
    %cst_112 = arith.constant dense<0.000000e+00> : vector<17x8xf32>
    %270 = tpu.matmul %269, %256, %cst_112 {dimension_numbers = #tpu.dot_dimension_numbers<[1], [0], [0], [1], [0, 0, 1, 1], [], []>} : vector<17x17xf32>, vector<17x8xf32>, vector<17x8xf32> -> vector<17x8xf32>
    %271 = vector.extract_strided_slice %6 {offsets = [0, 0], sizes = [8, 32], strides = [1, 1]} : vector<32x32xf32> to vector<8x32xf32>
    %cst_113 = arith.constant dense<0.000000e+00> : vector<17x32xf32>
    %272 = tpu.matmul %270, %271, %cst_113 {dimension_numbers = #tpu.dot_dimension_numbers<[1], [0], [0], [1], [0, 0, 1, 1], [], []>} : vector<17x8xf32>, vector<8x32xf32>, vector<17x32xf32> -> vector<17x32xf32>
    %273 = arith.addf %253, %272 : vector<17x32xf32>
    %274 = vector.extract_strided_slice %252 {offsets = [0, 8], sizes = [17, 8], strides = [1, 1]} : vector<17x96xf32> to vector<17x8xf32>
    %275 = vector.extract_strided_slice %252 {offsets = [0, 40], sizes = [17, 8], strides = [1, 1]} : vector<17x96xf32> to vector<17x8xf32>
    %276 = vector.extract_strided_slice %252 {offsets = [0, 72], sizes = [17, 8], strides = [1, 1]} : vector<17x96xf32> to vector<17x8xf32>
    %cst_114 = arith.constant dense<0.000000e+00> : vector<17x17xf32>
    %277 = tpu.matmul %274, %275, %cst_114 {dimension_numbers = #tpu.dot_dimension_numbers<[1], [1], [0], [0], [0, 0, 1, 0], [], []>} : vector<17x8xf32>, vector<17x8xf32>, vector<17x17xf32> -> vector<17x17xf32>
    %cst_115 = arith.constant 0.353553385 : f32
    %278 = vector.broadcast %cst_115 : f32 to vector<17x17xf32>
    %279 = arith.mulf %277, %278 : vector<17x17xf32>
    %cst_116 = arith.constant dense<0xFF800000> : vector<17xf32>
    %280 = vector.multi_reduction <maximumf>, %279, %cst_116 [1] : vector<17x17xf32> to vector<17xf32>
    %281 = vector.shape_cast %280 : vector<17xf32> to vector<17x1xf32>
    %282 = vector.broadcast %281 : vector<17x1xf32> to vector<17x17xf32>
    %283 = arith.subf %279, %282 : vector<17x17xf32>
    %284 = math.exp %283 : vector<17x17xf32>
    %cst_117 = arith.constant dense<0.000000e+00> : vector<17xf32>
    %285 = vector.multi_reduction <add>, %284, %cst_117 [1] : vector<17x17xf32> to vector<17xf32>
    %286 = vector.shape_cast %285 : vector<17xf32> to vector<17x1xf32>
    %287 = tpu.reciprocal %286 {approx = true} : vector<17x1xf32> -> vector<17x1xf32>
    %288 = vector.broadcast %287 : vector<17x1xf32> to vector<17x17xf32>
    %289 = arith.mulf %284, %288 : vector<17x17xf32>
    %cst_118 = arith.constant dense<0.000000e+00> : vector<17x8xf32>
    %290 = tpu.matmul %289, %276, %cst_118 {dimension_numbers = #tpu.dot_dimension_numbers<[1], [0], [0], [1], [0, 0, 1, 1], [], []>} : vector<17x17xf32>, vector<17x8xf32>, vector<17x8xf32> -> vector<17x8xf32>
    %291 = vector.extract_strided_slice %6 {offsets = [8, 0], sizes = [8, 32], strides = [1, 1]} : vector<32x32xf32> to vector<8x32xf32>
    %cst_119 = arith.constant dense<0.000000e+00> : vector<17x32xf32>
    %292 = tpu.matmul %290, %291, %cst_119 {dimension_numbers = #tpu.dot_dimension_numbers<[1], [0], [0], [1], [0, 0, 1, 1], [], []>} : vector<17x8xf32>, vector<8x32xf32>, vector<17x32xf32> -> vector<17x32xf32>
    %293 = arith.addf %273, %292 : vector<17x32xf32>
    %294 = vector.extract_strided_slice %252 {offsets = [0, 16], sizes = [17, 8], strides = [1, 1]} : vector<17x96xf32> to vector<17x8xf32>
    %295 = vector.extract_strided_slice %252 {offsets = [0, 48], sizes = [17, 8], strides = [1, 1]} : vector<17x96xf32> to vector<17x8xf32>
    %296 = vector.extract_strided_slice %252 {offsets = [0, 80], sizes = [17, 8], strides = [1, 1]} : vector<17x96xf32> to vector<17x8xf32>
    %cst_120 = arith.constant dense<0.000000e+00> : vector<17x17xf32>
    %297 = tpu.matmul %294, %295, %cst_120 {dimension_numbers = #tpu.dot_dimension_numbers<[1], [1], [0], [0], [0, 0, 1, 0], [], []>} : vector<17x8xf32>, vector<17x8xf32>, vector<17x17xf32> -> vector<17x17xf32>
    %cst_121 = arith.constant 0.353553385 : f32
    %298 = vector.broadcast %cst_121 : f32 to vector<17x17xf32>
    %299 = arith.mulf %297, %298 : vector<17x17xf32>
    %cst_122 = arith.constant dense<0xFF800000> : vector<17xf32>
    %300 = vector.multi_reduction <maximumf>, %299, %cst_122 [1] : vector<17x17xf32> to vector<17xf32>
    %301 = vector.shape_cast %300 : vector<17xf32> to vector<17x1xf32>
    %302 = vector.broadcast %301 : vector<17x1xf32> to vector<17x17xf32>
    %303 = arith.subf %299, %302 : vector<17x17xf32>
    %304 = math.exp %303 : vector<17x17xf32>
    %cst_123 = arith.constant dense<0.000000e+00> : vector<17xf32>
    %305 = vector.multi_reduction <add>, %304, %cst_123 [1] : vector<17x17xf32> to vector<17xf32>
    %306 = vector.shape_cast %305 : vector<17xf32> to vector<17x1xf32>
    %307 = tpu.reciprocal %306 {approx = true} : vector<17x1xf32> -> vector<17x1xf32>
    %308 = vector.broadcast %307 : vector<17x1xf32> to vector<17x17xf32>
    %309 = arith.mulf %304, %308 : vector<17x17xf32>
    %cst_124 = arith.constant dense<0.000000e+00> : vector<17x8xf32>
    %310 = tpu.matmul %309, %296, %cst_124 {dimension_numbers = #tpu.dot_dimension_numbers<[1], [0], [0], [1], [0, 0, 1, 1], [], []>} : vector<17x17xf32>, vector<17x8xf32>, vector<17x8xf32> -> vector<17x8xf32>
    %311 = vector.extract_strided_slice %6 {offsets = [16, 0], sizes = [8, 32], strides = [1, 1]} : vector<32x32xf32> to vector<8x32xf32>
    %cst_125 = arith.constant dense<0.000000e+00> : vector<17x32xf32>
    %312 = tpu.matmul %310, %311, %cst_125 {dimension_numbers = #tpu.dot_dimension_numbers<[1], [0], [0], [1], [0, 0, 1, 1], [], []>} : vector<17x8xf32>, vector<8x32xf32>, vector<17x32xf32> -> vector<17x32xf32>
    %313 = arith.addf %293, %312 : vector<17x32xf32>
    %314 = vector.extract_strided_slice %252 {offsets = [0, 24], sizes = [17, 8], strides = [1, 1]} : vector<17x96xf32> to vector<17x8xf32>
    %315 = vector.extract_strided_slice %252 {offsets = [0, 56], sizes = [17, 8], strides = [1, 1]} : vector<17x96xf32> to vector<17x8xf32>
    %316 = vector.extract_strided_slice %252 {offsets = [0, 88], sizes = [17, 8], strides = [1, 1]} : vector<17x96xf32> to vector<17x8xf32>
    %cst_126 = arith.constant dense<0.000000e+00> : vector<17x17xf32>
    %317 = tpu.matmul %314, %315, %cst_126 {dimension_numbers = #tpu.dot_dimension_numbers<[1], [1], [0], [0], [0, 0, 1, 0], [], []>} : vector<17x8xf32>, vector<17x8xf32>, vector<17x17xf32> -> vector<17x17xf32>
    %cst_127 = arith.constant 0.353553385 : f32
    %318 = vector.broadcast %cst_127 : f32 to vector<17x17xf32>
    %319 = arith.mulf %317, %318 : vector<17x17xf32>
    %cst_128 = arith.constant dense<0xFF800000> : vector<17xf32>
    %320 = vector.multi_reduction <maximumf>, %319, %cst_128 [1] : vector<17x17xf32> to vector<17xf32>
    %321 = vector.shape_cast %320 : vector<17xf32> to vector<17x1xf32>
    %322 = vector.broadcast %321 : vector<17x1xf32> to vector<17x17xf32>
    %323 = arith.subf %319, %322 : vector<17x17xf32>
    %324 = math.exp %323 : vector<17x17xf32>
    %cst_129 = arith.constant dense<0.000000e+00> : vector<17xf32>
    %325 = vector.multi_reduction <add>, %324, %cst_129 [1] : vector<17x17xf32> to vector<17xf32>
    %326 = vector.shape_cast %325 : vector<17xf32> to vector<17x1xf32>
    %327 = tpu.reciprocal %326 {approx = true} : vector<17x1xf32> -> vector<17x1xf32>
    %328 = vector.broadcast %327 : vector<17x1xf32> to vector<17x17xf32>
    %329 = arith.mulf %324, %328 : vector<17x17xf32>
    %cst_130 = arith.constant dense<0.000000e+00> : vector<17x8xf32>
    %330 = tpu.matmul %329, %316, %cst_130 {dimension_numbers = #tpu.dot_dimension_numbers<[1], [0], [0], [1], [0, 0, 1, 1], [], []>} : vector<17x17xf32>, vector<17x8xf32>, vector<17x8xf32> -> vector<17x8xf32>
    %331 = vector.extract_strided_slice %6 {offsets = [24, 0], sizes = [8, 32], strides = [1, 1]} : vector<32x32xf32> to vector<8x32xf32>
    %cst_131 = arith.constant dense<0.000000e+00> : vector<17x32xf32>
    %332 = tpu.matmul %330, %331, %cst_131 {dimension_numbers = #tpu.dot_dimension_numbers<[1], [0], [0], [1], [0, 0, 1, 1], [], []>} : vector<17x8xf32>, vector<8x32xf32>, vector<17x32xf32> -> vector<17x32xf32>
    %333 = arith.addf %313, %332 : vector<17x32xf32>
    %334 = arith.addf %227, %333 : vector<17x32xf32>
    %335 = vector.broadcast %7 : vector<1x32xf32> to vector<17x32xf32>
    %336 = arith.addf %334, %335 : vector<17x32xf32>
    %cst_132 = arith.constant dense<0.000000e+00> : vector<17xf32>
    %337 = vector.multi_reduction <add>, %336, %cst_132 [1] : vector<17x32xf32> to vector<17xf32>
    %338 = vector.shape_cast %337 : vector<17xf32> to vector<17x1xf32>
    %cst_133 = arith.constant 3.200000e+01 : f32
    %339 = vector.broadcast %cst_133 : f32 to vector<17x1xf32>
    %340 = arith.divf %338, %339 : vector<17x1xf32>
    %341 = vector.broadcast %340 : vector<17x1xf32> to vector<17x32xf32>
    %342 = arith.subf %336, %341 : vector<17x32xf32>
    %343 = arith.mulf %342, %342 : vector<17x32xf32>
    %cst_134 = arith.constant dense<0.000000e+00> : vector<17xf32>
    %344 = vector.multi_reduction <add>, %343, %cst_134 [1] : vector<17x32xf32> to vector<17xf32>
    %345 = vector.shape_cast %344 : vector<17xf32> to vector<17x1xf32>
    %cst_135 = arith.constant 3.200000e+01 : f32
    %346 = vector.broadcast %cst_135 : f32 to vector<17x1xf32>
    %347 = arith.divf %345, %346 : vector<17x1xf32>
    %348 = vector.broadcast %340 : vector<17x1xf32> to vector<17x32xf32>
    %349 = arith.subf %336, %348 : vector<17x32xf32>
    %cst_136 = arith.constant 9.99999997E-7 : f32
    %350 = vector.broadcast %cst_136 : f32 to vector<17x1xf32>
    %351 = arith.addf %347, %350 : vector<17x1xf32>
    %352 = math.rsqrt %351 : vector<17x1xf32>
    %353 = vector.broadcast %352 : vector<17x1xf32> to vector<17x32xf32>
    %354 = arith.mulf %349, %353 : vector<17x32xf32>
    %355 = vector.broadcast %8 : vector<1x32xf32> to vector<17x32xf32>
    %356 = arith.mulf %354, %355 : vector<17x32xf32>
    %357 = vector.broadcast %9 : vector<1x32xf32> to vector<17x32xf32>
    %358 = arith.addf %356, %357 : vector<17x32xf32>
    %cst_137 = arith.constant dense<0.000000e+00> : vector<17x64xf32>
    %359 = tpu.matmul %358, %10, %cst_137 {dimension_numbers = #tpu.dot_dimension_numbers<[1], [0], [0], [1], [0, 0, 1, 1], [], []>} : vector<17x32xf32>, vector<32x64xf32>, vector<17x64xf32> -> vector<17x64xf32>
    %360 = vector.broadcast %11 : vector<1x64xf32> to vector<17x64xf32>
    %361 = arith.addf %359, %360 : vector<17x64xf32>
    %cst_138 = arith.constant 5.000000e-01 : f32
    %362 = vector.broadcast %cst_138 : f32 to vector<17x64xf32>
    %363 = arith.mulf %362, %361 : vector<17x64xf32>
    %cst_139 = arith.constant 4.471500e-02 : f32
    %364 = vector.broadcast %cst_139 : f32 to vector<17x64xf32>
    %365 = arith.mulf %364, %361 : vector<17x64xf32>
    %366 = arith.mulf %365, %361 : vector<17x64xf32>
    %367 = arith.mulf %366, %361 : vector<17x64xf32>
    %368 = arith.addf %361, %367 : vector<17x64xf32>
    %cst_140 = arith.constant 0.797884583 : f32
    %369 = vector.broadcast %cst_140 : f32 to vector<17x64xf32>
    %370 = arith.mulf %369, %368 : vector<17x64xf32>
    %371 = math.tanh %370 : vector<17x64xf32>
    %cst_141 = arith.constant 1.000000e+00 : f32
    %372 = vector.broadcast %cst_141 : f32 to vector<17x64xf32>
    %373 = arith.addf %372, %371 : vector<17x64xf32>
    %374 = arith.mulf %363, %373 : vector<17x64xf32>
    %cst_142 = arith.constant dense<0.000000e+00> : vector<17x32xf32>
    %375 = tpu.matmul %374, %12, %cst_142 {dimension_numbers = #tpu.dot_dimension_numbers<[1], [0], [0], [1], [0, 0, 1, 1], [], []>} : vector<17x64xf32>, vector<64x32xf32>, vector<17x32xf32> -> vector<17x32xf32>
    %376 = vector.broadcast %13 : vector<1x32xf32> to vector<17x32xf32>
    %377 = arith.addf %375, %376 : vector<17x32xf32>
    %378 = arith.addf %336, %377 : vector<17x32xf32>
    %379 = vector.extract_strided_slice %378 {offsets = [1, 0], sizes = [16, 32], strides = [1, 1]} : vector<17x32xf32> to vector<16x32xf32>
    %cst_143 = arith.constant dense<0.000000e+00> : vector<16xf32>
    %380 = vector.multi_reduction <add>, %379, %cst_143 [1] : vector<16x32xf32> to vector<16xf32>
    %381 = vector.shape_cast %380 : vector<16xf32> to vector<16x1xf32>
    %cst_144 = arith.constant 3.200000e+01 : f32
    %382 = vector.broadcast %cst_144 : f32 to vector<16x1xf32>
    %383 = arith.divf %381, %382 : vector<16x1xf32>
    %384 = vector.broadcast %383 : vector<16x1xf32> to vector<16x32xf32>
    %385 = arith.subf %379, %384 : vector<16x32xf32>
    %386 = arith.mulf %385, %385 : vector<16x32xf32>
    %cst_145 = arith.constant dense<0.000000e+00> : vector<16xf32>
    %387 = vector.multi_reduction <add>, %386, %cst_145 [1] : vector<16x32xf32> to vector<16xf32>
    %388 = vector.shape_cast %387 : vector<16xf32> to vector<16x1xf32>
    %cst_146 = arith.constant 3.200000e+01 : f32
    %389 = vector.broadcast %cst_146 : f32 to vector<16x1xf32>
    %390 = arith.divf %388, %389 : vector<16x1xf32>
    %391 = vector.broadcast %383 : vector<16x1xf32> to vector<16x32xf32>
    %392 = arith.subf %379, %391 : vector<16x32xf32>
    %cst_147 = arith.constant 9.99999974E-6 : f32
    %393 = vector.broadcast %cst_147 : f32 to vector<16x1xf32>
    %394 = arith.addf %390, %393 : vector<16x1xf32>
    %395 = math.rsqrt %394 : vector<16x1xf32>
    %396 = vector.broadcast %395 : vector<16x1xf32> to vector<16x32xf32>
    %397 = arith.mulf %392, %396 : vector<16x32xf32>
    %398 = vector.broadcast %14 : vector<1x32xf32> to vector<16x32xf32>
    %399 = arith.mulf %397, %398 : vector<16x32xf32>
    %400 = vector.broadcast %15 : vector<1x32xf32> to vector<16x32xf32>
    %401 = arith.addf %399, %400 : vector<16x32xf32>
    %cst_148 = arith.constant dense<0.000000e+00> : vector<16x4xf32>
    %402 = tpu.matmul %401, %16, %cst_148 {dimension_numbers = #tpu.dot_dimension_numbers<[1], [0], [0], [1], [0, 0, 1, 1], [], []>} : vector<16x32xf32>, vector<32x4xf32>, vector<16x4xf32> -> vector<16x4xf32>
    %403 = vector.broadcast %17 : vector<1x4xf32> to vector<16x4xf32>
    %404 = arith.addf %402, %403 : vector<16x4xf32>
    %405 = vector.extract_strided_slice %404 {offsets = [0, 0], sizes = [16, 1], strides = [1, 1]} : vector<16x4xf32> to vector<16x1xf32>
    %406 = vector.broadcast %405 : vector<16x1xf32> to vector<16x256xf32>
    %407 = arith.mulf %406, %18 : vector<16x256xf32>
    %cst_149 = arith.constant dense<0.000000e+00> : vector<256xf32>
    %408 = vector.multi_reduction <add>, %407, %cst_149 [0] : vector<16x256xf32> to vector<256xf32>
    %409 = vector.shape_cast %408 : vector<256xf32> to vector<1x256xf32>
    %c4 = arith.constant 4 : index
    %c0_150 = arith.constant 0 : index
    %410 = vector.load %arg20[%c4, %c0_150] : memref<8x256xf32, #tpu.memory_space<vmem>>, vector<1x256xf32>
    tpu.vector_store %arg20[%c4, %c0_150], %409 {strides = array<i32>} : memref<8x256xf32, #tpu.memory_space<vmem>>, vector<1x256xf32>,
    %411 = vector.extract_strided_slice %404 {offsets = [0, 1], sizes = [16, 1], strides = [1, 1]} : vector<16x4xf32> to vector<16x1xf32>
    %412 = vector.broadcast %411 : vector<16x1xf32> to vector<16x256xf32>
    %413 = arith.mulf %412, %18 : vector<16x256xf32>
    %cst_151 = arith.constant dense<0.000000e+00> : vector<256xf32>
    %414 = vector.multi_reduction <add>, %413, %cst_151 [0] : vector<16x256xf32> to vector<256xf32>
    %415 = vector.shape_cast %414 : vector<256xf32> to vector<1x256xf32>
    %c5 = arith.constant 5 : index
    %c0_152 = arith.constant 0 : index
    %416 = vector.load %arg20[%c5, %c0_152] : memref<8x256xf32, #tpu.memory_space<vmem>>, vector<1x256xf32>
    tpu.vector_store %arg20[%c5, %c0_152], %415 {strides = array<i32>} : memref<8x256xf32, #tpu.memory_space<vmem>>, vector<1x256xf32>,
    %417 = vector.extract_strided_slice %404 {offsets = [0, 2], sizes = [16, 1], strides = [1, 1]} : vector<16x4xf32> to vector<16x1xf32>
    %418 = vector.broadcast %417 : vector<16x1xf32> to vector<16x256xf32>
    %419 = arith.mulf %418, %18 : vector<16x256xf32>
    %cst_153 = arith.constant dense<0.000000e+00> : vector<256xf32>
    %420 = vector.multi_reduction <add>, %419, %cst_153 [0] : vector<16x256xf32> to vector<256xf32>
    %421 = vector.shape_cast %420 : vector<256xf32> to vector<1x256xf32>
    %c6 = arith.constant 6 : index
    %c0_154 = arith.constant 0 : index
    %422 = vector.load %arg20[%c6, %c0_154] : memref<8x256xf32, #tpu.memory_space<vmem>>, vector<1x256xf32>
    tpu.vector_store %arg20[%c6, %c0_154], %421 {strides = array<i32>} : memref<8x256xf32, #tpu.memory_space<vmem>>, vector<1x256xf32>,
    %423 = vector.extract_strided_slice %404 {offsets = [0, 3], sizes = [16, 1], strides = [1, 1]} : vector<16x4xf32> to vector<16x1xf32>
    %424 = vector.broadcast %423 : vector<16x1xf32> to vector<16x256xf32>
    %425 = arith.mulf %424, %18 : vector<16x256xf32>
    %cst_155 = arith.constant dense<0.000000e+00> : vector<256xf32>
    %426 = vector.multi_reduction <add>, %425, %cst_155 [0] : vector<16x256xf32> to vector<256xf32>
    %427 = vector.shape_cast %426 : vector<256xf32> to vector<1x256xf32>
    %c7 = arith.constant 7 : index
    %c0_156 = arith.constant 0 : index
    %428 = vector.load %arg20[%c7, %c0_156] : memref<8x256xf32, #tpu.memory_space<vmem>>, vector<1x256xf32>
    tpu.vector_store %arg20[%c7, %c0_156], %427 {strides = array<i32>} : memref<8x256xf32, #tpu.memory_space<vmem>>, vector<1x256xf32>,
    return
  }
}

</mosaic_0001>

<llo_original>
// kernel: open_canopy_forward.1
$region0: #{open_canopy_forward.1}
  #allocation0 [shape = 'u32[]', space=smem, size = 0x4, offset = 0x4, fixed_abs, tag = 'smem constant byte address 0x4 - core index']
  #allocation1 [shape = 'u32[72,128]{1,0:T(1,128)}', space=vmem, size = 0x9000, scoped, tag = 'internal scratch']
  %s0 = inlined_call_operand.vmem [shape: f32[2,17,64], index: 0, kind: input, shape index: {}]
  %s1 = inlined_call_operand.vmem [shape: f32[64,32], index: 1, kind: input, shape index: {}]
  %s2 = inlined_call_operand.vmem [shape: f32[17,32], index: 2, kind: input, shape index: {}]
  %s3 = inlined_call_operand.vmem [shape: f32[1,32], index: 3, kind: input, shape index: {}]
  %s4 = inlined_call_operand.vmem [shape: f32[1,32], index: 4, kind: input, shape index: {}]
  %s5 = inlined_call_operand.vmem [shape: f32[32,96], index: 5, kind: input, shape index: {}]
  %s6 = inlined_call_operand.vmem [shape: f32[1,96], index: 6, kind: input, shape index: {}]
  %s7 = inlined_call_operand.vmem [shape: f32[32,32], index: 7, kind: input, shape index: {}]
  %s8 = inlined_call_operand.vmem [shape: f32[1,32], index: 8, kind: input, shape index: {}]
  %s9 = inlined_call_operand.vmem [shape: f32[1,32], index: 9, kind: input, shape index: {}]
  %s10 = inlined_call_operand.vmem [shape: f32[1,32], index: 10, kind: input, shape index: {}]
  %s11 = inlined_call_operand.vmem [shape: f32[32,64], index: 11, kind: input, shape index: {}]
  %s12 = inlined_call_operand.vmem [shape: f32[1,64], index: 12, kind: input, shape index: {}]
  %s13 = inlined_call_operand.vmem [shape: f32[64,32], index: 13, kind: input, shape index: {}]
  %s14 = inlined_call_operand.vmem [shape: f32[1,32], index: 14, kind: input, shape index: {}]
  %s15 = inlined_call_operand.vmem [shape: f32[1,32], index: 15, kind: input, shape index: {}]
  %s16 = inlined_call_operand.vmem [shape: f32[1,32], index: 16, kind: input, shape index: {}]
  %s17 = inlined_call_operand.vmem [shape: f32[32,4], index: 17, kind: input, shape index: {}]
  %s18 = inlined_call_operand.vmem [shape: f32[1,4], index: 18, kind: input, shape index: {}]
  %s19 = inlined_call_operand.vmem [shape: f32[16,256], index: 19, kind: input, shape index: {}]
  %s20 = inlined_call_operand.vmem [shape: f32[8,256], index: 20, kind: output, shape index: {}]
  %s21 = sld [smem:[#allocation0]]
  $region90: #{open_canopy_forward.1} parent=0
    _
  %s23 = ssub.s32 1, %s21
  %s24 = scalar_select 0, %s23, %s21
  // Predicated region
  $region2: #{open_canopy_forward.1} parent=0 // pred_check
    _
  $region3: #{open_canopy_forward.1} parent=0 // pred_check_branch
    %26 = sbr.rel (0) target = $region5
  $region4: #{open_canopy_forward.1} parent=0 // pred_region
    _
  $region5: #{open_canopy_forward.1} parent=0 // pred_fallthru
    _
  // Predicated region
  $region6: #{open_canopy_forward.1} parent=0 // pred_check
    _
  $region7: #{open_canopy_forward.1} parent=0 // pred_check_branch
    %28 = sbr.rel (0) target = $region9
  $region8: #{open_canopy_forward.1} parent=0 // pred_region
    _
  $region9: #{open_canopy_forward.1} parent=0 // pred_fallthru
    _
  // Predicated region
  $region10: #{open_canopy_forward.1} parent=0 // pred_check
    _
  $region11: #{open_canopy_forward.1} parent=0 // pred_check_branch
    %30 = sbr.rel (0) target = $region13
  $region12: #{open_canopy_forward.1} parent=0 // pred_region
    _
  $region13: #{open_canopy_forward.1} parent=0 // pred_fallthru
    _
  // Predicated region
  $region14: #{open_canopy_forward.1} parent=0 // pred_check
    _
  $region15: #{open_canopy_forward.1} parent=0 // pred_check_branch
    %32 = sbr.rel (0) target = $region17
  $region16: #{open_canopy_forward.1} parent=0 // pred_region
    _
  $region17: #{open_canopy_forward.1} parent=0 // pred_fallthru
    _
  // Predicated region
  $region18: #{open_canopy_forward.1} parent=0 // pred_check
    _
  $region19: #{open_canopy_forward.1} parent=0 // pred_check_branch
    %34 = sbr.rel (0) target = $region21
  $region20: #{open_canopy_forward.1} parent=0 // pred_region
    _
  $region21: #{open_canopy_forward.1} parent=0 // pred_fallthru
    _
  // Predicated region
  $region22: #{open_canopy_forward.1} parent=0 // pred_check
    _
  $region23: #{open_canopy_forward.1} parent=0 // pred_check_branch
    %36 = sbr.rel (0) target = $region25
  $region24: #{open_canopy_forward.1} parent=0 // pred_region
    _
  $region25: #{open_canopy_forward.1} parent=0 // pred_fallthru
    _
  // Predicated region
  $region26: #{open_canopy_forward.1} parent=0 // pred_check
    _
  $region27: #{open_canopy_forward.1} parent=0 // pred_check_branch
    %38 = sbr.rel (0) target = $region29
  $region28: #{open_canopy_forward.1} parent=0 // pred_region
    _
  $region29: #{open_canopy_forward.1} parent=0 // pred_fallthru
    _
  // Predicated region
  $region30: #{open_canopy_forward.1} parent=0 // pred_check
    _
  $region31: #{open_canopy_forward.1} parent=0 // pred_check_branch
    %40 = sbr.rel (0) target = $region33
  $region32: #{open_canopy_forward.1} parent=0 // pred_region
    _
  $region33: #{open_canopy_forward.1} parent=0 // pred_fallthru
    _
  // Predicated region
  $region34: #{open_canopy_forward.1} parent=0 // pred_check
    _
  $region35: #{open_canopy_forward.1} parent=0 // pred_check_branch
    %42 = sbr.rel (0) target = $region37
  $region36: #{open_canopy_forward.1} parent=0 // pred_region
    _
  $region37: #{open_canopy_forward.1} parent=0 // pred_fallthru
    _
  // Predicated region
  $region38: #{open_canopy_forward.1} parent=0 // pred_check
    _
  $region39: #{open_canopy_forward.1} parent=0 // pred_check_branch
    %44 = sbr.rel (0) target = $region41
  $region40: #{open_canopy_forward.1} parent=0 // pred_region
    _
  $region41: #{open_canopy_forward.1} parent=0 // pred_fallthru
    _
  // Predicated region
  $region42: #{open_canopy_forward.1} parent=0 // pred_check
    _
  $region43: #{open_canopy_forward.1} parent=0 // pred_check_branch
    %46 = sbr.rel (0) target = $region45
  $region44: #{open_canopy_forward.1} parent=0 // pred_region
    _
  $region45: #{open_canopy_forward.1} parent=0 // pred_fallthru
    _
  // Predicated region
  $region46: #{open_canopy_forward.1} parent=0 // pred_check
    _
  $region47: #{open_canopy_forward.1} parent=0 // pred_check_branch
    %48 = sbr.rel (0) target = $region49
  $region48: #{open_canopy_forward.1} parent=0 // pred_region
    _
  $region49: #{open_canopy_forward.1} parent=0 // pred_fallthru
    _
  // Predicated region
  $region50: #{open_canopy_forward.1} parent=0 // pred_check
    _
  $region51: #{open_canopy_forward.1} parent=0 // pred_check_branch
    %50 = sbr.rel (0) target = $region53
  $region52: #{open_canopy_forward.1} parent=0 // pred_region
    _
  $region53: #{open_canopy_forward.1} parent=0 // pred_fallthru
    _
  // Predicated region
  $region54: #{open_canopy_forward.1} parent=0 // pred_check
    _
  $region55: #{open_canopy_forward.1} parent=0 // pred_check_branch
    %52 = sbr.rel (0) target = $region57
  $region56: #{open_canopy_forward.1} parent=0 // pred_region
    _
  $region57: #{open_canopy_forward.1} parent=0 // pred_fallthru
    _
  // Predicated region
  $region58: #{open_canopy_forward.1} parent=0 // pred_check
    _
  $region59: #{open_canopy_forward.1} parent=0 // pred_check_branch
    %54 = sbr.rel (0) target = $region61
  $region60: #{open_canopy_forward.1} parent=0 // pred_region
    _
  $region61: #{open_canopy_forward.1} parent=0 // pred_fallthru
    _
  // Predicated region
  $region62: #{open_canopy_forward.1} parent=0 // pred_check
    _
  $region63: #{open_canopy_forward.1} parent=0 // pred_check_branch
    %56 = sbr.rel (0) target = $region65
  $region64: #{open_canopy_forward.1} parent=0 // pred_region
    _
  $region65: #{open_canopy_forward.1} parent=0 // pred_fallthru
    _
  // Predicated region
  $region66: #{open_canopy_forward.1} parent=0 // pred_check
    _
  $region67: #{open_canopy_forward.1} parent=0 // pred_check_branch
    %58 = sbr.rel (0) target = $region69
  $region68: #{open_canopy_forward.1} parent=0 // pred_region
    _
  $region69: #{open_canopy_forward.1} parent=0 // pred_fallthru
    _
  // Predicated region
  $region70: #{open_canopy_forward.1} parent=0 // pred_check
    _
  $region71: #{open_canopy_forward.1} parent=0 // pred_check_branch
    %60 = sbr.rel (0) target = $region73
  $region72: #{open_canopy_forward.1} parent=0 // pred_region
    _
  $region73: #{open_canopy_forward.1} parent=0 // pred_fallthru
    _
  // Predicated region
  $region74: #{open_canopy_forward.1} parent=0 // pred_check
    _
  $region75: #{open_canopy_forward.1} parent=0 // pred_check_branch
    %62 = sbr.rel (0) target = $region77
  $region76: #{open_canopy_forward.1} parent=0 // pred_region
    _
  $region77: #{open_canopy_forward.1} parent=0 // pred_fallthru
    _
  // Predicated region
  $region78: #{open_canopy_forward.1} parent=0 // pred_check
    _
  $region79: #{open_canopy_forward.1} parent=0 // pred_check_branch
    %64 = sbr.rel (0) target = $region81
  $region80: #{open_canopy_forward.1} parent=0 // pred_region
    _
  $region81: #{open_canopy_forward.1} parent=0 // pred_fallthru
    _
  %v65 = vld [vmem:[%s1] sm:$0xff]
  %v66 = vld [vmem:[%s1 + $0x8] sm:$0xff]
  %v67 = vld [vmem:[%s1 + $0x10] sm:$0xff]
  %v68 = vld [vmem:[%s1 + $0x18] sm:$0xff]
  %v69 = vld [vmem:[%s1 + $0x20] sm:$0xff]
  %v70 = vld [vmem:[%s1 + $0x28] sm:$0xff]
  %v71 = vld [vmem:[%s1 + $0x30] sm:$0xff]
  %v72 = vld [vmem:[%s1 + $0x38] sm:$0xff]
  %v73 = vld [vmem:[%s2] sm:$0xff]
  %v74 = vld [vmem:[%s2 + $0x8] sm:$0xff]
  %v75 = vld [vmem:[%s2 + $0x10] sm:$0x1]
  %v76 = vld [vmem:[%s3] sm:$0x1]
  %v77 = vld [vmem:[%s4] sm:$0x1]
  %v78 = vld [vmem:[%s5] sm:$0xff]
  %v79 = vld [vmem:[%s5 + $0x8] sm:$0xff]
  %v80 = vld [vmem:[%s5 + $0x10] sm:$0xff]
  %v81 = vld [vmem:[%s5 + $0x18] sm:$0xff]
  %v82 = vld [vmem:[%s6] sm:$0x1]
  %v83 = vld [vmem:[%s7] sm:$0xff]
  %v84 = vld [vmem:[%s7 + $0x8] sm:$0xff]
  %v85 = vld [vmem:[%s7 + $0x10] sm:$0xff]
  %v86 = vld [vmem:[%s7 + $0x18] sm:$0xff]
  %v87 = vld [vmem:[%s8] sm:$0x1]
  %v88 = vld [vmem:[%s9] sm:$0x1]
  %v89 = vld [vmem:[%s10] sm:$0x1]
  %v90 = vld [vmem:[%s11] sm:$0xff]
  %v91 = vld [vmem:[%s11 + $0x8] sm:$0xff]
  %v92 = vld [vmem:[%s11 + $0x10] sm:$0xff]
  %v93 = vld [vmem:[%s11 + $0x18] sm:$0xff]
  %v94 = vld [vmem:[%s12] sm:$0x1]
  %v95 = vld [vmem:[%s13] sm:$0xff]
  %v96 = vld [vmem:[%s13 + $0x8] sm:$0xff]
  %v97 = vld [vmem:[%s13 + $0x10] sm:$0xff]
  %v98 = vld [vmem:[%s13 + $0x18] sm:$0xff]
  %v99 = vld [vmem:[%s13 + $0x20] sm:$0xff]
  %v100 = vld [vmem:[%s13 + $0x28] sm:$0xff]
  %v101 = vld [vmem:[%s13 + $0x30] sm:$0xff]
  %v102 = vld [vmem:[%s13 + $0x38] sm:$0xff]
  %v103 = vld [vmem:[%s14] sm:$0x1]
  %v104 = vld [vmem:[%s15] sm:$0x1]
  %v105 = vld [vmem:[%s16] sm:$0x1]
  %v106 = vld [vmem:[%s17] sm:$0xff]
  %v107 = vld [vmem:[%s17 + $0x8] sm:$0xff]
  %v108 = vld [vmem:[%s17 + $0x10] sm:$0xff]
  %v109 = vld [vmem:[%s17 + $0x18] sm:$0xff]
  %v110 = vld [vmem:[%s18] sm:$0x1]
  %v111 = vld [vmem:[%s19] sm:$0xff]
  %v112 = vld [vmem:[%s19 + $0x8] sm:$0xff]
  %v113 = vld [vmem:[%s19 + $0x10] sm:$0xff]
  %v114 = vld [vmem:[%s19 + $0x18] sm:$0xff]
  %v115 = vld [vmem:[%s0] sm:$0xff]
  %v116 = vld [vmem:[%s0 + $0x8] sm:$0xff]
  %v117 = vld [vmem:[%s0 + $0x10] sm:$0x1]
  %vm118 = vcmask 523264
  %v120 = vsel %vm118, %v115, 0
  %v123 = vsel %vm118, %v116, 0
  %v126 = vsel %vm118, %v117, 0
  %128 = vmatpush.msra.mxu0 0.0
  %129 = vmatpush.msra.mxu0 0.0
  %130 = vmatpush.msra.mxu0 0.0
  %131 = vmatpush.msra.mxu0 0.0
  %132 = vmatpush.msra.mxu0 0.0
  %133 = vmatpush.msra.mxu0 0.0
  %134 = vmatpush.msra.mxu0 0.0
  %135 = vmatpush.msra.mxu0 0.0
  %136 = vmatpush.msra.mxu0 %v72
  %137 = vmatpush.msra.mxu0 %v71
  %138 = vmatpush.msra.mxu0 %v70
  %139 = vmatpush.msra.mxu0 %v69
  %140 = vmatpush.msra.mxu0 %v68
  %141 = vmatpush.msra.mxu0 %v67
  %142 = vmatpush.msra.mxu0 %v66
  %143 = vmatpush.msra.mxu0 %v65
  %144 = vmatmul.f32.gmra.mxu0 %v120
  %v145 = vpop.f32.mrf.mxu0
  %v146 = vadd.f32 %v73, %v145
  %147 = vmatmul.f32.gmra.mxu0 %v123
  %v148 = vpop.f32.mrf.mxu0
  %v149 = vadd.f32 %v74, %v148
  %150 = vmatmul.f32.gmra.mxu0 %v126
  %v151 = vpop.f32.mrf.mxu0
  %v152 = vadd.f32 %v75, %v151
  %153 = vdwg.mxu0
  %vm154 = vcmask 261120
  %v155 = vsel %vm154, %v146, 0.0
  %156 = vadd.xlane.f32.xlu0 %v155
  %v157 = vpop.xlane.xlu0 %156
  %v158 = vsel %vm154, %v149, 0.0
  %159 = vadd.xlane.f32.xlu0 %v158
  %v160 = vpop.xlane.xlu0 %159
  %vm161 = vcmask 253952
  %v162 = vsel %vm161, %v152, 0.0
  %163 = vadd.xlane.f32.xlu0 %v162
  %v164 = vpop.xlane.xlu0 %163
  %v165 = vrcp.pop 32.0
  %v166 = vmul.f32 32.0, %v165
  %v167 = vsub.f32 1.0, %v166
  %v168 = vmul.f32 %v165, %v167
  %v169 = vadd.f32 %v165, %v168
  %vm170 = vweird.f32 %v165
  %v171 = vsel %vm170, %v165, %v169
  %v172 = vmul.f32 %v157, %v171
  %v173 = vmul.f32 %v160, %v171
  %v174 = vmul.f32 %v164, %v171
  %v175 = vsub.f32 %v146, %v172
  %v176 = vsub.f32 %v149, %v173
  %v177 = vsub.f32 %v152, %v174
  %v178 = vmul.f32 %v175, %v175
  %v179 = vmul.f32 %v176, %v176
  %v180 = vmul.f32 %v177, %v177
  %v181 = vsel %vm154, %v178, 0.0
  %182 = vadd.xlane.f32.xlu0 %v181
  %v183 = vpop.xlane.xlu0 %182
  %v184 = vsel %vm154, %v179, 0.0
  %185 = vadd.xlane.f32.xlu0 %v184
  %v186 = vpop.xlane.xlu0 %185
  %v187 = vsel %vm161, %v180, 0.0
  %188 = vadd.xlane.f32.xlu0 %v187
  %v189 = vpop.xlane.xlu0 %188
  %v190 = vmul.f32 %v183, %v171
  %v191 = vmul.f32 %v186, %v171
  %v192 = vmul.f32 %v189, %v171
  %v193 = vadd.f32 %v190, 1e-06
  %v194 = vadd.f32 %v191, 1e-06
  %v195 = vadd.f32 %v192, 1e-06
  %v196 = vrsqrt.pop %v193
  %v197 = vmul.f32 %v196, %v193
  %v198 = vmul.f32 %v197, %v196
  %v199 = vmul.f32 0.5, %v198
  %v200 = vsub.f32 1.5, %v199
  %v201 = vmul.f32 %v196, %v200
  %vm202 = vweird.f32 %v193
  %vm203 = vweird.f32 %v196
  %vm204 = vmor %vm202, %vm203
  %v205 = vsel %vm204, %v196, %v201
  %v206 = vrsqrt.pop %v194
  %v207 = vmul.f32 %v206, %v194
  %v208 = vmul.f32 %v207, %v206
  %v209 = vmul.f32 0.5, %v208
  %v210 = vsub.f32 1.5, %v209
  %v211 = vmul.f32 %v206, %v210
  %vm212 = vweird.f32 %v194
  %vm213 = vweird.f32 %v206
  %vm214 = vmor %vm212, %vm213
  %v215 = vsel %vm214, %v206, %v211
  %v216 = vrsqrt.pop %v195
  %v217 = vmul.f32 %v216, %v195
  %v218 = vmul.f32 %v217, %v216
  %v219 = vmul.f32 0.5, %v218
  %v220 = vsub.f32 1.5, %v219
  %v221 = vmul.f32 %v216, %v220
  %vm222 = vweird.f32 %v195
  %vm223 = vweird.f32 %v216
  %vm224 = vmor %vm222, %vm223
  %v225 = vsel %vm224, %v216, %v221
  %v226 = vmul.f32 %v175, %v205
  %v227 = vmul.f32 %v176, %v215
  %v228 = vmul.f32 %v177, %v225
  %v230 = vperm.slane %v76, 0
  %v232 = vmul.f32 %v226, %v230
  %v233 = vmul.f32 %v227, %v230
  %v234 = vmul.f32 %v228, %v230
  %v236 = vperm.slane %v77, 0
  %v238 = vadd.f32 %v232, %v236
  %v239 = vadd.f32 %v233, %v236
  %v240 = vadd.f32 %v234, %v236
  %v242 = vperm.slane %v82, 0
  %v245 = vsel %vm154, %v238, 0
  %v248 = vsel %vm154, %v239, 0
  %v251 = vsel %vm154, %v240, 0
  %253 = vmatpush.msra.mxu0 0.0
  %254 = vmatpush.msra.mxu0 0.0
  %255 = vmatpush.msra.mxu0 0.0
  %256 = vmatpush.msra.mxu0 0.0
  %257 = vmatpush.msra.mxu0 0.0
  %258 = vmatpush.msra.mxu0 0.0
  %259 = vmatpush.msra.mxu0 0.0
  %260 = vmatpush.msra.mxu0 0.0
  %261 = vmatpush.msra.mxu0 0.0
  %262 = vmatpush.msra.mxu0 0.0
  %263 = vmatpush.msra.mxu0 0.0
  %264 = vmatpush.msra.mxu0 0.0
  %265 = vmatpush.msra.mxu0 %v81
  %266 = vmatpush.msra.mxu0 %v80
  %267 = vmatpush.msra.mxu0 %v79
  %268 = vmatpush.msra.mxu0 %v78
  %269 = vmatmul.f32.gmra.mxu0 %v245
  %v270 = vpop.f32.mrf.mxu0
  %v271 = vadd.f32 %v242, %v270
  %272 = vmatmul.f32.gmra.mxu0 %v248
  %v273 = vpop.f32.mrf.mxu0
  %v274 = vadd.f32 %v242, %v273
  %275 = vmatmul.f32.gmra.mxu0 %v251
  %v276 = vpop.f32.mrf.mxu0
  %v277 = vadd.f32 %v242, %v276
  %278 = vdwg.mxu0
  %282 = vrot.lane.b32.xlu0 %v271, 96
  %v283 = vpop.permute.xlu0 %282
  %284 = vrot.lane.b32.xlu0 %v274, 96
  %v285 = vpop.permute.xlu0 %284
  %286 = vrot.lane.b32.xlu0 %v277, 96
  %v287 = vpop.permute.xlu0 %286
  %vm288 = vcmask 64512
  %v289 = vsel %vm288, %v271, 0
  %v291 = vsel %vm288, %v274, 0
  %v293 = vsel %vm288, %v277, 0
  %v295 = vsel %vm288, %v283, 0
  %v297 = vsel %vm288, %v285, 0
  %v299 = vsel %vm288, %v287, 0
  %301 = vmatpush.xpose.msra.mxu0 0.0
  %302 = vmatpush.xpose.msra.mxu0 0.0
  %303 = vmatpush.xpose.msra.mxu0 0.0
  %304 = vmatpush.xpose.msra.mxu0 0.0
  %305 = vmatpush.xpose.msra.mxu0 0.0
  %306 = vmatpush.xpose.msra.mxu0 0.0
  %307 = vmatpush.xpose.msra.mxu0 0.0
  %308 = vmatpush.xpose.msra.mxu0 0.0
  %309 = vmatpush.xpose.msra.mxu0 0.0
  %310 = vmatpush.xpose.msra.mxu0 0.0
  %311 = vmatpush.xpose.msra.mxu0 0.0
  %312 = vmatpush.xpose.msra.mxu0 0.0
  %313 = vmatpush.xpose.msra.mxu0 0.0
  %314 = vmatpush.xpose.msra.mxu0 %v299
  %315 = vmatpush.xpose.msra.mxu0 %v297
  %316 = vmatpush.xpose.msra.mxu0 %v295
  %317 = vmatmul.f32.gmra.mxu0 %v289
  %v318 = vpop.f32.mrf.mxu0
  %v319 = vadd.f32 0.0, %v318
  %320 = vmatmul.f32.gmra.mxu0 %v291
  %v321 = vpop.f32.mrf.mxu0
  %v322 = vadd.f32 0.0, %v321
  %323 = vmatmul.f32.gmra.mxu0 %v293
  %v324 = vpop.f32.mrf.mxu0
  %v325 = vadd.f32 0.0, %v324
  %326 = vdwg.mxu0
  %v327 = vmul.f32 %v319, 0.35355338
  %v328 = vmul.f32 %v322, 0.35355338
  %v329 = vmul.f32 %v325, 0.35355338
  %vm330 = vcmask 138240
  %v331 = vsel %vm330, %v327, -inf
  %332 = vmax.xlane.f32.xlu0 %v331
  %v333 = vpop.xlane.xlu0 %332
  %v334 = vsel %vm330, %v328, -inf
  %335 = vmax.xlane.f32.xlu0 %v334
  %v336 = vpop.xlane.xlu0 %335
  %vm337 = vcmask 131072
  %v338 = vsel %vm337, %v329, -inf
  %339 = vmax.xlane.f32.xlu0 %v338
  %v340 = vpop.xlane.xlu0 %339
  %v341 = vsub.f32 %v327, %v333
  %v342 = vsub.f32 %v328, %v336
  %v343 = vsub.f32 %v329, %v340
  %v344 = vmul.f32 %v341, 1.442695
  %v345 = vpow.pop %v344
  %v346 = vmul.f32 %v342, 1.442695
  %v347 = vpow.pop %v346
  %v348 = vmul.f32 %v343, 1.442695
  %v349 = vpow.pop %v348
  %v350 = vsel %vm330, %v345, 0.0
  %351 = vadd.xlane.f32.xlu0 %v350
  %v352 = vpop.xlane.xlu0 %351
  %v353 = vsel %vm330, %v347, 0.0
  %354 = vadd.xlane.f32.xlu0 %v353
  %v355 = vpop.xlane.xlu0 %354
  %v356 = vsel %vm337, %v349, 0.0
  %357 = vadd.xlane.f32.xlu0 %v356
  %v358 = vpop.xlane.xlu0 %357
  %v359 = vrcp.pop %v352
  %v360 = vrcp.pop %v355
  %v361 = vrcp.pop %v358
  %v362 = vmul.f32 %v345, %v359
  %v363 = vmul.f32 %v347, %v360
  %v364 = vmul.f32 %v349, %v361
  %365 = vrot.lane.b32.xlu0 %v271, 64
  %v366 = vpop.permute.xlu0 %365
  %367 = vrot.lane.b32.xlu0 %v274, 64
  %v368 = vpop.permute.xlu0 %367
  %369 = vrot.lane.b32.xlu0 %v277, 64
  %v370 = vpop.permute.xlu0 %369
  %v374 = vsel %vm330, %v362, 0
  %v377 = vsel %vm330, %v363, 0
  %v380 = vsel %vm330, %v364, 0
  %vm382 = vcmask 1040384
  %v383 = vsel %vm382, %v370, 0
  %385 = vmatpush.msra.mxu0 0.0
  %386 = vmatpush.msra.mxu0 0.0
  %387 = vmatpush.msra.mxu0 0.0
  %388 = vmatpush.msra.mxu0 0.0
  %389 = vmatpush.msra.mxu0 0.0
  %390 = vmatpush.msra.mxu0 0.0
  %391 = vmatpush.msra.mxu0 0.0
  %392 = vmatpush.msra.mxu0 0.0
  %393 = vmatpush.msra.mxu0 0.0
  %394 = vmatpush.msra.mxu0 0.0
  %395 = vmatpush.msra.mxu0 0.0
  %396 = vmatpush.msra.mxu0 0.0
  %397 = vmatpush.msra.mxu0 0.0
  %398 = vmatpush.msra.mxu0 %v383
  %399 = vmatpush.msra.mxu0 %v368
  %400 = vmatpush.msra.mxu0 %v366
  %401 = vmatmul.f32.gmra.mxu0 %v374
  %v402 = vpop.f32.mrf.mxu0
  %v403 = vadd.f32 0.0, %v402
  %404 = vmatmul.f32.gmra.mxu0 %v377
  %v405 = vpop.f32.mrf.mxu0
  %v406 = vadd.f32 0.0, %v405
  %407 = vmatmul.f32.gmra.mxu0 %v380
  %v408 = vpop.f32.mrf.mxu0
  %v409 = vadd.f32 0.0, %v408
  %410 = vdwg.mxu0
  %411 = vrot.lane.b32.xlu0 %v271, 120
  %v412 = vpop.permute.xlu0 %411
  %413 = vrot.lane.b32.xlu0 %v274, 120
  %v414 = vpop.permute.xlu0 %413
  %415 = vrot.lane.b32.xlu0 %v277, 120
  %v416 = vpop.permute.xlu0 %415
  %417 = vrot.lane.b32.xlu0 %v271, 88
  %v418 = vpop.permute.xlu0 %417
  %419 = vrot.lane.b32.xlu0 %v274, 88
  %v420 = vpop.permute.xlu0 %419
  %421 = vrot.lane.b32.xlu0 %v277, 88
  %v422 = vpop.permute.xlu0 %421
  %v423 = vsel %vm288, %v412, 0
  %v425 = vsel %vm288, %v414, 0
  %v427 = vsel %vm288, %v416, 0
  %v429 = vsel %vm288, %v418, 0
  %v431 = vsel %vm288, %v420, 0
  %v433 = vsel %vm288, %v422, 0
  %435 = vmatpush.xpose.msra.mxu0 0.0
  %436 = vmatpush.xpose.msra.mxu0 0.0
  %437 = vmatpush.xpose.msra.mxu0 0.0
  %438 = vmatpush.xpose.msra.mxu0 0.0
  %439 = vmatpush.xpose.msra.mxu0 0.0
  %440 = vmatpush.xpose.msra.mxu0 0.0
  %441 = vmatpush.xpose.msra.mxu0 0.0
  %442 = vmatpush.xpose.msra.mxu0 0.0
  %443 = vmatpush.xpose.msra.mxu0 0.0
  %444 = vmatpush.xpose.msra.mxu0 0.0
  %445 = vmatpush.xpose.msra.mxu0 0.0
  %446 = vmatpush.xpose.msra.mxu0 0.0
  %447 = vmatpush.xpose.msra.mxu0 0.0
  %448 = vmatpush.xpose.msra.mxu0 %v433
  %449 = vmatpush.xpose.msra.mxu0 %v431
  %450 = vmatpush.xpose.msra.mxu0 %v429
  %451 = vmatmul.f32.gmra.mxu0 %v423
  %v452 = vpop.f32.mrf.mxu0
  %v453 = vadd.f32 0.0, %v452
  %454 = vmatmul.f32.gmra.mxu0 %v425
  %v455 = vpop.f32.mrf.mxu0
  %v456 = vadd.f32 0.0, %v455
  %457 = vmatmul.f32.gmra.mxu0 %v427
  %v458 = vpop.f32.mrf.mxu0
  %v459 = vadd.f32 0.0, %v458
  %460 = vdwg.mxu0
  %v461 = vmul.f32 %v453, 0.35355338
  %v462 = vmul.f32 %v456, 0.35355338
  %v463 = vmul.f32 %v459, 0.35355338
  %v464 = vsel %vm330, %v461, -inf
  %465 = vmax.xlane.f32.xlu0 %v464
  %v466 = vpop.xlane.xlu0 %465
  %v467 = vsel %vm330, %v462, -inf
  %468 = vmax.xlane.f32.xlu0 %v467
  %v469 = vpop.xlane.xlu0 %468
  %v470 = vsel %vm337, %v463, -inf
  %471 = vmax.xlane.f32.xlu0 %v470
  %v472 = vpop.xlane.xlu0 %471
  %v473 = vsub.f32 %v461, %v466
  %v474 = vsub.f32 %v462, %v469
  %v475 = vsub.f32 %v463, %v472
  %v476 = vmul.f32 %v473, 1.442695
  %v477 = vpow.pop %v476
  %v478 = vmul.f32 %v474, 1.442695
  %v479 = vpow.pop %v478
  %v480 = vmul.f32 %v475, 1.442695
  %v481 = vpow.pop %v480
  %v482 = vsel %vm330, %v477, 0.0
  %483 = vadd.xlane.f32.xlu0 %v482
  %v484 = vpop.xlane.xlu0 %483
  %v485 = vsel %vm330, %v479, 0.0
  %486 = vadd.xlane.f32.xlu0 %v485
  %v487 = vpop.xlane.xlu0 %486
  %v488 = vsel %vm337, %v481, 0.0
  %489 = vadd.xlane.f32.xlu0 %v488
  %v490 = vpop.xlane.xlu0 %489
  %v491 = vrcp.pop %v484
  %v492 = vrcp.pop %v487
  %v493 = vrcp.pop %v490
  %v494 = vmul.f32 %v477, %v491
  %v495 = vmul.f32 %v479, %v492
  %v496 = vmul.f32 %v481, %v493
  %497 = vrot.lane.b32.xlu0 %v271, 56
  %v498 = vpop.permute.xlu0 %497
  %499 = vrot.lane.b32.xlu0 %v274, 56
  %v500 = vpop.permute.xlu0 %499
  %501 = vrot.lane.b32.xlu0 %v277, 56
  %v502 = vpop.permute.xlu0 %501
  %v506 = vsel %vm330, %v494, 0
  %v509 = vsel %vm330, %v495, 0
  %v512 = vsel %vm330, %v496, 0
  %v514 = vsel %vm382, %v502, 0
  %516 = vmatpush.msra.mxu0 0.0
  %517 = vmatpush.msra.mxu0 0.0
  %518 = vmatpush.msra.mxu0 0.0
  %519 = vmatpush.msra.mxu0 0.0
  %520 = vmatpush.msra.mxu0 0.0
  %521 = vmatpush.msra.mxu0 0.0
  %522 = vmatpush.msra.mxu0 0.0
  %523 = vmatpush.msra.mxu0 0.0
  %524 = vmatpush.msra.mxu0 0.0
  %525 = vmatpush.msra.mxu0 0.0
  %526 = vmatpush.msra.mxu0 0.0
  %527 = vmatpush.msra.mxu0 0.0
  %528 = vmatpush.msra.mxu0 0.0
  %529 = vmatpush.msra.mxu0 %v514
  %530 = vmatpush.msra.mxu0 %v500
  %531 = vmatpush.msra.mxu0 %v498
  %532 = vmatmul.f32.gmra.mxu0 %v506
  %v533 = vpop.f32.mrf.mxu0
  %v534 = vadd.f32 0.0, %v533
  %535 = vmatmul.f32.gmra.mxu0 %v509
  %v536 = vpop.f32.mrf.mxu0
  %v537 = vadd.f32 0.0, %v536
  %538 = vmatmul.f32.gmra.mxu0 %v512
  %v539 = vpop.f32.mrf.mxu0
  %v540 = vadd.f32 0.0, %v539
  %541 = vdwg.mxu0
  %v543 = vsel %vm288, %v534, 0
  %v546 = vsel %vm288, %v537, 0
  %v549 = vsel %vm288, %v540, 0
  %551 = vmatpush.msra.mxu0 0.0
  %552 = vmatpush.msra.mxu0 0.0
  %553 = vmatpush.msra.mxu0 0.0
  %554 = vmatpush.msra.mxu0 0.0
  %555 = vmatpush.msra.mxu0 0.0
  %556 = vmatpush.msra.mxu0 0.0
  %557 = vmatpush.msra.mxu0 0.0
  %558 = vmatpush.msra.mxu0 0.0
  %559 = vmatpush.msra.mxu0 0.0
  %560 = vmatpush.msra.mxu0 0.0
  %561 = vmatpush.msra.mxu0 0.0
  %562 = vmatpush.msra.mxu0 0.0
  %563 = vmatpush.msra.mxu0 0.0
  %564 = vmatpush.msra.mxu0 0.0
  %565 = vmatpush.msra.mxu0 0.0
  %566 = vmatpush.msra.mxu0 %v84
  %567 = vmatmul.f32.gmra.mxu0 %v543
  %v568 = vpop.f32.mrf.mxu0
  %v569 = vadd.f32 0.0, %v568
  %570 = vmatmul.f32.gmra.mxu0 %v546
  %v571 = vpop.f32.mrf.mxu0
  %v572 = vadd.f32 0.0, %v571
  %573 = vmatmul.f32.gmra.mxu0 %v549
  %v574 = vpop.f32.mrf.mxu0
  %v575 = vadd.f32 0.0, %v574
  %576 = vdwg.mxu0
  %v578 = vsel %vm288, %v403, 0
  %v581 = vsel %vm288, %v406, 0
  %v584 = vsel %vm288, %v409, 0
  %586 = vmatpush.msra.mxu0 0.0
  %587 = vmatpush.msra.mxu0 0.0
  %588 = vmatpush.msra.mxu0 0.0
  %589 = vmatpush.msra.mxu0 0.0
  %590 = vmatpush.msra.mxu0 0.0
  %591 = vmatpush.msra.mxu0 0.0
  %592 = vmatpush.msra.mxu0 0.0
  %593 = vmatpush.msra.mxu0 0.0
  %594 = vmatpush.msra.mxu0 0.0
  %595 = vmatpush.msra.mxu0 0.0
  %596 = vmatpush.msra.mxu0 0.0
  %597 = vmatpush.msra.mxu0 0.0
  %598 = vmatpush.msra.mxu0 0.0
  %599 = vmatpush.msra.mxu0 0.0
  %600 = vmatpush.msra.mxu0 0.0
  %601 = vmatpush.msra.mxu0 %v83
  %602 = vmatmul.f32.gmra.mxu0 %v578
  %v603 = vpop.f32.mrf.mxu0
  %v604 = vadd.f32 %v569, %v603
  %605 = vmatmul.f32.gmra.mxu0 %v581
  %v606 = vpop.f32.mrf.mxu0
  %v607 = vadd.f32 %v572, %v606
  %608 = vmatmul.f32.gmra.mxu0 %v584
  %v609 = vpop.f32.mrf.mxu0
  %v610 = vadd.f32 %v575, %v609
  %611 = vdwg.mxu0
  %612 = vrot.lane.b32.xlu0 %v271, 112
  %v613 = vpop.permute.xlu0 %612
  %614 = vrot.lane.b32.xlu0 %v274, 112
  %v615 = vpop.permute.xlu0 %614
  %616 = vrot.lane.b32.xlu0 %v277, 112
  %v617 = vpop.permute.xlu0 %616
  %618 = vrot.lane.b32.xlu0 %v271, 80
  %v619 = vpop.permute.xlu0 %618
  %620 = vrot.lane.b32.xlu0 %v274, 80
  %v621 = vpop.permute.xlu0 %620
  %622 = vrot.lane.b32.xlu0 %v277, 80
  %v623 = vpop.permute.xlu0 %622
  %v624 = vsel %vm288, %v613, 0
  %v626 = vsel %vm288, %v615, 0
  %v628 = vsel %vm288, %v617, 0
  %v630 = vsel %vm288, %v619, 0
  %v632 = vsel %vm288, %v621, 0
  %v634 = vsel %vm288, %v623, 0
  %636 = vmatpush.xpose.msra.mxu0 0.0
  %637 = vmatpush.xpose.msra.mxu0 0.0
  %638 = vmatpush.xpose.msra.mxu0 0.0
  %639 = vmatpush.xpose.msra.mxu0 0.0
  %640 = vmatpush.xpose.msra.mxu0 0.0
  %641 = vmatpush.xpose.msra.mxu0 0.0
  %642 = vmatpush.xpose.msra.mxu0 0.0
  %643 = vmatpush.xpose.msra.mxu0 0.0
  %644 = vmatpush.xpose.msra.mxu0 0.0
  %645 = vmatpush.xpose.msra.mxu0 0.0
  %646 = vmatpush.xpose.msra.mxu0 0.0
  %647 = vmatpush.xpose.msra.mxu0 0.0
  %648 = vmatpush.xpose.msra.mxu0 0.0
  %649 = vmatpush.xpose.msra.mxu0 %v634
  %650 = vmatpush.xpose.msra.mxu0 %v632
  %651 = vmatpush.xpose.msra.mxu0 %v630
  %652 = vmatmul.f32.gmra.mxu0 %v624
  %v653 = vpop.f32.mrf.mxu0
  %v654 = vadd.f32 0.0, %v653
  %655 = vmatmul.f32.gmra.mxu0 %v626
  %v656 = vpop.f32.mrf.mxu0
  %v657 = vadd.f32 0.0, %v656
  %658 = vmatmul.f32.gmra.mxu0 %v628
  %v659 = vpop.f32.mrf.mxu0
  %v660 = vadd.f32 0.0, %v659
  %661 = vdwg.mxu0
  %v662 = vmul.f32 %v654, 0.35355338
  %v663 = vmul.f32 %v657, 0.35355338
  %v664 = vmul.f32 %v660, 0.35355338
  %v665 = vsel %vm330, %v662, -inf
  %666 = vmax.xlane.f32.xlu0 %v665
  %v667 = vpop.xlane.xlu0 %666
  %v668 = vsel %vm330, %v663, -inf
  %669 = vmax.xlane.f32.xlu0 %v668
  %v670 = vpop.xlane.xlu0 %669
  %v671 = vsel %vm337, %v664, -inf
  %672 = vmax.xlane.f32.xlu0 %v671
  %v673 = vpop.xlane.xlu0 %672
  %v674 = vsub.f32 %v662, %v667
  %v675 = vsub.f32 %v663, %v670
  %v676 = vsub.f32 %v664, %v673
  %v677 = vmul.f32 %v674, 1.442695
  %v678 = vpow.pop %v677
  %v679 = vmul.f32 %v675, 1.442695
  %v680 = vpow.pop %v679
  %v681 = vmul.f32 %v676, 1.442695
  %v682 = vpow.pop %v681
  %v683 = vsel %vm330, %v678, 0.0
  %684 = vadd.xlane.f32.xlu0 %v683
  %v685 = vpop.xlane.xlu0 %684
  %v686 = vsel %vm330, %v680, 0.0
  %687 = vadd.xlane.f32.xlu0 %v686
  %v688 = vpop.xlane.xlu0 %687
  %v689 = vsel %vm337, %v682, 0.0
  %690 = vadd.xlane.f32.xlu0 %v689
  %v691 = vpop.xlane.xlu0 %690
  %v692 = vrcp.pop %v685
  %v693 = vrcp.pop %v688
  %v694 = vrcp.pop %v691
  %v695 = vmul.f32 %v678, %v692
  %v696 = vmul.f32 %v680, %v693
  %v697 = vmul.f32 %v682, %v694
  %698 = vrot.lane.b32.xlu0 %v271, 48
  %v699 = vpop.permute.xlu0 %698
  %700 = vrot.lane.b32.xlu0 %v274, 48
  %v701 = vpop.permute.xlu0 %700
  %702 = vrot.lane.b32.xlu0 %v277, 48
  %v703 = vpop.permute.xlu0 %702
  %v707 = vsel %vm330, %v695, 0
  %v710 = vsel %vm330, %v696, 0
  %v713 = vsel %vm330, %v697, 0
  %v715 = vsel %vm382, %v703, 0
  %717 = vmatpush.msra.mxu0 0.0
  %718 = vmatpush.msra.mxu0 0.0
  %719 = vmatpush.msra.mxu0 0.0
  %720 = vmatpush.msra.mxu0 0.0
  %721 = vmatpush.msra.mxu0 0.0
  %722 = vmatpush.msra.mxu0 0.0
  %723 = vmatpush.msra.mxu0 0.0
  %724 = vmatpush.msra.mxu0 0.0
  %725 = vmatpush.msra.mxu0 0.0
  %726 = vmatpush.msra.mxu0 0.0
  %727 = vmatpush.msra.mxu0 0.0
  %728 = vmatpush.msra.mxu0 0.0
  %729 = vmatpush.msra.mxu0 0.0
  %730 = vmatpush.msra.mxu0 %v715
  %731 = vmatpush.msra.mxu0 %v701
  %732 = vmatpush.msra.mxu0 %v699
  %733 = vmatmul.f32.gmra.mxu0 %v707
  %v734 = vpop.f32.mrf.mxu0
  %v735 = vadd.f32 0.0, %v734
  %736 = vmatmul.f32.gmra.mxu0 %v710
  %v737 = vpop.f32.mrf.mxu0
  %v738 = vadd.f32 0.0, %v737
  %739 = vmatmul.f32.gmra.mxu0 %v713
  %v740 = vpop.f32.mrf.mxu0
  %v741 = vadd.f32 0.0, %v740
  %742 = vdwg.mxu0
  %v744 = vsel %vm288, %v735, 0
  %v747 = vsel %vm288, %v738, 0
  %v750 = vsel %vm288, %v741, 0
  %752 = vmatpush.msra.mxu0 0.0
  %753 = vmatpush.msra.mxu0 0.0
  %754 = vmatpush.msra.mxu0 0.0
  %755 = vmatpush.msra.mxu0 0.0
  %756 = vmatpush.msra.mxu0 0.0
  %757 = vmatpush.msra.mxu0 0.0
  %758 = vmatpush.msra.mxu0 0.0
  %759 = vmatpush.msra.mxu0 0.0
  %760 = vmatpush.msra.mxu0 0.0
  %761 = vmatpush.msra.mxu0 0.0
  %762 = vmatpush.msra.mxu0 0.0
  %763 = vmatpush.msra.mxu0 0.0
  %764 = vmatpush.msra.mxu0 0.0
  %765 = vmatpush.msra.mxu0 0.0
  %766 = vmatpush.msra.mxu0 0.0
  %767 = vmatpush.msra.mxu0 %v85
  %768 = vmatmul.f32.gmra.mxu0 %v744
  %v769 = vpop.f32.mrf.mxu0
  %v770 = vadd.f32 0.0, %v769
  %771 = vmatmul.f32.gmra.mxu0 %v747
  %v772 = vpop.f32.mrf.mxu0
  %v773 = vadd.f32 0.0, %v772
  %774 = vmatmul.f32.gmra.mxu0 %v750
  %v775 = vpop.f32.mrf.mxu0
  %v776 = vadd.f32 0.0, %v775
  %777 = vdwg.mxu0
  %v778 = vadd.f32 %v604, %v770
  %v779 = vadd.f32 %v607, %v773
  %v780 = vadd.f32 %v610, %v776
  %781 = vrot.lane.b32.xlu0 %v271, 104
  %v782 = vpop.permute.xlu0 %781
  %783 = vrot.lane.b32.xlu0 %v274, 104
  %v784 = vpop.permute.xlu0 %783
  %785 = vrot.lane.b32.xlu0 %v277, 104
  %v786 = vpop.permute.xlu0 %785
  %787 = vrot.lane.b32.xlu0 %v271, 72
  %v788 = vpop.permute.xlu0 %787
  %789 = vrot.lane.b32.xlu0 %v274, 72
  %v790 = vpop.permute.xlu0 %789
  %791 = vrot.lane.b32.xlu0 %v277, 72
  %v792 = vpop.permute.xlu0 %791
  %v793 = vsel %vm288, %v782, 0
  %v795 = vsel %vm288, %v784, 0
  %v797 = vsel %vm288, %v786, 0
  %v799 = vsel %vm288, %v788, 0
  %v801 = vsel %vm288, %v790, 0
  %v803 = vsel %vm288, %v792, 0
  %805 = vmatpush.xpose.msra.mxu0 0.0
  %806 = vmatpush.xpose.msra.mxu0 0.0
  %807 = vmatpush.xpose.msra.mxu0 0.0
  %808 = vmatpush.xpose.msra.mxu0 0.0
  %809 = vmatpush.xpose.msra.mxu0 0.0
  %810 = vmatpush.xpose.msra.mxu0 0.0
  %811 = vmatpush.xpose.msra.mxu0 0.0
  %812 = vmatpush.xpose.msra.mxu0 0.0
  %813 = vmatpush.xpose.msra.mxu0 0.0
  %814 = vmatpush.xpose.msra.mxu0 0.0
  %815 = vmatpush.xpose.msra.mxu0 0.0
  %816 = vmatpush.xpose.msra.mxu0 0.0
  %817 = vmatpush.xpose.msra.mxu0 0.0
  %818 = vmatpush.xpose.msra.mxu0 %v803
  %819 = vmatpush.xpose.msra.mxu0 %v801
  %820 = vmatpush.xpose.msra.mxu0 %v799
  %821 = vmatmul.f32.gmra.mxu0 %v793
  %v822 = vpop.f32.mrf.mxu0
  %v823 = vadd.f32 0.0, %v822
  %824 = vmatmul.f32.gmra.mxu0 %v795
  %v825 = vpop.f32.mrf.mxu0
  %v826 = vadd.f32 0.0, %v825
  %827 = vmatmul.f32.gmra.mxu0 %v797
  %v828 = vpop.f32.mrf.mxu0
  %v829 = vadd.f32 0.0, %v828
  %830 = vdwg.mxu0
  %v831 = vmul.f32 %v823, 0.35355338
  %v832 = vmul.f32 %v826, 0.35355338
  %v833 = vmul.f32 %v829, 0.35355338
  %v834 = vsel %vm330, %v831, -inf
  %835 = vmax.xlane.f32.xlu0 %v834
  %v836 = vpop.xlane.xlu0 %835
  %v837 = vsel %vm330, %v832, -inf
  %838 = vmax.xlane.f32.xlu0 %v837
  %v839 = vpop.xlane.xlu0 %838
  %v840 = vsel %vm337, %v833, -inf
  %841 = vmax.xlane.f32.xlu0 %v840
  %v842 = vpop.xlane.xlu0 %841
  %v843 = vsub.f32 %v831, %v836
  %v844 = vsub.f32 %v832, %v839
  %v845 = vsub.f32 %v833, %v842
  %v846 = vmul.f32 %v843, 1.442695
  %v847 = vpow.pop %v846
  %v848 = vmul.f32 %v844, 1.442695
  %v849 = vpow.pop %v848
  %v850 = vmul.f32 %v845, 1.442695
  %v851 = vpow.pop %v850
  %v852 = vsel %vm330, %v847, 0.0
  %853 = vadd.xlane.f32.xlu0 %v852
  %v854 = vpop.xlane.xlu0 %853
  %v855 = vsel %vm330, %v849, 0.0
  %856 = vadd.xlane.f32.xlu0 %v855
  %v857 = vpop.xlane.xlu0 %856
  %v858 = vsel %vm337, %v851, 0.0
  %859 = vadd.xlane.f32.xlu0 %v858
  %v860 = vpop.xlane.xlu0 %859
  %v861 = vrcp.pop %v854
  %v862 = vrcp.pop %v857
  %v863 = vrcp.pop %v860
  %v864 = vmul.f32 %v847, %v861
  %v865 = vmul.f32 %v849, %v862
  %v866 = vmul.f32 %v851, %v863
  %867 = vrot.lane.b32.xlu0 %v271, 40
  %v868 = vpop.permute.xlu0 %867
  %869 = vrot.lane.b32.xlu0 %v274, 40
  %v870 = vpop.permute.xlu0 %869
  %871 = vrot.lane.b32.xlu0 %v277, 40
  %v872 = vpop.permute.xlu0 %871
  %v876 = vsel %vm330, %v864, 0
  %v879 = vsel %vm330, %v865, 0
  %v882 = vsel %vm330, %v866, 0
  %v884 = vsel %vm382, %v872, 0
  %886 = vmatpush.msra.mxu0 0.0
  %887 = vmatpush.msra.mxu0 0.0
  %888 = vmatpush.msra.mxu0 0.0
  %889 = vmatpush.msra.mxu0 0.0
  %890 = vmatpush.msra.mxu0 0.0
  %891 = vmatpush.msra.mxu0 0.0
  %892 = vmatpush.msra.mxu0 0.0
  %893 = vmatpush.msra.mxu0 0.0
  %894 = vmatpush.msra.mxu0 0.0
  %895 = vmatpush.msra.mxu0 0.0
  %896 = vmatpush.msra.mxu0 0.0
  %897 = vmatpush.msra.mxu0 0.0
  %898 = vmatpush.msra.mxu0 0.0
  %899 = vmatpush.msra.mxu0 %v884
  %900 = vmatpush.msra.mxu0 %v870
  %901 = vmatpush.msra.mxu0 %v868
  %902 = vmatmul.f32.gmra.mxu0 %v876
  %v903 = vpop.f32.mrf.mxu0
  %v904 = vadd.f32 0.0, %v903
  %905 = vmatmul.f32.gmra.mxu0 %v879
  %v906 = vpop.f32.mrf.mxu0
  %v907 = vadd.f32 0.0, %v906
  %908 = vmatmul.f32.gmra.mxu0 %v882
  %v909 = vpop.f32.mrf.mxu0
  %v910 = vadd.f32 0.0, %v909
  %911 = vdwg.mxu0
  %v913 = vsel %vm288, %v904, 0
  %v916 = vsel %vm288, %v907, 0
  %v919 = vsel %vm288, %v910, 0
  %921 = vmatpush.msra.mxu0 0.0
  %922 = vmatpush.msra.mxu0 0.0
  %923 = vmatpush.msra.mxu0 0.0
  %924 = vmatpush.msra.mxu0 0.0
  %925 = vmatpush.msra.mxu0 0.0
  %926 = vmatpush.msra.mxu0 0.0
  %927 = vmatpush.msra.mxu0 0.0
  %928 = vmatpush.msra.mxu0 0.0
  %929 = vmatpush.msra.mxu0 0.0
  %930 = vmatpush.msra.mxu0 0.0
  %931 = vmatpush.msra.mxu0 0.0
  %932 = vmatpush.msra.mxu0 0.0
  %933 = vmatpush.msra.mxu0 0.0
  %934 = vmatpush.msra.mxu0 0.0
  %935 = vmatpush.msra.mxu0 0.0
  %936 = vmatpush.msra.mxu0 %v86
  %937 = vmatmul.f32.gmra.mxu0 %v913
  %v938 = vpop.f32.mrf.mxu0
  %v939 = vadd.f32 0.0, %v938
  %940 = vmatmul.f32.gmra.mxu0 %v916
  %v941 = vpop.f32.mrf.mxu0
  %v942 = vadd.f32 0.0, %v941
  %943 = vmatmul.f32.gmra.mxu0 %v919
  %v944 = vpop.f32.mrf.mxu0
  %v945 = vadd.f32 0.0, %v944
  %946 = vdwg.mxu0
  %v947 = vadd.f32 %v778, %v939
  %v948 = vadd.f32 %v779, %v942
  %v949 = vadd.f32 %v780, %v945
  %v950 = vadd.f32 %v146, %v947
  %v951 = vadd.f32 %v149, %v948
  %v952 = vadd.f32 %v152, %v949
  %v954 = vperm.slane %v87, 0
  %v956 = vadd.f32 %v950, %v954
  %v957 = vadd.f32 %v951, %v954
  %v958 = vadd.f32 %v952, %v954
  %v959 = vsel %vm154, %v956, 0.0
  %960 = vadd.xlane.f32.xlu0 %v959
  %v961 = vpop.xlane.xlu0 %960
  %v962 = vsel %vm154, %v957, 0.0
  %963 = vadd.xlane.f32.xlu0 %v962
  %v964 = vpop.xlane.xlu0 %963
  %v965 = vsel %vm161, %v958, 0.0
  %966 = vadd.xlane.f32.xlu0 %v965
  %v967 = vpop.xlane.xlu0 %966
  %v968 = vmul.f32 %v961, %v171
  %v969 = vmul.f32 %v964, %v171
  %v970 = vmul.f32 %v967, %v171
  %v971 = vsub.f32 %v956, %v968
  %v972 = vsub.f32 %v957, %v969
  %v973 = vsub.f32 %v958, %v970
  %v974 = vmul.f32 %v971, %v971
  %v975 = vmul.f32 %v972, %v972
  %v976 = vmul.f32 %v973, %v973
  %v977 = vsel %vm154, %v974, 0.0
  %978 = vadd.xlane.f32.xlu0 %v977
  %v979 = vpop.xlane.xlu0 %978
  %v980 = vsel %vm154, %v975, 0.0
  %981 = vadd.xlane.f32.xlu0 %v980
  %v982 = vpop.xlane.xlu0 %981
  %v983 = vsel %vm161, %v976, 0.0
  %984 = vadd.xlane.f32.xlu0 %v983
  %v985 = vpop.xlane.xlu0 %984
  %v986 = vmul.f32 %v979, %v171
  %v987 = vmul.f32 %v982, %v171
  %v988 = vmul.f32 %v985, %v171
  %v989 = vadd.f32 %v986, 1e-06
  %v990 = vadd.f32 %v987, 1e-06
  %v991 = vadd.f32 %v988, 1e-06
  %v992 = vrsqrt.pop %v989
  %v993 = vmul.f32 %v992, %v989
  %v994 = vmul.f32 %v993, %v992
  %v995 = vmul.f32 0.5, %v994
  %v996 = vsub.f32 1.5, %v995
  %v997 = vmul.f32 %v992, %v996
  %vm998 = vweird.f32 %v989
  %vm999 = vweird.f32 %v992
  %vm1000 = vmor %vm998, %vm999
  %v1001 = vsel %vm1000, %v992, %v997
  %v1002 = vrsqrt.pop %v990
  %v1003 = vmul.f32 %v1002, %v990
  %v1004 = vmul.f32 %v1003, %v1002
  %v1005 = vmul.f32 0.5, %v1004
  %v1006 = vsub.f32 1.5, %v1005
  %v1007 = vmul.f32 %v1002, %v1006
  %vm1008 = vweird.f32 %v990
  %vm1009 = vweird.f32 %v1002
  %vm1010 = vmor %vm1008, %vm1009
  %v1011 = vsel %vm1010, %v1002, %v1007
  %v1012 = vrsqrt.pop %v991
  %v1013 = vmul.f32 %v1012, %v991
  %v1014 = vmul.f32 %v1013, %v1012
  %v1015 = vmul.f32 0.5, %v1014
  %v1016 = vsub.f32 1.5, %v1015
  %v1017 = vmul.f32 %v1012, %v1016
  %vm1018 = vweird.f32 %v991
  %vm1019 = vweird.f32 %v1012
  %vm1020 = vmor %vm1018, %vm1019
  %v1021 = vsel %vm1020, %v1012, %v1017
  %v1022 = vmul.f32 %v971, %v1001
  %v1023 = vmul.f32 %v972, %v1011
  %v1024 = vmul.f32 %v973, %v1021
  %v1026 = vperm.slane %v88, 0
  %v1028 = vmul.f32 %v1022, %v1026
  %v1029 = vmul.f32 %v1023, %v1026
  %v1030 = vmul.f32 %v1024, %v1026
  %v1032 = vperm.slane %v89, 0
  %v1034 = vadd.f32 %v1028, %v1032
  %v1035 = vadd.f32 %v1029, %v1032
  %v1036 = vadd.f32 %v1030, %v1032
  %v1038 = vperm.slane %v94, 0
  %v1041 = vsel %vm154, %v1034, 0
  %v1044 = vsel %vm154, %v1035, 0
  %v1047 = vsel %vm154, %v1036, 0
  %1049 = vmatpush.msra.mxu0 0.0
  %1050 = vmatpush.msra.mxu0 0.0
  %1051 = vmatpush.msra.mxu0 0.0
  %1052 = vmatpush.msra.mxu0 0.0
  %1053 = vmatpush.msra.mxu0 0.0
  %1054 = vmatpush.msra.mxu0 0.0
  %1055 = vmatpush.msra.mxu0 0.0
  %1056 = vmatpush.msra.mxu0 0.0
  %1057 = vmatpush.msra.mxu0 0.0
  %1058 = vmatpush.msra.mxu0 0.0
  %1059 = vmatpush.msra.mxu0 0.0
  %1060 = vmatpush.msra.mxu0 0.0
  %1061 = vmatpush.msra.mxu0 %v93
  %1062 = vmatpush.msra.mxu0 %v92
  %1063 = vmatpush.msra.mxu0 %v91
  %1064 = vmatpush.msra.mxu0 %v90
  %1065 = vmatmul.f32.gmra.mxu0 %v1041
  %v1066 = vpop.f32.mrf.mxu0
  %v1067 = vadd.f32 %v1038, %v1066
  %1068 = vmatmul.f32.gmra.mxu0 %v1044
  %v1069 = vpop.f32.mrf.mxu0
  %v1070 = vadd.f32 %v1038, %v1069
  %1071 = vmatmul.f32.gmra.mxu0 %v1047
  %v1072 = vpop.f32.mrf.mxu0
  %v1073 = vadd.f32 %v1038, %v1072
  %1074 = vdwg.mxu0
  %v1075 = vmul.f32 %v1067, 0.5
  %v1076 = vmul.f32 %v1070, 0.5
  %v1077 = vmul.f32 %v1073, 0.5
  %v1078 = vmul.f32 %v1067, 0.044715
  %v1079 = vmul.f32 %v1070, 0.044715
  %v1080 = vmul.f32 %v1073, 0.044715
  %v1081 = vmul.f32 %v1078, %v1067
  %v1082 = vmul.f32 %v1079, %v1070
  %v1083 = vmul.f32 %v1080, %v1073
  %v1084 = vmul.f32 %v1081, %v1067
  %v1085 = vmul.f32 %v1082, %v1070
  %v1086 = vmul.f32 %v1083, %v1073
  %v1087 = vadd.f32 %v1067, %v1084
  %v1088 = vadd.f32 %v1070, %v1085
  %v1089 = vadd.f32 %v1073, %v1086
  %v1090 = vmul.f32 %v1087, 0.7978846
  %v1091 = vmul.f32 %v1088, 0.7978846
  %v1092 = vmul.f32 %v1089, 0.7978846
  %v1093 = vtanh.pop %v1090
  %v1094 = vtanh.pop %v1091
  %v1095 = vtanh.pop %v1092
  %v1096 = vadd.f32 %v1093, 1.0
  %v1097 = vadd.f32 %v1094, 1.0
  %v1098 = vadd.f32 %v1095, 1.0
  %v1099 = vmul.f32 %v1075, %v1096
  %v1100 = vmul.f32 %v1076, %v1097
  %v1101 = vmul.f32 %v1077, %v1098
  %v1103 = vperm.slane %v103, 0
  %v1106 = vsel %vm118, %v1099, 0
  %v1109 = vsel %vm118, %v1100, 0
  %v1112 = vsel %vm118, %v1101, 0
  %1114 = vmatpush.msra.mxu0 0.0
  %1115 = vmatpush.msra.mxu0 0.0
  %1116 = vmatpush.msra.mxu0 0.0
  %1117 = vmatpush.msra.mxu0 0.0
  %1118 = vmatpush.msra.mxu0 0.0
  %1119 = vmatpush.msra.mxu0 0.0
  %1120 = vmatpush.msra.mxu0 0.0
  %1121 = vmatpush.msra.mxu0 0.0
  %1122 = vmatpush.msra.mxu0 %v102
  %1123 = vmatpush.msra.mxu0 %v101
  %1124 = vmatpush.msra.mxu0 %v100
  %1125 = vmatpush.msra.mxu0 %v99
  %1126 = vmatpush.msra.mxu0 %v98
  %1127 = vmatpush.msra.mxu0 %v97
  %1128 = vmatpush.msra.mxu0 %v96
  %1129 = vmatpush.msra.mxu0 %v95
  %1130 = vmatmul.f32.gmra.mxu0 %v1106
  %v1131 = vpop.f32.mrf.mxu0
  %v1132 = vadd.f32 %v1103, %v1131
  %1133 = vmatmul.f32.gmra.mxu0 %v1109
  %v1134 = vpop.f32.mrf.mxu0
  %v1135 = vadd.f32 %v1103, %v1134
  %1136 = vmatmul.f32.gmra.mxu0 %v1112
  %v1137 = vpop.f32.mrf.mxu0
  %v1138 = vadd.f32 %v1103, %v1137
  %1139 = vdwg.mxu0
  %v1140 = vadd.f32 %v956, %v1132
  %v1141 = vadd.f32 %v957, %v1135
  %v1142 = vadd.f32 %v958, %v1138
  %vm1143 = vcmask 261121
  %v1144 = vsel %vm1143, %v1140, 0.0
  %1145 = vadd.xlane.f32.xlu0 %v1144
  %v1146 = vpop.xlane.xlu0 %1145
  %v1147 = vsel %vm154, %v1141, 0.0
  %1148 = vadd.xlane.f32.xlu0 %v1147
  %v1149 = vpop.xlane.xlu0 %1148
  %v1150 = vsel %vm161, %v1142, 0.0
  %1151 = vadd.xlane.f32.xlu0 %v1150
  %v1152 = vpop.xlane.xlu0 %1151
  %v1153 = vmul.f32 %v1146, %v171
  %v1154 = vmul.f32 %v1149, %v171
  %v1155 = vmul.f32 %v1152, %v171
  %v1156 = vsub.f32 %v1140, %v1153
  %v1157 = vsub.f32 %v1141, %v1154
  %v1158 = vsub.f32 %v1142, %v1155
  %v1159 = vmul.f32 %v1156, %v1156
  %v1160 = vmul.f32 %v1157, %v1157
  %v1161 = vmul.f32 %v1158, %v1158
  %v1162 = vsel %vm1143, %v1159, 0.0
  %1163 = vadd.xlane.f32.xlu0 %v1162
  %v1164 = vpop.xlane.xlu0 %1163
  %v1165 = vsel %vm154, %v1160, 0.0
  %1166 = vadd.xlane.f32.xlu0 %v1165
  %v1167 = vpop.xlane.xlu0 %1166
  %v1168 = vsel %vm161, %v1161, 0.0
  %1169 = vadd.xlane.f32.xlu0 %v1168
  %v1170 = vpop.xlane.xlu0 %1169
  %v1171 = vmul.f32 %v1164, %v171
  %v1172 = vmul.f32 %v1167, %v171
  %v1173 = vmul.f32 %v1170, %v171
  %v1174 = vadd.f32 %v1171, 1e-05
  %v1175 = vadd.f32 %v1172, 1e-05
  %v1176 = vadd.f32 %v1173, 1e-05
  %v1177 = vrsqrt.pop %v1174
  %v1178 = vmul.f32 %v1177, %v1174
  %v1179 = vmul.f32 %v1178, %v1177
  %v1180 = vmul.f32 0.5, %v1179
  %v1181 = vsub.f32 1.5, %v1180
  %v1182 = vmul.f32 %v1177, %v1181
  %vm1183 = vweird.f32 %v1174
  %vm1184 = vweird.f32 %v1177
  %vm1185 = vmor %vm1183, %vm1184
  %v1186 = vsel %vm1185, %v1177, %v1182
  %v1187 = vrsqrt.pop %v1175
  %v1188 = vmul.f32 %v1187, %v1175
  %v1189 = vmul.f32 %v1188, %v1187
  %v1190 = vmul.f32 0.5, %v1189
  %v1191 = vsub.f32 1.5, %v1190
  %v1192 = vmul.f32 %v1187, %v1191
  %vm1193 = vweird.f32 %v1175
  %vm1194 = vweird.f32 %v1187
  %vm1195 = vmor %vm1193, %vm1194
  %v1196 = vsel %vm1195, %v1187, %v1192
  %v1197 = vrsqrt.pop %v1176
  %v1198 = vmul.f32 %v1197, %v1176
  %v1199 = vmul.f32 %v1198, %v1197
  %v1200 = vmul.f32 0.5, %v1199
  %v1201 = vsub.f32 1.5, %v1200
  %v1202 = vmul.f32 %v1197, %v1201
  %vm1203 = vweird.f32 %v1176
  %vm1204 = vweird.f32 %v1197
  %vm1205 = vmor %vm1203, %vm1204
  %v1206 = vsel %vm1205, %v1197, %v1202
  %v1207 = vmul.f32 %v1156, %v1186
  %v1208 = vmul.f32 %v1157, %v1196
  %v1209 = vmul.f32 %v1158, %v1206
  %v1211 = vperm.slane %v104, 0
  %v1213 = vmul.f32 %v1207, %v1211
  %v1214 = vmul.f32 %v1208, %v1211
  %v1215 = vmul.f32 %v1209, %v1211
  %v1217 = vperm.slane %v105, 0
  %v1219 = vadd.f32 %v1213, %v1217
  %v1220 = vadd.f32 %v1214, %v1217
  %v1221 = vadd.f32 %v1215, %v1217
  %v1223 = vperm.slane %v110, 0
  %vm1228 = vcmask 1046528
  %v1229 = vrot.slane %v1219, 1
  %v1230 = vrot.slane %v1220, 1
  %v1231 = vsel %vm1228, %v1229, %v1230
  %v1232 = vrot.slane %v1221, 1
  %v1233 = vsel %vm1228, %v1230, %v1232
  %v1234 = vsel %vm154, %v1231, 0
  %v1236 = vsel %vm154, %v1233, 0
  %1238 = vmatpush.msra.mxu0 0.0
  %1239 = vmatpush.msra.mxu0 0.0
  %1240 = vmatpush.msra.mxu0 0.0
  %1241 = vmatpush.msra.mxu0 0.0
  %1242 = vmatpush.msra.mxu0 0.0
  %1243 = vmatpush.msra.mxu0 0.0
  %1244 = vmatpush.msra.mxu0 0.0
  %1245 = vmatpush.msra.mxu0 0.0
  %1246 = vmatpush.msra.mxu0 0.0
  %1247 = vmatpush.msra.mxu0 0.0
  %1248 = vmatpush.msra.mxu0 0.0
  %1249 = vmatpush.msra.mxu0 0.0
  %1250 = vmatpush.msra.mxu0 %v109
  %1251 = vmatpush.msra.mxu0 %v108
  %1252 = vmatpush.msra.mxu0 %v107
  %1253 = vmatpush.msra.mxu0 %v106
  %1254 = vmatmul.f32.gmra.mxu0 %v1234
  %v1255 = vpop.f32.mrf.mxu0
  %v1256 = vadd.f32 %v1223, %v1255
  %1257 = vmatmul.f32.gmra.mxu0 %v1236
  %v1258 = vpop.f32.mrf.mxu0
  %v1259 = vadd.f32 %v1223, %v1258
  %1260 = vdwg.mxu0
  %1262 = vset.pattern.permute.xlu0 0
  %1263 = vperm.xlu0 %1262, %v1256
  %v1264 = vpop.permute.xlu0 %1263
  %1267 = vset.pattern.permute.xlu0 0
  %1268 = vperm.xlu0 %1267, %v1259
  %v1269 = vpop.permute.xlu0 %1268
  %v1271 = vmul.f32 %v1264, %v111
  %v1272 = vmul.f32 %v1264, %v112
  %v1273 = vmul.f32 %v1269, %v113
  %v1274 = vmul.f32 %v1269, %v114
  %v1275 = vadd.f32 %v1271, %v1273
  %v1276 = vrot.slane %v1275, 4
  %v1277 = vadd.f32 %v1275, %v1276
  %v1278 = vrot.slane %v1277, 2
  %v1279 = vadd.f32 %v1277, %v1278
  %v1280 = vrot.slane %v1279, 1
  %v1281 = vadd.f32 %v1279, %v1280
  %v1282 = vadd.f32 %v1272, %v1274
  %v1283 = vrot.slane %v1282, 4
  %v1284 = vadd.f32 %v1282, %v1283
  %v1285 = vrot.slane %v1284, 2
  %v1286 = vadd.f32 %v1284, %v1285
  %v1287 = vrot.slane %v1286, 1
  %v1288 = vadd.f32 %v1286, %v1287
  %v1291 = vrot.slane %v1288, 7
  %v1292 = vsel %vm382, %v1281, %v1291
  %v1294 = vlaneseq
  %vm1295 = vcmp.ge.s32.totalorder %v1294, 0
  %vm1296 = vcmp.lt.s32.totalorder %v1294, 256
  %vm1297 = vmand %vm1295, %vm1296
  %1298 = vst.msk [vmem:[%s20] ss:$8 sm:$0x3] %vm1297, %v1292
  %1299 = vst.msk [vmem:[%s20] ss:$8 sm:$0x0] %vm1297, %v1292
  %1300 = vset.pattern.permute.xlu0 1
  %1301 = vperm.xlu0 %1300, %v1256
  %v1302 = vpop.permute.xlu0 %1301
  %1304 = vset.pattern.permute.xlu0 1
  %1305 = vperm.xlu0 %1304, %v1259
  %v1306 = vpop.permute.xlu0 %1305
  %v1308 = vmul.f32 %v1302, %v111
  %v1309 = vmul.f32 %v1302, %v112
  %v1310 = vmul.f32 %v1306, %v113
  %v1311 = vmul.f32 %v1306, %v114
  %v1312 = vadd.f32 %v1308, %v1310
  %v1313 = vrot.slane %v1312, 4
  %v1314 = vadd.f32 %v1312, %v1313
  %v1315 = vrot.slane %v1314, 2
  %v1316 = vadd.f32 %v1314, %v1315
  %v1317 = vrot.slane %v1316, 1
  %v1318 = vadd.f32 %v1316, %v1317
  %v1319 = vadd.f32 %v1309, %v1311
  %v1320 = vrot.slane %v1319, 4
  %v1321 = vadd.f32 %v1319, %v1320
  %v1322 = vrot.slane %v1321, 2
  %v1323 = vadd.f32 %v1321, %v1322
  %v1324 = vrot.slane %v1323, 1
  %v1325 = vadd.f32 %v1323, %v1324
  %v1328 = vrot.slane %v1325, 7
  %v1329 = vsel %vm382, %v1318, %v1328
  %s1331 = scalar_lea.vmem %s20, 1
  %1332 = vst.msk [vmem:[%s1331] ss:$8 sm:$0x3] %vm1297, %v1329
  %1333 = vst.msk [vmem:[%s1331] ss:$8 sm:$0x0] %vm1297, %v1329
  %1334 = vset.pattern.permute.xlu0 2
  %1335 = vperm.xlu0 %1334, %v1256
  %v1336 = vpop.permute.xlu0 %1335
  %1338 = vset.pattern.permute.xlu0 2
  %1339 = vperm.xlu0 %1338, %v1259
  %v1340 = vpop.permute.xlu0 %1339
  %v1342 = vmul.f32 %v1336, %v111
  %v1343 = vmul.f32 %v1336, %v112
  %v1344 = vmul.f32 %v1340, %v113
  %v1345 = vmul.f32 %v1340, %v114
  %v1346 = vadd.f32 %v1342, %v1344
  %v1347 = vrot.slane %v1346, 4
  %v1348 = vadd.f32 %v1346, %v1347
  %v1349 = vrot.slane %v1348, 2
  %v1350 = vadd.f32 %v1348, %v1349
  %v1351 = vrot.slane %v1350, 1
  %v1352 = vadd.f32 %v1350, %v1351
  %v1353 = vadd.f32 %v1343, %v1345
  %v1354 = vrot.slane %v1353, 4
  %v1355 = vadd.f32 %v1353, %v1354
  %v1356 = vrot.slane %v1355, 2
  %v1357 = vadd.f32 %v1355, %v1356
  %v1358 = vrot.slane %v1357, 1
  %v1359 = vadd.f32 %v1357, %v1358
  %v1362 = vrot.slane %v1359, 7
  %v1363 = vsel %vm382, %v1352, %v1362
  %s1365 = scalar_lea.vmem %s20, 2
  %1366 = vst.msk [vmem:[%s1365] ss:$8 sm:$0x3] %vm1297, %v1363
  %1367 = vst.msk [vmem:[%s1365] ss:$8 sm:$0x0] %vm1297, %v1363
  %1368 = vset.pattern.permute.xlu0 3
  %1369 = vperm.xlu0 %1368, %v1256
  %v1370 = vpop.permute.xlu0 %1369
  %1372 = vset.pattern.permute.xlu0 3
  %1373 = vperm.xlu0 %1372, %v1259
  %v1374 = vpop.permute.xlu0 %1373
  %v1376 = vmul.f32 %v1370, %v111
  %v1377 = vmul.f32 %v1370, %v112
  %v1378 = vmul.f32 %v1374, %v113
  %v1379 = vmul.f32 %v1374, %v114
  %v1380 = vadd.f32 %v1376, %v1378
  %v1381 = vrot.slane %v1380, 4
  %v1382 = vadd.f32 %v1380, %v1381
  %v1383 = vrot.slane %v1382, 2
  %v1384 = vadd.f32 %v1382, %v1383
  %v1385 = vrot.slane %v1384, 1
  %v1386 = vadd.f32 %v1384, %v1385
  %v1387 = vadd.f32 %v1377, %v1379
  %v1388 = vrot.slane %v1387, 4
  %v1389 = vadd.f32 %v1387, %v1388
  %v1390 = vrot.slane %v1389, 2
  %v1391 = vadd.f32 %v1389, %v1390
  %v1392 = vrot.slane %v1391, 1
  %v1393 = vadd.f32 %v1391, %v1392
  %v1396 = vrot.slane %v1393, 7
  %v1397 = vsel %vm382, %v1386, %v1396
  %s1399 = scalar_lea.vmem %s20, 3
  %1400 = vst.msk [vmem:[%s1399] ss:$8 sm:$0x3] %vm1297, %v1397
  %1401 = vst.msk [vmem:[%s1399] ss:$8 sm:$0x0] %vm1297, %v1397
  %s1402 = scalar_lea.vmem %s0, 24
  %v1403 = vld [vmem:[%s1402] sm:$0xff]
  %v1404 = vld [vmem:[%s1402 + $0x8] sm:$0xff]
  %v1405 = vld [vmem:[%s1402 + $0x10] sm:$0x1]
  %v1407 = vsel %vm118, %v1403, 0
  %v1410 = vsel %vm118, %v1404, 0
  %v1413 = vsel %vm118, %v1405, 0
  %1415 = vmatpush.msra.mxu0 0.0
  %1416 = vmatpush.msra.mxu0 0.0
  %1417 = vmatpush.msra.mxu0 0.0
  %1418 = vmatpush.msra.mxu0 0.0
  %1419 = vmatpush.msra.mxu0 0.0
  %1420 = vmatpush.msra.mxu0 0.0
  %1421 = vmatpush.msra.mxu0 0.0
  %1422 = vmatpush.msra.mxu0 0.0
  %1423 = vmatpush.msra.mxu0 %v72
  %1424 = vmatpush.msra.mxu0 %v71
  %1425 = vmatpush.msra.mxu0 %v70
  %1426 = vmatpush.msra.mxu0 %v69
  %1427 = vmatpush.msra.mxu0 %v68
  %1428 = vmatpush.msra.mxu0 %v67
  %1429 = vmatpush.msra.mxu0 %v66
  %1430 = vmatpush.msra.mxu0 %v65
  %1431 = vmatmul.f32.gmra.mxu0 %v1407
  %v1432 = vpop.f32.mrf.mxu0
  %v1433 = vadd.f32 %v73, %v1432
  %1434 = vmatmul.f32.gmra.mxu0 %v1410
  %v1435 = vpop.f32.mrf.mxu0
  %v1436 = vadd.f32 %v74, %v1435
  %1437 = vmatmul.f32.gmra.mxu0 %v1413
  %v1438 = vpop.f32.mrf.mxu0
  %v1439 = vadd.f32 %v75, %v1438
  %1440 = vdwg.mxu0
  %v1441 = vsel %vm154, %v1433, 0.0
  %1442 = vadd.xlane.f32.xlu0 %v1441
  %v1443 = vpop.xlane.xlu0 %1442
  %v1444 = vsel %vm154, %v1436, 0.0
  %1445 = vadd.xlane.f32.xlu0 %v1444
  %v1446 = vpop.xlane.xlu0 %1445
  %v1447 = vsel %vm161, %v1439, 0.0
  %1448 = vadd.xlane.f32.xlu0 %v1447
  %v1449 = vpop.xlane.xlu0 %1448
  %v1450 = vmul.f32 %v1443, %v171
  %v1451 = vmul.f32 %v1446, %v171
  %v1452 = vmul.f32 %v1449, %v171
  %v1453 = vsub.f32 %v1433, %v1450
  %v1454 = vsub.f32 %v1436, %v1451
  %v1455 = vsub.f32 %v1439, %v1452
  %v1456 = vmul.f32 %v1453, %v1453
  %v1457 = vmul.f32 %v1454, %v1454
  %v1458 = vmul.f32 %v1455, %v1455
  %v1459 = vsel %vm154, %v1456, 0.0
  %1460 = vadd.xlane.f32.xlu0 %v1459
  %v1461 = vpop.xlane.xlu0 %1460
  %v1462 = vsel %vm154, %v1457, 0.0
  %1463 = vadd.xlane.f32.xlu0 %v1462
  %v1464 = vpop.xlane.xlu0 %1463
  %v1465 = vsel %vm161, %v1458, 0.0
  %1466 = vadd.xlane.f32.xlu0 %v1465
  %v1467 = vpop.xlane.xlu0 %1466
  %v1468 = vmul.f32 %v1461, %v171
  %v1469 = vmul.f32 %v1464, %v171
  %v1470 = vmul.f32 %v1467, %v171
  %v1471 = vadd.f32 %v1468, 1e-06
  %v1472 = vadd.f32 %v1469, 1e-06
  %v1473 = vadd.f32 %v1470, 1e-06
  %v1474 = vrsqrt.pop %v1471
  %v1475 = vmul.f32 %v1474, %v1471
  %v1476 = vmul.f32 %v1475, %v1474
  %v1477 = vmul.f32 0.5, %v1476
  %v1478 = vsub.f32 1.5, %v1477
  %v1479 = vmul.f32 %v1474, %v1478
  %vm1480 = vweird.f32 %v1471
  %vm1481 = vweird.f32 %v1474
  %vm1482 = vmor %vm1480, %vm1481
  %v1483 = vsel %vm1482, %v1474, %v1479
  %v1484 = vrsqrt.pop %v1472
  %v1485 = vmul.f32 %v1484, %v1472
  %v1486 = vmul.f32 %v1485, %v1484
  %v1487 = vmul.f32 0.5, %v1486
  %v1488 = vsub.f32 1.5, %v1487
  %v1489 = vmul.f32 %v1484, %v1488
  %vm1490 = vweird.f32 %v1472
  %vm1491 = vweird.f32 %v1484
  %vm1492 = vmor %vm1490, %vm1491
  %v1493 = vsel %vm1492, %v1484, %v1489
  %v1494 = vrsqrt.pop %v1473
  %v1495 = vmul.f32 %v1494, %v1473
  %v1496 = vmul.f32 %v1495, %v1494
  %v1497 = vmul.f32 0.5, %v1496
  %v1498 = vsub.f32 1.5, %v1497
  %v1499 = vmul.f32 %v1494, %v1498
  %vm1500 = vweird.f32 %v1473
  %vm1501 = vweird.f32 %v1494
  %vm1502 = vmor %vm1500, %vm1501
  %v1503 = vsel %vm1502, %v1494, %v1499
  %v1504 = vmul.f32 %v1453, %v1483
  %v1505 = vmul.f32 %v1454, %v1493
  %v1506 = vmul.f32 %v1455, %v1503
  %v1507 = vmul.f32 %v1504, %v230
  %v1508 = vmul.f32 %v1505, %v230
  %v1509 = vmul.f32 %v1506, %v230
  %v1510 = vadd.f32 %v1507, %v236
  %v1511 = vadd.f32 %v1508, %v236
  %v1512 = vadd.f32 %v1509, %v236
  %v1514 = vsel %vm154, %v1510, 0
  %v1517 = vsel %vm154, %v1511, 0
  %v1520 = vsel %vm154, %v1512, 0
  %1522 = vmatpush.msra.mxu0 0.0
  %1523 = vmatpush.msra.mxu0 0.0
  %1524 = vmatpush.msra.mxu0 0.0
  %1525 = vmatpush.msra.mxu0 0.0
  %1526 = vmatpush.msra.mxu0 0.0
  %1527 = vmatpush.msra.mxu0 0.0
  %1528 = vmatpush.msra.mxu0 0.0
  %1529 = vmatpush.msra.mxu0 0.0
  %1530 = vmatpush.msra.mxu0 0.0
  %1531 = vmatpush.msra.mxu0 0.0
  %1532 = vmatpush.msra.mxu0 0.0
  %1533 = vmatpush.msra.mxu0 0.0
  %1534 = vmatpush.msra.mxu0 %v81
  %1535 = vmatpush.msra.mxu0 %v80
  %1536 = vmatpush.msra.mxu0 %v79
  %1537 = vmatpush.msra.mxu0 %v78
  %1538 = vmatmul.f32.gmra.mxu0 %v1514
  %v1539 = vpop.f32.mrf.mxu0
  %v1540 = vadd.f32 %v242, %v1539
  %1541 = vmatmul.f32.gmra.mxu0 %v1517
  %v1542 = vpop.f32.mrf.mxu0
  %v1543 = vadd.f32 %v242, %v1542
  %1544 = vmatmul.f32.gmra.mxu0 %v1520
  %v1545 = vpop.f32.mrf.mxu0
  %v1546 = vadd.f32 %v242, %v1545
  %1547 = vdwg.mxu0
  %1551 = vrot.lane.b32.xlu0 %v1540, 96
  %v1552 = vpop.permute.xlu0 %1551
  %1553 = vrot.lane.b32.xlu0 %v1543, 96
  %v1554 = vpop.permute.xlu0 %1553
  %1555 = vrot.lane.b32.xlu0 %v1546, 96
  %v1556 = vpop.permute.xlu0 %1555
  %v1557 = vsel %vm288, %v1540, 0
  %v1559 = vsel %vm288, %v1543, 0
  %v1561 = vsel %vm288, %v1546, 0
  %v1563 = vsel %vm288, %v1552, 0
  %v1565 = vsel %vm288, %v1554, 0
  %v1567 = vsel %vm288, %v1556, 0
  %1569 = vmatpush.xpose.msra.mxu0 0.0
  %1570 = vmatpush.xpose.msra.mxu0 0.0
  %1571 = vmatpush.xpose.msra.mxu0 0.0
  %1572 = vmatpush.xpose.msra.mxu0 0.0
  %1573 = vmatpush.xpose.msra.mxu0 0.0
  %1574 = vmatpush.xpose.msra.mxu0 0.0
  %1575 = vmatpush.xpose.msra.mxu0 0.0
  %1576 = vmatpush.xpose.msra.mxu0 0.0
  %1577 = vmatpush.xpose.msra.mxu0 0.0
  %1578 = vmatpush.xpose.msra.mxu0 0.0
  %1579 = vmatpush.xpose.msra.mxu0 0.0
  %1580 = vmatpush.xpose.msra.mxu0 0.0
  %1581 = vmatpush.xpose.msra.mxu0 0.0
  %1582 = vmatpush.xpose.msra.mxu0 %v1567
  %1583 = vmatpush.xpose.msra.mxu0 %v1565
  %1584 = vmatpush.xpose.msra.mxu0 %v1563
  %1585 = vmatmul.f32.gmra.mxu0 %v1557
  %v1586 = vpop.f32.mrf.mxu0
  %v1587 = vadd.f32 0.0, %v1586
  %1588 = vmatmul.f32.gmra.mxu0 %v1559
  %v1589 = vpop.f32.mrf.mxu0
  %v1590 = vadd.f32 0.0, %v1589
  %1591 = vmatmul.f32.gmra.mxu0 %v1561
  %v1592 = vpop.f32.mrf.mxu0
  %v1593 = vadd.f32 0.0, %v1592
  %1594 = vdwg.mxu0
  %v1595 = vmul.f32 %v1587, 0.35355338
  %v1596 = vmul.f32 %v1590, 0.35355338
  %v1597 = vmul.f32 %v1593, 0.35355338
  %v1598 = vsel %vm330, %v1595, -inf
  %1599 = vmax.xlane.f32.xlu0 %v1598
  %v1600 = vpop.xlane.xlu0 %1599
  %v1601 = vsel %vm330, %v1596, -inf
  %1602 = vmax.xlane.f32.xlu0 %v1601
  %v1603 = vpop.xlane.xlu0 %1602
  %v1604 = vsel %vm337, %v1597, -inf
  %1605 = vmax.xlane.f32.xlu0 %v1604
  %v1606 = vpop.xlane.xlu0 %1605
  %v1607 = vsub.f32 %v1595, %v1600
  %v1608 = vsub.f32 %v1596, %v1603
  %v1609 = vsub.f32 %v1597, %v1606
  %v1610 = vmul.f32 %v1607, 1.442695
  %v1611 = vpow.pop %v1610
  %v1612 = vmul.f32 %v1608, 1.442695
  %v1613 = vpow.pop %v1612
  %v1614 = vmul.f32 %v1609, 1.442695
  %v1615 = vpow.pop %v1614
  %v1616 = vsel %vm330, %v1611, 0.0
  %1617 = vadd.xlane.f32.xlu0 %v1616
  %v1618 = vpop.xlane.xlu0 %1617
  %v1619 = vsel %vm330, %v1613, 0.0
  %1620 = vadd.xlane.f32.xlu0 %v1619
  %v1621 = vpop.xlane.xlu0 %1620
  %v1622 = vsel %vm337, %v1615, 0.0
  %1623 = vadd.xlane.f32.xlu0 %v1622
  %v1624 = vpop.xlane.xlu0 %1623
  %v1625 = vrcp.pop %v1618
  %v1626 = vrcp.pop %v1621
  %v1627 = vrcp.pop %v1624
  %v1628 = vmul.f32 %v1611, %v1625
  %v1629 = vmul.f32 %v1613, %v1626
  %v1630 = vmul.f32 %v1615, %v1627
  %1631 = vrot.lane.b32.xlu0 %v1540, 64
  %v1632 = vpop.permute.xlu0 %1631
  %1633 = vrot.lane.b32.xlu0 %v1543, 64
  %v1634 = vpop.permute.xlu0 %1633
  %1635 = vrot.lane.b32.xlu0 %v1546, 64
  %v1636 = vpop.permute.xlu0 %1635
  %v1640 = vsel %vm330, %v1628, 0
  %v1643 = vsel %vm330, %v1629, 0
  %v1646 = vsel %vm330, %v1630, 0
  %v1648 = vsel %vm382, %v1636, 0
  %1650 = vmatpush.msra.mxu0 0.0
  %1651 = vmatpush.msra.mxu0 0.0
  %1652 = vmatpush.msra.mxu0 0.0
  %1653 = vmatpush.msra.mxu0 0.0
  %1654 = vmatpush.msra.mxu0 0.0
  %1655 = vmatpush.msra.mxu0 0.0
  %1656 = vmatpush.msra.mxu0 0.0
  %1657 = vmatpush.msra.mxu0 0.0
  %1658 = vmatpush.msra.mxu0 0.0
  %1659 = vmatpush.msra.mxu0 0.0
  %1660 = vmatpush.msra.mxu0 0.0
  %1661 = vmatpush.msra.mxu0 0.0
  %1662 = vmatpush.msra.mxu0 0.0
  %1663 = vmatpush.msra.mxu0 %v1648
  %1664 = vmatpush.msra.mxu0 %v1634
  %1665 = vmatpush.msra.mxu0 %v1632
  %1666 = vmatmul.f32.gmra.mxu0 %v1640
  %v1667 = vpop.f32.mrf.mxu0
  %v1668 = vadd.f32 0.0, %v1667
  %1669 = vmatmul.f32.gmra.mxu0 %v1643
  %v1670 = vpop.f32.mrf.mxu0
  %v1671 = vadd.f32 0.0, %v1670
  %1672 = vmatmul.f32.gmra.mxu0 %v1646
  %v1673 = vpop.f32.mrf.mxu0
  %v1674 = vadd.f32 0.0, %v1673
  %1675 = vdwg.mxu0
  %1676 = vrot.lane.b32.xlu0 %v1540, 120
  %v1677 = vpop.permute.xlu0 %1676
  %1678 = vrot.lane.b32.xlu0 %v1543, 120
  %v1679 = vpop.permute.xlu0 %1678
  %1680 = vrot.lane.b32.xlu0 %v1546, 120
  %v1681 = vpop.permute.xlu0 %1680
  %1682 = vrot.lane.b32.xlu0 %v1540, 88
  %v1683 = vpop.permute.xlu0 %1682
  %1684 = vrot.lane.b32.xlu0 %v1543, 88
  %v1685 = vpop.permute.xlu0 %1684
  %1686 = vrot.lane.b32.xlu0 %v1546, 88
  %v1687 = vpop.permute.xlu0 %1686
  %v1688 = vsel %vm288, %v1677, 0
  %v1690 = vsel %vm288, %v1679, 0
  %v1692 = vsel %vm288, %v1681, 0
  %v1694 = vsel %vm288, %v1683, 0
  %v1696 = vsel %vm288, %v1685, 0
  %v1698 = vsel %vm288, %v1687, 0
  %1700 = vmatpush.xpose.msra.mxu0 0.0
  %1701 = vmatpush.xpose.msra.mxu0 0.0
  %1702 = vmatpush.xpose.msra.mxu0 0.0
  %1703 = vmatpush.xpose.msra.mxu0 0.0
  %1704 = vmatpush.xpose.msra.mxu0 0.0
  %1705 = vmatpush.xpose.msra.mxu0 0.0
  %1706 = vmatpush.xpose.msra.mxu0 0.0
  %1707 = vmatpush.xpose.msra.mxu0 0.0
  %1708 = vmatpush.xpose.msra.mxu0 0.0
  %1709 = vmatpush.xpose.msra.mxu0 0.0
  %1710 = vmatpush.xpose.msra.mxu0 0.0
  %1711 = vmatpush.xpose.msra.mxu0 0.0
  %1712 = vmatpush.xpose.msra.mxu0 0.0
  %1713 = vmatpush.xpose.msra.mxu0 %v1698
  %1714 = vmatpush.xpose.msra.mxu0 %v1696
  %1715 = vmatpush.xpose.msra.mxu0 %v1694
  %1716 = vmatmul.f32.gmra.mxu0 %v1688
  %v1717 = vpop.f32.mrf.mxu0
  %v1718 = vadd.f32 0.0, %v1717
  %1719 = vmatmul.f32.gmra.mxu0 %v1690
  %v1720 = vpop.f32.mrf.mxu0
  %v1721 = vadd.f32 0.0, %v1720
  %1722 = vmatmul.f32.gmra.mxu0 %v1692
  %v1723 = vpop.f32.mrf.mxu0
  %v1724 = vadd.f32 0.0, %v1723
  %1725 = vdwg.mxu0
  %v1726 = vmul.f32 %v1718, 0.35355338
  %v1727 = vmul.f32 %v1721, 0.35355338
  %v1728 = vmul.f32 %v1724, 0.35355338
  %v1729 = vsel %vm330, %v1726, -inf
  %1730 = vmax.xlane.f32.xlu0 %v1729
  %v1731 = vpop.xlane.xlu0 %1730
  %v1732 = vsel %vm330, %v1727, -inf
  %1733 = vmax.xlane.f32.xlu0 %v1732
  %v1734 = vpop.xlane.xlu0 %1733
  %v1735 = vsel %vm337, %v1728, -inf
  %1736 = vmax.xlane.f32.xlu0 %v1735
  %v1737 = vpop.xlane.xlu0 %1736
  %v1738 = vsub.f32 %v1726, %v1731
  %v1739 = vsub.f32 %v1727, %v1734
  %v1740 = vsub.f32 %v1728, %v1737
  %v1741 = vmul.f32 %v1738, 1.442695
  %v1742 = vpow.pop %v1741
  %v1743 = vmul.f32 %v1739, 1.442695
  %v1744 = vpow.pop %v1743
  %v1745 = vmul.f32 %v1740, 1.442695
  %v1746 = vpow.pop %v1745
  %v1747 = vsel %vm330, %v1742, 0.0
  %1748 = vadd.xlane.f32.xlu0 %v1747
  %v1749 = vpop.xlane.xlu0 %1748
  %v1750 = vsel %vm330, %v1744, 0.0
  %1751 = vadd.xlane.f32.xlu0 %v1750
  %v1752 = vpop.xlane.xlu0 %1751
  %v1753 = vsel %vm337, %v1746, 0.0
  %1754 = vadd.xlane.f32.xlu0 %v1753
  %v1755 = vpop.xlane.xlu0 %1754
  %v1756 = vrcp.pop %v1749
  %v1757 = vrcp.pop %v1752
  %v1758 = vrcp.pop %v1755
  %v1759 = vmul.f32 %v1742, %v1756
  %v1760 = vmul.f32 %v1744, %v1757
  %v1761 = vmul.f32 %v1746, %v1758
  %1762 = vrot.lane.b32.xlu0 %v1540, 56
  %v1763 = vpop.permute.xlu0 %1762
  %1764 = vrot.lane.b32.xlu0 %v1543, 56
  %v1765 = vpop.permute.xlu0 %1764
  %1766 = vrot.lane.b32.xlu0 %v1546, 56
  %v1767 = vpop.permute.xlu0 %1766
  %v1771 = vsel %vm330, %v1759, 0
  %v1774 = vsel %vm330, %v1760, 0
  %v1777 = vsel %vm330, %v1761, 0
  %v1779 = vsel %vm382, %v1767, 0
  %1781 = vmatpush.msra.mxu0 0.0
  %1782 = vmatpush.msra.mxu0 0.0
  %1783 = vmatpush.msra.mxu0 0.0
  %1784 = vmatpush.msra.mxu0 0.0
  %1785 = vmatpush.msra.mxu0 0.0
  %1786 = vmatpush.msra.mxu0 0.0
  %1787 = vmatpush.msra.mxu0 0.0
  %1788 = vmatpush.msra.mxu0 0.0
  %1789 = vmatpush.msra.mxu0 0.0
  %1790 = vmatpush.msra.mxu0 0.0
  %1791 = vmatpush.msra.mxu0 0.0
  %1792 = vmatpush.msra.mxu0 0.0
  %1793 = vmatpush.msra.mxu0 0.0
  %1794 = vmatpush.msra.mxu0 %v1779
  %1795 = vmatpush.msra.mxu0 %v1765
  %1796 = vmatpush.msra.mxu0 %v1763
  %1797 = vmatmul.f32.gmra.mxu0 %v1771
  %v1798 = vpop.f32.mrf.mxu0
  %v1799 = vadd.f32 0.0, %v1798
  %1800 = vmatmul.f32.gmra.mxu0 %v1774
  %v1801 = vpop.f32.mrf.mxu0
  %v1802 = vadd.f32 0.0, %v1801
  %1803 = vmatmul.f32.gmra.mxu0 %v1777
  %v1804 = vpop.f32.mrf.mxu0
  %v1805 = vadd.f32 0.0, %v1804
  %1806 = vdwg.mxu0
  %v1808 = vsel %vm288, %v1799, 0
  %v1811 = vsel %vm288, %v1802, 0
  %v1814 = vsel %vm288, %v1805, 0
  %1816 = vmatpush.msra.mxu0 0.0
  %1817 = vmatpush.msra.mxu0 0.0
  %1818 = vmatpush.msra.mxu0 0.0
  %1819 = vmatpush.msra.mxu0 0.0
  %1820 = vmatpush.msra.mxu0 0.0
  %1821 = vmatpush.msra.mxu0 0.0
  %1822 = vmatpush.msra.mxu0 0.0
  %1823 = vmatpush.msra.mxu0 0.0
  %1824 = vmatpush.msra.mxu0 0.0
  %1825 = vmatpush.msra.mxu0 0.0
  %1826 = vmatpush.msra.mxu0 0.0
  %1827 = vmatpush.msra.mxu0 0.0
  %1828 = vmatpush.msra.mxu0 0.0
  %1829 = vmatpush.msra.mxu0 0.0
  %1830 = vmatpush.msra.mxu0 0.0
  %1831 = vmatpush.msra.mxu0 %v84
  %1832 = vmatmul.f32.gmra.mxu0 %v1808
  %v1833 = vpop.f32.mrf.mxu0
  %v1834 = vadd.f32 0.0, %v1833
  %1835 = vmatmul.f32.gmra.mxu0 %v1811
  %v1836 = vpop.f32.mrf.mxu0
  %v1837 = vadd.f32 0.0, %v1836
  %1838 = vmatmul.f32.gmra.mxu0 %v1814
  %v1839 = vpop.f32.mrf.mxu0
  %v1840 = vadd.f32 0.0, %v1839
  %1841 = vdwg.mxu0
  %v1843 = vsel %vm288, %v1668, 0
  %v1846 = vsel %vm288, %v1671, 0
  %v1849 = vsel %vm288, %v1674, 0
  %1851 = vmatpush.msra.mxu0 0.0
  %1852 = vmatpush.msra.mxu0 0.0
  %1853 = vmatpush.msra.mxu0 0.0
  %1854 = vmatpush.msra.mxu0 0.0
  %1855 = vmatpush.msra.mxu0 0.0
  %1856 = vmatpush.msra.mxu0 0.0
  %1857 = vmatpush.msra.mxu0 0.0
  %1858 = vmatpush.msra.mxu0 0.0
  %1859 = vmatpush.msra.mxu0 0.0
  %1860 = vmatpush.msra.mxu0 0.0
  %1861 = vmatpush.msra.mxu0 0.0
  %1862 = vmatpush.msra.mxu0 0.0
  %1863 = vmatpush.msra.mxu0 0.0
  %1864 = vmatpush.msra.mxu0 0.0
  %1865 = vmatpush.msra.mxu0 0.0
  %1866 = vmatpush.msra.mxu0 %v83
  %1867 = vmatmul.f32.gmra.mxu0 %v1843
  %v1868 = vpop.f32.mrf.mxu0
  %v1869 = vadd.f32 %v1834, %v1868
  %1870 = vmatmul.f32.gmra.mxu0 %v1846
  %v1871 = vpop.f32.mrf.mxu0
  %v1872 = vadd.f32 %v1837, %v1871
  %1873 = vmatmul.f32.gmra.mxu0 %v1849
  %v1874 = vpop.f32.mrf.mxu0
  %v1875 = vadd.f32 %v1840, %v1874
  %1876 = vdwg.mxu0
  %1877 = vrot.lane.b32.xlu0 %v1540, 112
  %v1878 = vpop.permute.xlu0 %1877
  %1879 = vrot.lane.b32.xlu0 %v1543, 112
  %v1880 = vpop.permute.xlu0 %1879
  %1881 = vrot.lane.b32.xlu0 %v1546, 112
  %v1882 = vpop.permute.xlu0 %1881
  %1883 = vrot.lane.b32.xlu0 %v1540, 80
  %v1884 = vpop.permute.xlu0 %1883
  %1885 = vrot.lane.b32.xlu0 %v1543, 80
  %v1886 = vpop.permute.xlu0 %1885
  %1887 = vrot.lane.b32.xlu0 %v1546, 80
  %v1888 = vpop.permute.xlu0 %1887
  %v1889 = vsel %vm288, %v1878, 0
  %v1891 = vsel %vm288, %v1880, 0
  %v1893 = vsel %vm288, %v1882, 0
  %v1895 = vsel %vm288, %v1884, 0
  %v1897 = vsel %vm288, %v1886, 0
  %v1899 = vsel %vm288, %v1888, 0
  %1901 = vmatpush.xpose.msra.mxu0 0.0
  %1902 = vmatpush.xpose.msra.mxu0 0.0
  %1903 = vmatpush.xpose.msra.mxu0 0.0
  %1904 = vmatpush.xpose.msra.mxu0 0.0
  %1905 = vmatpush.xpose.msra.mxu0 0.0
  %1906 = vmatpush.xpose.msra.mxu0 0.0
  %1907 = vmatpush.xpose.msra.mxu0 0.0
  %1908 = vmatpush.xpose.msra.mxu0 0.0
  %1909 = vmatpush.xpose.msra.mxu0 0.0
  %1910 = vmatpush.xpose.msra.mxu0 0.0
  %1911 = vmatpush.xpose.msra.mxu0 0.0
  %1912 = vmatpush.xpose.msra.mxu0 0.0
  %1913 = vmatpush.xpose.msra.mxu0 0.0
  %1914 = vmatpush.xpose.msra.mxu0 %v1899
  %1915 = vmatpush.xpose.msra.mxu0 %v1897
  %1916 = vmatpush.xpose.msra.mxu0 %v1895
  %1917 = vmatmul.f32.gmra.mxu0 %v1889
  %v1918 = vpop.f32.mrf.mxu0
  %v1919 = vadd.f32 0.0, %v1918
  %1920 = vmatmul.f32.gmra.mxu0 %v1891
  %v1921 = vpop.f32.mrf.mxu0
  %v1922 = vadd.f32 0.0, %v1921
  %1923 = vmatmul.f32.gmra.mxu0 %v1893
  %v1924 = vpop.f32.mrf.mxu0
  %v1925 = vadd.f32 0.0, %v1924
  %1926 = vdwg.mxu0
  %v1927 = vmul.f32 %v1919, 0.35355338
  %v1928 = vmul.f32 %v1922, 0.35355338
  %v1929 = vmul.f32 %v1925, 0.35355338
  %v1930 = vsel %vm330, %v1927, -inf
  %1931 = vmax.xlane.f32.xlu0 %v1930
  %v1932 = vpop.xlane.xlu0 %1931
  %v1933 = vsel %vm330, %v1928, -inf
  %1934 = vmax.xlane.f32.xlu0 %v1933
  %v1935 = vpop.xlane.xlu0 %1934
  %v1936 = vsel %vm337, %v1929, -inf
  %1937 = vmax.xlane.f32.xlu0 %v1936
  %v1938 = vpop.xlane.xlu0 %1937
  %v1939 = vsub.f32 %v1927, %v1932
  %v1940 = vsub.f32 %v1928, %v1935
  %v1941 = vsub.f32 %v1929, %v1938
  %v1942 = vmul.f32 %v1939, 1.442695
  %v1943 = vpow.pop %v1942
  %v1944 = vmul.f32 %v1940, 1.442695
  %v1945 = vpow.pop %v1944
  %v1946 = vmul.f32 %v1941, 1.442695
  %v1947 = vpow.pop %v1946
  %v1948 = vsel %vm330, %v1943, 0.0
  %1949 = vadd.xlane.f32.xlu0 %v1948
  %v1950 = vpop.xlane.xlu0 %1949
  %v1951 = vsel %vm330, %v1945, 0.0
  %1952 = vadd.xlane.f32.xlu0 %v1951
  %v1953 = vpop.xlane.xlu0 %1952
  %v1954 = vsel %vm337, %v1947, 0.0
  %1955 = vadd.xlane.f32.xlu0 %v1954
  %v1956 = vpop.xlane.xlu0 %1955
  %v1957 = vrcp.pop %v1950
  %v1958 = vrcp.pop %v1953
  %v1959 = vrcp.pop %v1956
  %v1960 = vmul.f32 %v1943, %v1957
  %v1961 = vmul.f32 %v1945, %v1958
  %v1962 = vmul.f32 %v1947, %v1959
  %1963 = vrot.lane.b32.xlu0 %v1540, 48
  %v1964 = vpop.permute.xlu0 %1963
  %1965 = vrot.lane.b32.xlu0 %v1543, 48
  %v1966 = vpop.permute.xlu0 %1965
  %1967 = vrot.lane.b32.xlu0 %v1546, 48
  %v1968 = vpop.permute.xlu0 %1967
  %v1972 = vsel %vm330, %v1960, 0
  %v1975 = vsel %vm330, %v1961, 0
  %v1978 = vsel %vm330, %v1962, 0
  %v1980 = vsel %vm382, %v1968, 0
  %1982 = vmatpush.msra.mxu0 0.0
  %1983 = vmatpush.msra.mxu0 0.0
  %1984 = vmatpush.msra.mxu0 0.0
  %1985 = vmatpush.msra.mxu0 0.0
  %1986 = vmatpush.msra.mxu0 0.0
  %1987 = vmatpush.msra.mxu0 0.0
  %1988 = vmatpush.msra.mxu0 0.0
  %1989 = vmatpush.msra.mxu0 0.0
  %1990 = vmatpush.msra.mxu0 0.0
  %1991 = vmatpush.msra.mxu0 0.0
  %1992 = vmatpush.msra.mxu0 0.0
  %1993 = vmatpush.msra.mxu0 0.0
  %1994 = vmatpush.msra.mxu0 0.0
  %1995 = vmatpush.msra.mxu0 %v1980
  %1996 = vmatpush.msra.mxu0 %v1966
  %1997 = vmatpush.msra.mxu0 %v1964
  %1998 = vmatmul.f32.gmra.mxu0 %v1972
  %v1999 = vpop.f32.mrf.mxu0
  %v2000 = vadd.f32 0.0, %v1999
  %2001 = vmatmul.f32.gmra.mxu0 %v1975
  %v2002 = vpop.f32.mrf.mxu0
  %v2003 = vadd.f32 0.0, %v2002
  %2004 = vmatmul.f32.gmra.mxu0 %v1978
  %v2005 = vpop.f32.mrf.mxu0
  %v2006 = vadd.f32 0.0, %v2005
  %2007 = vdwg.mxu0
  %v2009 = vsel %vm288, %v2000, 0
  %v2012 = vsel %vm288, %v2003, 0
  %v2015 = vsel %vm288, %v2006, 0
  %2017 = vmatpush.msra.mxu0 0.0
  %2018 = vmatpush.msra.mxu0 0.0
  %2019 = vmatpush.msra.mxu0 0.0
  %2020 = vmatpush.msra.mxu0 0.0
  %2021 = vmatpush.msra.mxu0 0.0
  %2022 = vmatpush.msra.mxu0 0.0
  %2023 = vmatpush.msra.mxu0 0.0
  %2024 = vmatpush.msra.mxu0 0.0
  %2025 = vmatpush.msra.mxu0 0.0
  %2026 = vmatpush.msra.mxu0 0.0
  %2027 = vmatpush.msra.mxu0 0.0
  %2028 = vmatpush.msra.mxu0 0.0
  %2029 = vmatpush.msra.mxu0 0.0
  %2030 = vmatpush.msra.mxu0 0.0
  %2031 = vmatpush.msra.mxu0 0.0
  %2032 = vmatpush.msra.mxu0 %v85
  %2033 = vmatmul.f32.gmra.mxu0 %v2009
  %v2034 = vpop.f32.mrf.mxu0
  %v2035 = vadd.f32 0.0, %v2034
  %2036 = vmatmul.f32.gmra.mxu0 %v2012
  %v2037 = vpop.f32.mrf.mxu0
  %v2038 = vadd.f32 0.0, %v2037
  %2039 = vmatmul.f32.gmra.mxu0 %v2015
  %v2040 = vpop.f32.mrf.mxu0
  %v2041 = vadd.f32 0.0, %v2040
  %2042 = vdwg.mxu0
  %v2043 = vadd.f32 %v1869, %v2035
  %v2044 = vadd.f32 %v1872, %v2038
  %v2045 = vadd.f32 %v1875, %v2041
  %2046 = vrot.lane.b32.xlu0 %v1540, 104
  %v2047 = vpop.permute.xlu0 %2046
  %2048 = vrot.lane.b32.xlu0 %v1543, 104
  %v2049 = vpop.permute.xlu0 %2048
  %2050 = vrot.lane.b32.xlu0 %v1546, 104
  %v2051 = vpop.permute.xlu0 %2050
  %2052 = vrot.lane.b32.xlu0 %v1540, 72
  %v2053 = vpop.permute.xlu0 %2052
  %2054 = vrot.lane.b32.xlu0 %v1543, 72
  %v2055 = vpop.permute.xlu0 %2054
  %2056 = vrot.lane.b32.xlu0 %v1546, 72
  %v2057 = vpop.permute.xlu0 %2056
  %v2058 = vsel %vm288, %v2047, 0
  %v2060 = vsel %vm288, %v2049, 0
  %v2062 = vsel %vm288, %v2051, 0
  %v2064 = vsel %vm288, %v2053, 0
  %v2066 = vsel %vm288, %v2055, 0
  %v2068 = vsel %vm288, %v2057, 0
  %2070 = vmatpush.xpose.msra.mxu0 0.0
  %2071 = vmatpush.xpose.msra.mxu0 0.0
  %2072 = vmatpush.xpose.msra.mxu0 0.0
  %2073 = vmatpush.xpose.msra.mxu0 0.0
  %2074 = vmatpush.xpose.msra.mxu0 0.0
  %2075 = vmatpush.xpose.msra.mxu0 0.0
  %2076 = vmatpush.xpose.msra.mxu0 0.0
  %2077 = vmatpush.xpose.msra.mxu0 0.0
  %2078 = vmatpush.xpose.msra.mxu0 0.0
  %2079 = vmatpush.xpose.msra.mxu0 0.0
  %2080 = vmatpush.xpose.msra.mxu0 0.0
  %2081 = vmatpush.xpose.msra.mxu0 0.0
  %2082 = vmatpush.xpose.msra.mxu0 0.0
  %2083 = vmatpush.xpose.msra.mxu0 %v2068
  %2084 = vmatpush.xpose.msra.mxu0 %v2066
  %2085 = vmatpush.xpose.msra.mxu0 %v2064
  %2086 = vmatmul.f32.gmra.mxu0 %v2058
  %v2087 = vpop.f32.mrf.mxu0
  %v2088 = vadd.f32 0.0, %v2087
  %2089 = vmatmul.f32.gmra.mxu0 %v2060
  %v2090 = vpop.f32.mrf.mxu0
  %v2091 = vadd.f32 0.0, %v2090
  %2092 = vmatmul.f32.gmra.mxu0 %v2062
  %v2093 = vpop.f32.mrf.mxu0
  %v2094 = vadd.f32 0.0, %v2093
  %2095 = vdwg.mxu0
  %v2096 = vmul.f32 %v2088, 0.35355338
  %v2097 = vmul.f32 %v2091, 0.35355338
  %v2098 = vmul.f32 %v2094, 0.35355338
  %v2099 = vsel %vm330, %v2096, -inf
  %2100 = vmax.xlane.f32.xlu0 %v2099
  %v2101 = vpop.xlane.xlu0 %2100
  %v2102 = vsel %vm330, %v2097, -inf
  %2103 = vmax.xlane.f32.xlu0 %v2102
  %v2104 = vpop.xlane.xlu0 %2103
  %v2105 = vsel %vm337, %v2098, -inf
  %2106 = vmax.xlane.f32.xlu0 %v2105
  %v2107 = vpop.xlane.xlu0 %2106
  %v2108 = vsub.f32 %v2096, %v2101
  %v2109 = vsub.f32 %v2097, %v2104
  %v2110 = vsub.f32 %v2098, %v2107
  %v2111 = vmul.f32 %v2108, 1.442695
  %v2112 = vpow.pop %v2111
  %v2113 = vmul.f32 %v2109, 1.442695
  %v2114 = vpow.pop %v2113
  %v2115 = vmul.f32 %v2110, 1.442695
  %v2116 = vpow.pop %v2115
  %v2117 = vsel %vm330, %v2112, 0.0
  %2118 = vadd.xlane.f32.xlu0 %v2117
  %v2119 = vpop.xlane.xlu0 %2118
  %v2120 = vsel %vm330, %v2114, 0.0
  %2121 = vadd.xlane.f32.xlu0 %v2120
  %v2122 = vpop.xlane.xlu0 %2121
  %v2123 = vsel %vm337, %v2116, 0.0
  %2124 = vadd.xlane.f32.xlu0 %v2123
  %v2125 = vpop.xlane.xlu0 %2124
  %v2126 = vrcp.pop %v2119
  %v2127 = vrcp.pop %v2122
  %v2128 = vrcp.pop %v2125
  %v2129 = vmul.f32 %v2112, %v2126
  %v2130 = vmul.f32 %v2114, %v2127
  %v2131 = vmul.f32 %v2116, %v2128
  %2132 = vrot.lane.b32.xlu0 %v1540, 40
  %v2133 = vpop.permute.xlu0 %2132
  %2134 = vrot.lane.b32.xlu0 %v1543, 40
  %v2135 = vpop.permute.xlu0 %2134
  %2136 = vrot.lane.b32.xlu0 %v1546, 40
  %v2137 = vpop.permute.xlu0 %2136
  %v2141 = vsel %vm330, %v2129, 0
  %v2144 = vsel %vm330, %v2130, 0
  %v2147 = vsel %vm330, %v2131, 0
  %v2149 = vsel %vm382, %v2137, 0
  %2151 = vmatpush.msra.mxu0 0.0
  %2152 = vmatpush.msra.mxu0 0.0
  %2153 = vmatpush.msra.mxu0 0.0
  %2154 = vmatpush.msra.mxu0 0.0
  %2155 = vmatpush.msra.mxu0 0.0
  %2156 = vmatpush.msra.mxu0 0.0
  %2157 = vmatpush.msra.mxu0 0.0
  %2158 = vmatpush.msra.mxu0 0.0
  %2159 = vmatpush.msra.mxu0 0.0
  %2160 = vmatpush.msra.mxu0 0.0
  %2161 = vmatpush.msra.mxu0 0.0
  %2162 = vmatpush.msra.mxu0 0.0
  %2163 = vmatpush.msra.mxu0 0.0
  %2164 = vmatpush.msra.mxu0 %v2149
  %2165 = vmatpush.msra.mxu0 %v2135
  %2166 = vmatpush.msra.mxu0 %v2133
  %2167 = vmatmul.f32.gmra.mxu0 %v2141
  %v2168 = vpop.f32.mrf.mxu0
  %v2169 = vadd.f32 0.0, %v2168
  %2170 = vmatmul.f32.gmra.mxu0 %v2144
  %v2171 = vpop.f32.mrf.mxu0
  %v2172 = vadd.f32 0.0, %v2171
  %2173 = vmatmul.f32.gmra.mxu0 %v2147
  %v2174 = vpop.f32.mrf.mxu0
  %v2175 = vadd.f32 0.0, %v2174
  %2176 = vdwg.mxu0
  %v2178 = vsel %vm288, %v2169, 0
  %v2181 = vsel %vm288, %v2172, 0
  %v2184 = vsel %vm288, %v2175, 0
  %2186 = vmatpush.msra.mxu0 0.0
  %2187 = vmatpush.msra.mxu0 0.0
  %2188 = vmatpush.msra.mxu0 0.0
  %2189 = vmatpush.msra.mxu0 0.0
  %2190 = vmatpush.msra.mxu0 0.0
  %2191 = vmatpush.msra.mxu0 0.0
  %2192 = vmatpush.msra.mxu0 0.0
  %2193 = vmatpush.msra.mxu0 0.0
  %2194 = vmatpush.msra.mxu0 0.0
  %2195 = vmatpush.msra.mxu0 0.0
  %2196 = vmatpush.msra.mxu0 0.0
  %2197 = vmatpush.msra.mxu0 0.0
  %2198 = vmatpush.msra.mxu0 0.0
  %2199 = vmatpush.msra.mxu0 0.0
  %2200 = vmatpush.msra.mxu0 0.0
  %2201 = vmatpush.msra.mxu0 %v86
  %2202 = vmatmul.f32.gmra.mxu0 %v2178
  %v2203 = vpop.f32.mrf.mxu0
  %v2204 = vadd.f32 0.0, %v2203
  %2205 = vmatmul.f32.gmra.mxu0 %v2181
  %v2206 = vpop.f32.mrf.mxu0
  %v2207 = vadd.f32 0.0, %v2206
  %2208 = vmatmul.f32.gmra.mxu0 %v2184
  %v2209 = vpop.f32.mrf.mxu0
  %v2210 = vadd.f32 0.0, %v2209
  %2211 = vdwg.mxu0
  %v2212 = vadd.f32 %v2043, %v2204
  %v2213 = vadd.f32 %v2044, %v2207
  %v2214 = vadd.f32 %v2045, %v2210
  %v2215 = vadd.f32 %v1433, %v2212
  %v2216 = vadd.f32 %v1436, %v2213
  %v2217 = vadd.f32 %v1439, %v2214
  %v2218 = vadd.f32 %v2215, %v954
  %v2219 = vadd.f32 %v2216, %v954
  %v2220 = vadd.f32 %v2217, %v954
  %v2221 = vsel %vm154, %v2218, 0.0
  %2222 = vadd.xlane.f32.xlu0 %v2221
  %v2223 = vpop.xlane.xlu0 %2222
  %v2224 = vsel %vm154, %v2219, 0.0
  %2225 = vadd.xlane.f32.xlu0 %v2224
  %v2226 = vpop.xlane.xlu0 %2225
  %v2227 = vsel %vm161, %v2220, 0.0
  %2228 = vadd.xlane.f32.xlu0 %v2227
  %v2229 = vpop.xlane.xlu0 %2228
  %v2230 = vmul.f32 %v2223, %v171
  %v2231 = vmul.f32 %v2226, %v171
  %v2232 = vmul.f32 %v2229, %v171
  %v2233 = vsub.f32 %v2218, %v2230
  %v2234 = vsub.f32 %v2219, %v2231
  %v2235 = vsub.f32 %v2220, %v2232
  %v2236 = vmul.f32 %v2233, %v2233
  %v2237 = vmul.f32 %v2234, %v2234
  %v2238 = vmul.f32 %v2235, %v2235
  %v2239 = vsel %vm154, %v2236, 0.0
  %2240 = vadd.xlane.f32.xlu0 %v2239
  %v2241 = vpop.xlane.xlu0 %2240
  %v2242 = vsel %vm154, %v2237, 0.0
  %2243 = vadd.xlane.f32.xlu0 %v2242
  %v2244 = vpop.xlane.xlu0 %2243
  %v2245 = vsel %vm161, %v2238, 0.0
  %2246 = vadd.xlane.f32.xlu0 %v2245
  %v2247 = vpop.xlane.xlu0 %2246
  %v2248 = vmul.f32 %v2241, %v171
  %v2249 = vmul.f32 %v2244, %v171
  %v2250 = vmul.f32 %v2247, %v171
  %v2251 = vadd.f32 %v2248, 1e-06
  %v2252 = vadd.f32 %v2249, 1e-06
  %v2253 = vadd.f32 %v2250, 1e-06
  %v2254 = vrsqrt.pop %v2251
  %v2255 = vmul.f32 %v2254, %v2251
  %v2256 = vmul.f32 %v2255, %v2254
  %v2257 = vmul.f32 0.5, %v2256
  %v2258 = vsub.f32 1.5, %v2257
  %v2259 = vmul.f32 %v2254, %v2258
  %vm2260 = vweird.f32 %v2251
  %vm2261 = vweird.f32 %v2254
  %vm2262 = vmor %vm2260, %vm2261
  %v2263 = vsel %vm2262, %v2254, %v2259
  %v2264 = vrsqrt.pop %v2252
  %v2265 = vmul.f32 %v2264, %v2252
  %v2266 = vmul.f32 %v2265, %v2264
  %v2267 = vmul.f32 0.5, %v2266
  %v2268 = vsub.f32 1.5, %v2267
  %v2269 = vmul.f32 %v2264, %v2268
  %vm2270 = vweird.f32 %v2252
  %vm2271 = vweird.f32 %v2264
  %vm2272 = vmor %vm2270, %vm2271
  %v2273 = vsel %vm2272, %v2264, %v2269
  %v2274 = vrsqrt.pop %v2253
  %v2275 = vmul.f32 %v2274, %v2253
  %v2276 = vmul.f32 %v2275, %v2274
  %v2277 = vmul.f32 0.5, %v2276
  %v2278 = vsub.f32 1.5, %v2277
  %v2279 = vmul.f32 %v2274, %v2278
  %vm2280 = vweird.f32 %v2253
  %vm2281 = vweird.f32 %v2274
  %vm2282 = vmor %vm2280, %vm2281
  %v2283 = vsel %vm2282, %v2274, %v2279
  %v2284 = vmul.f32 %v2233, %v2263
  %v2285 = vmul.f32 %v2234, %v2273
  %v2286 = vmul.f32 %v2235, %v2283
  %v2287 = vmul.f32 %v2284, %v1026
  %v2288 = vmul.f32 %v2285, %v1026
  %v2289 = vmul.f32 %v2286, %v1026
  %v2290 = vadd.f32 %v2287, %v1032
  %v2291 = vadd.f32 %v2288, %v1032
  %v2292 = vadd.f32 %v2289, %v1032
  %v2294 = vsel %vm154, %v2290, 0
  %v2297 = vsel %vm154, %v2291, 0
  %v2300 = vsel %vm154, %v2292, 0
  %2302 = vmatpush.msra.mxu0 0.0
  %2303 = vmatpush.msra.mxu0 0.0
  %2304 = vmatpush.msra.mxu0 0.0
  %2305 = vmatpush.msra.mxu0 0.0
  %2306 = vmatpush.msra.mxu0 0.0
  %2307 = vmatpush.msra.mxu0 0.0
  %2308 = vmatpush.msra.mxu0 0.0
  %2309 = vmatpush.msra.mxu0 0.0
  %2310 = vmatpush.msra.mxu0 0.0
  %2311 = vmatpush.msra.mxu0 0.0
  %2312 = vmatpush.msra.mxu0 0.0
  %2313 = vmatpush.msra.mxu0 0.0
  %2314 = vmatpush.msra.mxu0 %v93
  %2315 = vmatpush.msra.mxu0 %v92
  %2316 = vmatpush.msra.mxu0 %v91
  %2317 = vmatpush.msra.mxu0 %v90
  %2318 = vmatmul.f32.gmra.mxu0 %v2294
  %v2319 = vpop.f32.mrf.mxu0
  %v2320 = vadd.f32 %v1038, %v2319
  %2321 = vmatmul.f32.gmra.mxu0 %v2297
  %v2322 = vpop.f32.mrf.mxu0
  %v2323 = vadd.f32 %v1038, %v2322
  %2324 = vmatmul.f32.gmra.mxu0 %v2300
  %v2325 = vpop.f32.mrf.mxu0
  %v2326 = vadd.f32 %v1038, %v2325
  %2327 = vdwg.mxu0
  %v2328 = vmul.f32 %v2320, 0.5
  %v2329 = vmul.f32 %v2323, 0.5
  %v2330 = vmul.f32 %v2326, 0.5
  %v2331 = vmul.f32 %v2320, 0.044715
  %v2332 = vmul.f32 %v2323, 0.044715
  %v2333 = vmul.f32 %v2326, 0.044715
  %v2334 = vmul.f32 %v2331, %v2320
  %v2335 = vmul.f32 %v2332, %v2323
  %v2336 = vmul.f32 %v2333, %v2326
  %v2337 = vmul.f32 %v2334, %v2320
  %v2338 = vmul.f32 %v2335, %v2323
  %v2339 = vmul.f32 %v2336, %v2326
  %v2340 = vadd.f32 %v2320, %v2337
  %v2341 = vadd.f32 %v2323, %v2338
  %v2342 = vadd.f32 %v2326, %v2339
  %v2343 = vmul.f32 %v2340, 0.7978846
  %v2344 = vmul.f32 %v2341, 0.7978846
  %v2345 = vmul.f32 %v2342, 0.7978846
  %v2346 = vtanh.pop %v2343
  %v2347 = vtanh.pop %v2344
  %v2348 = vtanh.pop %v2345
  %v2349 = vadd.f32 %v2346, 1.0
  %v2350 = vadd.f32 %v2347, 1.0
  %v2351 = vadd.f32 %v2348, 1.0
  %v2352 = vmul.f32 %v2328, %v2349
  %v2353 = vmul.f32 %v2329, %v2350
  %v2354 = vmul.f32 %v2330, %v2351
  %v2356 = vsel %vm118, %v2352, 0
  %v2359 = vsel %vm118, %v2353, 0
  %v2362 = vsel %vm118, %v2354, 0
  %2364 = vmatpush.msra.mxu0 0.0
  %2365 = vmatpush.msra.mxu0 0.0
  %2366 = vmatpush.msra.mxu0 0.0
  %2367 = vmatpush.msra.mxu0 0.0
  %2368 = vmatpush.msra.mxu0 0.0
  %2369 = vmatpush.msra.mxu0 0.0
  %2370 = vmatpush.msra.mxu0 0.0
  %2371 = vmatpush.msra.mxu0 0.0
  %2372 = vmatpush.msra.mxu0 %v102
  %2373 = vmatpush.msra.mxu0 %v101
  %2374 = vmatpush.msra.mxu0 %v100
  %2375 = vmatpush.msra.mxu0 %v99
  %2376 = vmatpush.msra.mxu0 %v98
  %2377 = vmatpush.msra.mxu0 %v97
  %2378 = vmatpush.msra.mxu0 %v96
  %2379 = vmatpush.msra.mxu0 %v95
  %2380 = vmatmul.f32.gmra.mxu0 %v2356
  %v2381 = vpop.f32.mrf.mxu0
  %v2382 = vadd.f32 %v1103, %v2381
  %2383 = vmatmul.f32.gmra.mxu0 %v2359
  %v2384 = vpop.f32.mrf.mxu0
  %v2385 = vadd.f32 %v1103, %v2384
  %2386 = vmatmul.f32.gmra.mxu0 %v2362
  %v2387 = vpop.f32.mrf.mxu0
  %v2388 = vadd.f32 %v1103, %v2387
  %2389 = vdwg.mxu0
  %v2390 = vadd.f32 %v2218, %v2382
  %v2391 = vadd.f32 %v2219, %v2385
  %v2392 = vadd.f32 %v2220, %v2388
  %v2393 = vsel %vm1143, %v2390, 0.0
  %2394 = vadd.xlane.f32.xlu0 %v2393
  %v2395 = vpop.xlane.xlu0 %2394
  %v2396 = vsel %vm154, %v2391, 0.0
  %2397 = vadd.xlane.f32.xlu0 %v2396
  %v2398 = vpop.xlane.xlu0 %2397
  %v2399 = vsel %vm161, %v2392, 0.0
  %2400 = vadd.xlane.f32.xlu0 %v2399
  %v2401 = vpop.xlane.xlu0 %2400
  %v2402 = vmul.f32 %v2395, %v171
  %v2403 = vmul.f32 %v2398, %v171
  %v2404 = vmul.f32 %v2401, %v171
  %v2405 = vsub.f32 %v2390, %v2402
  %v2406 = vsub.f32 %v2391, %v2403
  %v2407 = vsub.f32 %v2392, %v2404
  %v2408 = vmul.f32 %v2405, %v2405
  %v2409 = vmul.f32 %v2406, %v2406
  %v2410 = vmul.f32 %v2407, %v2407
  %v2411 = vsel %vm1143, %v2408, 0.0
  %2412 = vadd.xlane.f32.xlu0 %v2411
  %v2413 = vpop.xlane.xlu0 %2412
  %v2414 = vsel %vm154, %v2409, 0.0
  %2415 = vadd.xlane.f32.xlu0 %v2414
  %v2416 = vpop.xlane.xlu0 %2415
  %v2417 = vsel %vm161, %v2410, 0.0
  %2418 = vadd.xlane.f32.xlu0 %v2417
  %v2419 = vpop.xlane.xlu0 %2418
  %v2420 = vmul.f32 %v2413, %v171
  %v2421 = vmul.f32 %v2416, %v171
  %v2422 = vmul.f32 %v2419, %v171
  %v2423 = vadd.f32 %v2420, 1e-05
  %v2424 = vadd.f32 %v2421, 1e-05
  %v2425 = vadd.f32 %v2422, 1e-05
  %v2426 = vrsqrt.pop %v2423
  %v2427 = vmul.f32 %v2426, %v2423
  %v2428 = vmul.f32 %v2427, %v2426
  %v2429 = vmul.f32 0.5, %v2428
  %v2430 = vsub.f32 1.5, %v2429
  %v2431 = vmul.f32 %v2426, %v2430
  %vm2432 = vweird.f32 %v2423
  %vm2433 = vweird.f32 %v2426
  %vm2434 = vmor %vm2432, %vm2433
  %v2435 = vsel %vm2434, %v2426, %v2431
  %v2436 = vrsqrt.pop %v2424
  %v2437 = vmul.f32 %v2436, %v2424
  %v2438 = vmul.f32 %v2437, %v2436
  %v2439 = vmul.f32 0.5, %v2438
  %v2440 = vsub.f32 1.5, %v2439
  %v2441 = vmul.f32 %v2436, %v2440
  %vm2442 = vweird.f32 %v2424
  %vm2443 = vweird.f32 %v2436
  %vm2444 = vmor %vm2442, %vm2443
  %v2445 = vsel %vm2444, %v2436, %v2441
  %v2446 = vrsqrt.pop %v2425
  %v2447 = vmul.f32 %v2446, %v2425
  %v2448 = vmul.f32 %v2447, %v2446
  %v2449 = vmul.f32 0.5, %v2448
  %v2450 = vsub.f32 1.5, %v2449
  %v2451 = vmul.f32 %v2446, %v2450
  %vm2452 = vweird.f32 %v2425
  %vm2453 = vweird.f32 %v2446
  %vm2454 = vmor %vm2452, %vm2453
  %v2455 = vsel %vm2454, %v2446, %v2451
  %v2456 = vmul.f32 %v2405, %v2435
  %v2457 = vmul.f32 %v2406, %v2445
  %v2458 = vmul.f32 %v2407, %v2455
  %v2459 = vmul.f32 %v2456, %v1211
  %v2460 = vmul.f32 %v2457, %v1211
  %v2461 = vmul.f32 %v2458, %v1211
  %v2462 = vadd.f32 %v2459, %v1217
  %v2463 = vadd.f32 %v2460, %v1217
  %v2464 = vadd.f32 %v2461, %v1217
  %v2468 = vrot.slane %v2462, 1
  %v2469 = vrot.slane %v2463, 1
  %v2470 = vsel %vm1228, %v2468, %v2469
  %v2471 = vrot.slane %v2464, 1
  %v2472 = vsel %vm1228, %v2469, %v2471
  %v2473 = vsel %vm154, %v2470, 0
  %v2475 = vsel %vm154, %v2472, 0
  %2477 = vmatpush.msra.mxu0 0.0
  %2478 = vmatpush.msra.mxu0 0.0
  %2479 = vmatpush.msra.mxu0 0.0
  %2480 = vmatpush.msra.mxu0 0.0
  %2481 = vmatpush.msra.mxu0 0.0
  %2482 = vmatpush.msra.mxu0 0.0
  %2483 = vmatpush.msra.mxu0 0.0
  %2484 = vmatpush.msra.mxu0 0.0
  %2485 = vmatpush.msra.mxu0 0.0
  %2486 = vmatpush.msra.mxu0 0.0
  %2487 = vmatpush.msra.mxu0 0.0
  %2488 = vmatpush.msra.mxu0 0.0
  %2489 = vmatpush.msra.mxu0 %v109
  %2490 = vmatpush.msra.mxu0 %v108
  %2491 = vmatpush.msra.mxu0 %v107
  %2492 = vmatpush.msra.mxu0 %v106
  %2493 = vmatmul.f32.gmra.mxu0 %v2473
  %v2494 = vpop.f32.mrf.mxu0
  %v2495 = vadd.f32 %v1223, %v2494
  %2496 = vmatmul.f32.gmra.mxu0 %v2475
  %v2497 = vpop.f32.mrf.mxu0
  %v2498 = vadd.f32 %v1223, %v2497
  %2499 = vdwg.mxu0
  %2501 = vset.pattern.permute.xlu0 0
  %2502 = vperm.xlu0 %2501, %v2495
  %v2503 = vpop.permute.xlu0 %2502
  %2506 = vset.pattern.permute.xlu0 0
  %2507 = vperm.xlu0 %2506, %v2498
  %v2508 = vpop.permute.xlu0 %2507
  %v2510 = vmul.f32 %v2503, %v111
  %v2511 = vmul.f32 %v2503, %v112
  %v2512 = vmul.f32 %v2508, %v113
  %v2513 = vmul.f32 %v2508, %v114
  %v2514 = vadd.f32 %v2510, %v2512
  %v2515 = vrot.slane %v2514, 4
  %v2516 = vadd.f32 %v2514, %v2515
  %v2517 = vrot.slane %v2516, 2
  %v2518 = vadd.f32 %v2516, %v2517
  %v2519 = vrot.slane %v2518, 1
  %v2520 = vadd.f32 %v2518, %v2519
  %v2521 = vadd.f32 %v2511, %v2513
  %v2522 = vrot.slane %v2521, 4
  %v2523 = vadd.f32 %v2521, %v2522
  %v2524 = vrot.slane %v2523, 2
  %v2525 = vadd.f32 %v2523, %v2524
  %v2526 = vrot.slane %v2525, 1
  %v2527 = vadd.f32 %v2525, %v2526
  %v2530 = vrot.slane %v2527, 7
  %v2531 = vsel %vm382, %v2520, %v2530
  %s2533 = scalar_lea.vmem %s20, 4
  %2534 = vst.msk [vmem:[%s2533] ss:$8 sm:$0x3] %vm1297, %v2531
  %2535 = vst.msk [vmem:[%s2533] ss:$8 sm:$0x0] %vm1297, %v2531
  %2536 = vset.pattern.permute.xlu0 1
  %2537 = vperm.xlu0 %2536, %v2495
  %v2538 = vpop.permute.xlu0 %2537
  %2540 = vset.pattern.permute.xlu0 1
  %2541 = vperm.xlu0 %2540, %v2498
  %v2542 = vpop.permute.xlu0 %2541
  %v2544 = vmul.f32 %v2538, %v111
  %v2545 = vmul.f32 %v2538, %v112
  %v2546 = vmul.f32 %v2542, %v113
  %v2547 = vmul.f32 %v2542, %v114
  %v2548 = vadd.f32 %v2544, %v2546
  %v2549 = vrot.slane %v2548, 4
  %v2550 = vadd.f32 %v2548, %v2549
  %v2551 = vrot.slane %v2550, 2
  %v2552 = vadd.f32 %v2550, %v2551
  %v2553 = vrot.slane %v2552, 1
  %v2554 = vadd.f32 %v2552, %v2553
  %v2555 = vadd.f32 %v2545, %v2547
  %v2556 = vrot.slane %v2555, 4
  %v2557 = vadd.f32 %v2555, %v2556
  %v2558 = vrot.slane %v2557, 2
  %v2559 = vadd.f32 %v2557, %v2558
  %v2560 = vrot.slane %v2559, 1
  %v2561 = vadd.f32 %v2559, %v2560
  %v2564 = vrot.slane %v2561, 7
  %v2565 = vsel %vm382, %v2554, %v2564
  %s2567 = scalar_lea.vmem %s20, 5
  %2568 = vst.msk [vmem:[%s2567] ss:$8 sm:$0x3] %vm1297, %v2565
  %2569 = vst.msk [vmem:[%s2567] ss:$8 sm:$0x0] %vm1297, %v2565
  %2570 = vset.pattern.permute.xlu0 2
  %2571 = vperm.xlu0 %2570, %v2495
  %v2572 = vpop.permute.xlu0 %2571
  %2574 = vset.pattern.permute.xlu0 2
  %2575 = vperm.xlu0 %2574, %v2498
  %v2576 = vpop.permute.xlu0 %2575
  %v2578 = vmul.f32 %v2572, %v111
  %v2579 = vmul.f32 %v2572, %v112
  %v2580 = vmul.f32 %v2576, %v113
  %v2581 = vmul.f32 %v2576, %v114
  %v2582 = vadd.f32 %v2578, %v2580
  %v2583 = vrot.slane %v2582, 4
  %v2584 = vadd.f32 %v2582, %v2583
  %v2585 = vrot.slane %v2584, 2
  %v2586 = vadd.f32 %v2584, %v2585
  %v2587 = vrot.slane %v2586, 1
  %v2588 = vadd.f32 %v2586, %v2587
  %v2589 = vadd.f32 %v2579, %v2581
  %v2590 = vrot.slane %v2589, 4
  %v2591 = vadd.f32 %v2589, %v2590
  %v2592 = vrot.slane %v2591, 2
  %v2593 = vadd.f32 %v2591, %v2592
  %v2594 = vrot.slane %v2593, 1
  %v2595 = vadd.f32 %v2593, %v2594
  %v2598 = vrot.slane %v2595, 7
  %v2599 = vsel %vm382, %v2588, %v2598
  %s2601 = scalar_lea.vmem %s20, 6
  %2602 = vst.msk [vmem:[%s2601] ss:$8 sm:$0x3] %vm1297, %v2599
  %2603 = vst.msk [vmem:[%s2601] ss:$8 sm:$0x0] %vm1297, %v2599
  %2604 = vset.pattern.permute.xlu0 3
  %2605 = vperm.xlu0 %2604, %v2495
  %v2606 = vpop.permute.xlu0 %2605
  %2608 = vset.pattern.permute.xlu0 3
  %2609 = vperm.xlu0 %2608, %v2498
  %v2610 = vpop.permute.xlu0 %2609
  %v2612 = vmul.f32 %v2606, %v111
  %v2613 = vmul.f32 %v2606, %v112
  %v2614 = vmul.f32 %v2610, %v113
  %v2615 = vmul.f32 %v2610, %v114
  %v2616 = vadd.f32 %v2612, %v2614
  %v2617 = vrot.slane %v2616, 4
  %v2618 = vadd.f32 %v2616, %v2617
  %v2619 = vrot.slane %v2618, 2
  %v2620 = vadd.f32 %v2618, %v2619
  %v2621 = vrot.slane %v2620, 1
  %v2622 = vadd.f32 %v2620, %v2621
  %v2623 = vadd.f32 %v2613, %v2615
  %v2624 = vrot.slane %v2623, 4
  %v2625 = vadd.f32 %v2623, %v2624
  %v2626 = vrot.slane %v2625, 2
  %v2627 = vadd.f32 %v2625, %v2626
  %v2628 = vrot.slane %v2627, 1
  %v2629 = vadd.f32 %v2627, %v2628
  %v2632 = vrot.slane %v2629, 7
  %v2633 = vsel %vm382, %v2622, %v2632
  %s2635 = scalar_lea.vmem %s20, 7
  %2636 = vst.msk [vmem:[%s2635] ss:$8 sm:$0x3] %vm1297, %v2633
  %2637 = vst.msk [vmem:[%s2635] ss:$8 sm:$0x0] %vm1297, %v2633
  // Predicated region
  $region82: #{open_canopy_forward.1} parent=0 // pred_check
    _
  $region83: #{open_canopy_forward.1} parent=0 // pred_check_branch
    %2639 = sbr.rel (0) target = $region85
  $region84: #{open_canopy_forward.1} parent=0 // pred_region
    _
  $region85: #{open_canopy_forward.1} parent=0 // pred_fallthru
    _
  // Predicated region
  $region86: #{open_canopy_forward.1} parent=0 // pred_check
    _
  $region87: #{open_canopy_forward.1} parent=0 // pred_check_branch
    %2641 = sbr.rel (0) target = $region89
  $region88: #{open_canopy_forward.1} parent=0 // pred_region
    _
  $region89: #{open_canopy_forward.1} parent=0 // pred_fallthru
    _

</llo_original>
